<compile_context>
chip_gen: v6e
topology: v6e:2x2x1
jax: 0.10.0
libtpu: 0.0.40
codegen_flags: <defaults>
</compile_context>

<pallas_src>
import jax
import jax.numpy as jnp
from jax import lax
from jax.experimental import pallas as pl
from jax.experimental.pallas import tpu as pltpu

EPS = 1e-5


# ---------------------------------------------------------------------------
# Fused kernel factory: one (Bt, H, W) activation block per grid step.
# ---------------------------------------------------------------------------
def _make_bottleneck_kernel(Bt, H, W, Cin, Cmid, Cout, fuse_taps):
    M = Bt * H * W

    def kernel(x_ref, w1_ref, b1_ref, w2_ref, b2_ref, w3_ref, b3_ref,
               o_ref, pad_ref, *col_scratch):
        # x_ref  : (Bt, H, W, Cin)      bf16   (also the residual branch)
        # w1_ref : (Cin, Cmid)          bf16   (BN1 scale folded in)
        # b1_ref : (1, Cmid)            f32
        # w2_ref : (9*Cmid, Cmid)       bf16   (BN2 scale folded; rows = (dy,dx,cin))
        # b2_ref : (1, Cmid)            f32
        # w3_ref : (Cmid, Cout)         bf16   (BN3 scale folded in)
        # b3_ref : (1, Cout)            f32
        # o_ref  : (Bt, H, W, Cout)     bf16
        # pad_ref: (Bt, H+2, W+2, Cmid) bf16 VMEM scratch (zero halo, pad=1)
        # col_scratch (only if fuse_taps): (Bt, H, W, 9*Cmid) bf16 im2col scratch
        x = x_ref[...]                           # bf16
        x2d = x.reshape(M, Cin)

        # ---- conv1 (1x1) + bn1 + relu: one matmul over all block pixels ----
        h1 = jnp.dot(x2d, w1_ref[...], preferred_element_type=jnp.float32)
        h1 = jnp.maximum(h1 + b1_ref[...], 0.0).astype(jnp.bfloat16)   # (M, Cmid)

        # ---- write zero halo + interior into the padded VMEM scratch ----
        # (padding done with plain sliced stores; no concatenate copies)
        pad_ref[:, 0:1, :, :] = jnp.zeros((Bt, 1, W + 2, Cmid), jnp.bfloat16)
        pad_ref[:, H + 1:H + 2, :, :] = jnp.zeros((Bt, 1, W + 2, Cmid), jnp.bfloat16)
        pad_ref[:, :, 0:1, :] = jnp.zeros((Bt, H + 2, 1, Cmid), jnp.bfloat16)
        pad_ref[:, :, W + 1:W + 2, :] = jnp.zeros((Bt, H + 2, 1, Cmid), jnp.bfloat16)
        pad_ref[:, 1:H + 1, 1:W + 1, :] = h1.reshape(Bt, H, W, Cmid)

        # ---- conv2 (3x3, pad=1) + bn2 + relu ----
        if fuse_taps:
            # Lane-aligned im2col (Cmid % 128 == 0): one K = 9*Cmid MXU matmul.
            col_ref = col_scratch[0]
            for t in range(9):
                dy, dx = divmod(t, 3)
                col_ref[:, :, :, t * Cmid:(t + 1) * Cmid] = \
                    pad_ref[:, dy:dy + H, dx:dx + W, :]
            acc = jnp.dot(col_ref[...].reshape(M, 9 * Cmid), w2_ref[...],
                          preferred_element_type=jnp.float32)
        else:
            # 9 tap matmuls on plain slices of the padded scratch (no lane-offset
            # data movement); f32 accumulation (MRB-accumulated on v7x).
            acc = jnp.zeros((M, Cmid), jnp.float32)
            for t in range(9):
                dy, dx = divmod(t, 3)
                lhs = pad_ref[:, dy:dy + H, dx:dx + W, :].reshape(M, Cmid)
                acc = acc + jnp.dot(lhs, w2_ref[t * Cmid:(t + 1) * Cmid, :],
                                    preferred_element_type=jnp.float32)
        h2 = jnp.maximum(acc + b2_ref[...], 0.0).astype(jnp.bfloat16)   # (M, Cmid)

        # ---- conv3 (1x1) + bn3 + residual add (f32) + relu ----
        h3 = jnp.dot(h2, w3_ref[...], preferred_element_type=jnp.float32)
        h3 = h3 + b3_ref[...] + x2d.astype(jnp.float32)
        o_ref[...] = (jnp.maximum(h3, 0.0)
                      .astype(jnp.bfloat16)
                      .reshape(Bt, H, W, Cout))

    return kernel


# ---------------------------------------------------------------------------
# Generation-aware VMEM limit and batch-block picking.
# ---------------------------------------------------------------------------
def _vmem_limit_bytes():
    cap = 64 * 1024 * 1024                      # conservative fallback (v7x)
    try:
        cap = int(pltpu.get_tpu_info().vmem_capacity_bytes)
    except Exception:
        pass
    # ~3/4 of physical: ~48 MiB on v7x (64 MiB), ~96 MiB on v5e/v6e (128 MiB).
    return (3 * cap) // 4


def _pick_block_n(N, H, W, Cin, Cmid, Cout, fuse_taps, budget_bytes):
    """Largest batch block Bt (divisor of N) fitting the VMEM budget while
    keeping >= 2 grid steps so v7x megacore ('parallel') can split the grid."""
    def est(bt):
        m = bt * H * W
        io = 2 * 2 * bt * H * W * (Cin + Cout)                   # dbl-buffered bf16 in/out
        pad = 2 * bt * (H + 2) * (W + 2) * Cmid                  # padded scratch
        col = 2 * m * 9 * Cmid if fuse_taps else 0               # im2col scratch
        tmp = 4 * m * (2 * Cmid + Cout)                          # f32 intermediates (rough)
        wts = 2 * 2 * (Cin * Cmid + 9 * Cmid * Cmid + Cmid * Cout)
        return io + pad + col + tmp + wts

    best = 1
    for bt in range(1, N + 1):
        if N % bt != 0:
            continue
        if N >= 2 and (N // bt) < 2:
            continue
        if est(bt) <= budget_bytes:
            best = bt
    return best


# ---------------------------------------------------------------------------
# Wrapper
# ---------------------------------------------------------------------------
def bottleneck_forward(x_nchw, folded_params):
    w1, b1, w2, b2, w3, b3 = folded_params
    # NCHW -> NHWC and cast to bf16 at the boundary (halves the HBM read of the
    # input / identity; residual add is still done in f32 inside the kernel).
    x = jnp.transpose(x_nchw, (0, 2, 3, 1)).astype(jnp.bfloat16)
    N, H, W, Cin = x.shape
    Cmid = w1.shape[1]
    Cout = w3.shape[1]
    assert Cin == Cout, (
        "identity add requires inplanes == planes*expansion (downsample=None)")

    # HWIO (3,3,Cmid,Cmid) -> (9*Cmid, Cmid): rows ordered (dy, dx, cin).
    w2r = w2.reshape(9 * Cmid, Cmid)

    fuse_taps = (Cmid % 128 == 0)       # lane-aligned im2col only in this case
    vmem_limit = _vmem_limit_bytes()
    Bt = _pick_block_n(N, H, W, Cin, Cmid, Cout, fuse_taps, vmem_limit // 2)
    grid = (N // Bt,)

    M = H * W
    flops = 2 * N * M * (Cin * Cmid + 9 * Cmid * Cmid + Cmid * Cout)
    bytes_accessed = (
        N * M * Cin * 2                 # x (bf16, also the identity)
        + N * M * Cout * 2              # output (bf16)
        + (w1.size + w2.size + w3.size) * 2
        + (b1.size + b2.size + b3.size) * 4)

    kernel = _make_bottleneck_kernel(Bt, H, W, Cin, Cmid, Cout, fuse_taps)

    scratch_shapes = [pltpu.VMEM((Bt, H + 2, W + 2, Cmid), jnp.bfloat16)]
    if fuse_taps:
        scratch_shapes.append(pltpu.VMEM((Bt, H, W, 9 * Cmid), jnp.bfloat16))

    # TODO(synk): weights/biases could be single-buffered (pipeline_mode) since
    #             their index maps are constant; left default for compatibility.
    grid_spec = pltpu.PrefetchScalarGridSpec(
        num_scalar_prefetch=0,
        grid=grid,
        in_specs=[
            pl.BlockSpec((Bt, H, W, Cin), lambda n: (n, 0, 0, 0)),
            pl.BlockSpec((Cin, Cmid), lambda n: (0, 0)),
            pl.BlockSpec((1, Cmid), lambda n: (0, 0)),
            pl.BlockSpec((9 * Cmid, Cmid), lambda n: (0, 0)),
            pl.BlockSpec((1, Cmid), lambda n: (0, 0)),
            pl.BlockSpec((Cmid, Cout), lambda n: (0, 0)),
            pl.BlockSpec((1, Cout), lambda n: (0, 0)),
        ],
        out_specs=pl.BlockSpec((Bt, H, W, Cout), lambda n: (n, 0, 0, 0)),
        scratch_shapes=scratch_shapes,
    )

    out = pl.pallas_call(
        kernel,
        out_shape=jax.ShapeDtypeStruct((N, H, W, Cout), jnp.bfloat16),
        grid_spec=grid_spec,
        compiler_params=pltpu.CompilerParams(
            dimension_semantics=("parallel",),    # megacore split on v7x
            vmem_limit_bytes=vmem_limit),
        cost_estimate=pl.CostEstimate(
            flops=flops, transcendentals=0, bytes_accessed=bytes_accessed),
    )(x, w1, b1, w2r, b2, w3, b3)

    return jnp.transpose(out, (0, 3, 1, 2))       # NHWC -> NCHW (bf16)


# ---------------------------------------------------------------------------
# Deterministic parameter construction (synthetic; matches module shapes)
# ---------------------------------------------------------------------------
def init_params(key, inplanes, planes, base_width=64, groups=1):
    expansion = 4
    width = int(planes * (base_width / 64.0)) * groups
    out_ch = planes * expansion
    ks = jax.random.split(key, 6)

    def bn_params(k, c):
        kg, kb, km, kv = jax.random.split(k, 4)
        gamma = 1.0 + 0.1 * jax.random.normal(kg, (c,), jnp.float32)
        beta = 0.1 * jax.random.normal(kb, (c,), jnp.float32)
        mean = 0.1 * jax.random.normal(km, (c,), jnp.float32)
        var = 0.5 + jnp.abs(jax.random.normal(kv, (c,), jnp.float32))
        return gamma, beta, mean, var

    w1 = 0.1 * jax.random.normal(ks[0], (inplanes, width), jnp.float32)
    bn1 = bn_params(ks[1], width)
    w2 = 0.1 * jax.random.normal(ks[2], (3, 3, width, width), jnp.float32)  # HWIO
    bn2 = bn_params(ks[3], width)
    w3 = 0.1 * jax.random.normal(ks[4], (width, out_ch), jnp.float32)
    bn3 = bn_params(ks[5], out_ch)
    return (w1, bn1, w2, bn2, w3, bn3)


def fold_params(raw):
    """Fold eval-mode BN scale into conv weights (bf16); keep bias in f32."""
    w1, bn1, w2, bn2, w3, bn3 = raw

    def fold(w, bn):
        gamma, beta, mean, var = bn
        scale = gamma * lax.rsqrt(var + EPS)
        bias = beta - mean * scale
        return (w * scale).astype(jnp.bfloat16), bias.reshape(1, -1).astype(jnp.float32)

    w1f, b1 = fold(w1, bn1)
    w2f, b2 = fold(w2, bn2)   # HWIO; scale broadcasts over the output channel
    w3f, b3 = fold(w3, bn3)
    return (w1f, b1, w2f, b2, w3f, b3)


# ---------------------------------------------------------------------------
# Pure-JAX reference (lax.conv) with the same bf16-boundary / f32-accum precision
# ---------------------------------------------------------------------------
def reference_forward(x_nchw, folded_params):
    w1, b1, w2, b2, w3, b3 = folded_params
    x = jnp.transpose(x_nchw, (0, 2, 3, 1)).astype(jnp.bfloat16)

    def conv(h, w, pad):
        dn = lax.conv_dimension_numbers(h.shape, w.shape, ('NHWC', 'HWIO', 'NHWC'))
        return lax.conv_general_dilated(
            h.astype(jnp.bfloat16), w, (1, 1), pad, dimension_numbers=dn,
            preferred_element_type=jnp.float32)

    h = conv(x, w1.reshape((1, 1) + w1.shape), 'VALID')
    h = jnp.maximum(h + b1.reshape(1, 1, 1, -1), 0.0)
    h = conv(h, w2, ((1, 1), (1, 1)))
    h = jnp.maximum(h + b2.reshape(1, 1, 1, -1), 0.0)
    h = conv(h, w3.reshape((1, 1) + w3.shape), 'VALID')
    h = h + b3.reshape(1, 1, 1, -1) + x.astype(jnp.float32)
    h = jnp.maximum(h, 0.0).astype(jnp.bfloat16)
    return jnp.transpose(h, (0, 3, 1, 2))


# ---------------------------------------------------------------------------
if __name__ == "__main__":
    key = jax.random.PRNGKey(0)
    N, H, W = 2, 16, 16
    # Two small configs exercising both conv2 code paths:
    #   (inplanes=256, planes=64)  -> width=64  : 9-tap accumulate path
    #   (inplanes=512, planes=128) -> width=128 : fused K=9*Cmid im2col path
    configs = [(256, 64), (512, 128)]

    fwd = jax.jit(bottleneck_forward)
    for idx, (inplanes, planes) in enumerate(configs):
        k_x, k_p = jax.random.split(jax.random.fold_in(key, idx))
        x = jax.random.normal(k_x, (N, inplanes, H, W), jnp.float32)
        params = fold_params(init_params(k_p, inplanes, planes))

        out = jax.block_until_ready(fwd(x, params))
        ref = jax.block_until_ready(reference_forward(x, params))

        assert out.shape == (N, planes * 4, H, W), out.shape
        assert out.dtype == jnp.bfloat16, out.dtype
        o = out.astype(jnp.float32)
        r = ref.astype(jnp.float32)
        max_err = float(jnp.max(jnp.abs(o - r)))
        assert jnp.allclose(o, r, rtol=2e-2, atol=2e-2), (idx, max_err)

    print("KERNEL_OK")
</pallas_src>

<mosaic_0001>
module attributes {stable_mosaic.version = 11 : i64} {
  func.func @kernel(%arg0: i32, %arg1: memref<1x16x16x256xbf16, #tpu.memory_space<vmem>>, %arg2: memref<256x64xbf16, #tpu.memory_space<vmem>>, %arg3: memref<1x64xf32, #tpu.memory_space<vmem>>, %arg4: memref<576x64xbf16, #tpu.memory_space<vmem>>, %arg5: memref<1x64xf32, #tpu.memory_space<vmem>>, %arg6: memref<64x256xbf16, #tpu.memory_space<vmem>>, %arg7: memref<1x256xf32, #tpu.memory_space<vmem>>, %arg8: memref<1x16x16x256xbf16, #tpu.memory_space<vmem>>, %arg9: memref<1x18x18x64xbf16, #tpu.memory_space<vmem>>) attributes {dimension_semantics = [#tpu.dimension_semantics<parallel>], iteration_bounds = array<i64: 2>, scalar_prefetch = 0 : i64, scratch_operands = 1 : i64, tpu.core_type = #tpu.core_type<tc>, window_params = [{transform_indices = @transform_0, window_bounds = array<i64: 1, 16, 16, 256>}, {pipeline_mode = #tpu.pipeline_mode<synchronous>, transform_indices = @transform_1, window_bounds = array<i64: 256, 64>}, {pipeline_mode = #tpu.pipeline_mode<synchronous>, transform_indices = @transform_2, window_bounds = array<i64: 1, 64>}, {pipeline_mode = #tpu.pipeline_mode<synchronous>, transform_indices = @transform_3, window_bounds = array<i64: 576, 64>}, {pipeline_mode = #tpu.pipeline_mode<synchronous>, transform_indices = @transform_4, window_bounds = array<i64: 1, 64>}, {pipeline_mode = #tpu.pipeline_mode<synchronous>, transform_indices = @transform_5, window_bounds = array<i64: 64, 256>}, {pipeline_mode = #tpu.pipeline_mode<synchronous>, transform_indices = @transform_6, window_bounds = array<i64: 1, 256>}, {transform_indices = @transform_7, window_bounds = array<i64: 1, 16, 16, 256>}]} {
    %c0 = arith.constant 0 : index
    %c0_0 = arith.constant 0 : index
    %c0_1 = arith.constant 0 : index
    %c0_2 = arith.constant 0 : index
    %0 = vector.load %arg1[%c0, %c0_0, %c0_1, %c0_2] : memref<1x16x16x256xbf16, #tpu.memory_space<vmem>>, vector<1x16x16x256xbf16>
    %1 = vector.shape_cast %0 : vector<1x16x16x256xbf16> to vector<256x256xbf16>
    %c0_3 = arith.constant 0 : index
    %c0_4 = arith.constant 0 : index
    %2 = vector.load %arg2[%c0_3, %c0_4] : memref<256x64xbf16, #tpu.memory_space<vmem>>, vector<256x64xbf16>
    %cst = arith.constant dense<0.000000e+00> : vector<256x64xf32>
    %3 = tpu.matmul %1, %2, %cst {dimension_numbers = #tpu.dot_dimension_numbers<[1], [0], [0], [1], [0, 0, 1, 1], [], []>} : vector<256x256xbf16>, vector<256x64xbf16>, vector<256x64xf32> -> vector<256x64xf32>
    %c0_5 = arith.constant 0 : index
    %c0_6 = arith.constant 0 : index
    %4 = vector.load %arg3[%c0_5, %c0_6] : memref<1x64xf32, #tpu.memory_space<vmem>>, vector<1x64xf32>
    %5 = vector.broadcast %4 : vector<1x64xf32> to vector<256x64xf32>
    %6 = arith.addf %3, %5 : vector<256x64xf32>
    %cst_7 = arith.constant 0.000000e+00 : f32
    %7 = vector.broadcast %cst_7 : f32 to vector<256x64xf32>
    %8 = arith.maximumf %6, %7 : vector<256x64xf32>
    %9 = arith.truncf %8 : vector<256x64xf32> to vector<256x64xbf16>
    %cst_8 = arith.constant 0.000000e+00 : bf16
    %10 = vector.broadcast %cst_8 : bf16 to vector<1x1x18x64xbf16>
    %c0_9 = arith.constant 0 : index
    %c0_10 = arith.constant 0 : index
    %c0_11 = arith.constant 0 : index
    %c0_12 = arith.constant 0 : index
    %11 = vector.load %arg9[%c0_9, %c0_10, %c0_11, %c0_12] : memref<1x18x18x64xbf16, #tpu.memory_space<vmem>>, vector<1x1x18x64xbf16>
    tpu.vector_store %arg9[%c0_9, %c0_10, %c0_11, %c0_12], %10 {strides = array<i32>} : memref<1x18x18x64xbf16, #tpu.memory_space<vmem>>, vector<1x1x18x64xbf16>,
    %cst_13 = arith.constant 0.000000e+00 : bf16
    %12 = vector.broadcast %cst_13 : bf16 to vector<1x1x18x64xbf16>
    %c0_14 = arith.constant 0 : index
    %c17 = arith.constant 17 : index
    %c0_15 = arith.constant 0 : index
    %c0_16 = arith.constant 0 : index
    %13 = vector.load %arg9[%c0_14, %c17, %c0_15, %c0_16] : memref<1x18x18x64xbf16, #tpu.memory_space<vmem>>, vector<1x1x18x64xbf16>
    tpu.vector_store %arg9[%c0_14, %c17, %c0_15, %c0_16], %12 {strides = array<i32>} : memref<1x18x18x64xbf16, #tpu.memory_space<vmem>>, vector<1x1x18x64xbf16>,
    %cst_17 = arith.constant 0.000000e+00 : bf16
    %14 = vector.broadcast %cst_17 : bf16 to vector<1x18x1x64xbf16>
    %c0_18 = arith.constant 0 : index
    %c0_19 = arith.constant 0 : index
    %c0_20 = arith.constant 0 : index
    %c0_21 = arith.constant 0 : index
    %15 = vector.load %arg9[%c0_18, %c0_19, %c0_20, %c0_21] : memref<1x18x18x64xbf16, #tpu.memory_space<vmem>>, vector<1x18x1x64xbf16>
    tpu.vector_store %arg9[%c0_18, %c0_19, %c0_20, %c0_21], %14 {strides = array<i32>} : memref<1x18x18x64xbf16, #tpu.memory_space<vmem>>, vector<1x18x1x64xbf16>,
    %cst_22 = arith.constant 0.000000e+00 : bf16
    %16 = vector.broadcast %cst_22 : bf16 to vector<1x18x1x64xbf16>
    %c0_23 = arith.constant 0 : index
    %c0_24 = arith.constant 0 : index
    %c17_25 = arith.constant 17 : index
    %c0_26 = arith.constant 0 : index
    %17 = vector.load %arg9[%c0_23, %c0_24, %c17_25, %c0_26] : memref<1x18x18x64xbf16, #tpu.memory_space<vmem>>, vector<1x18x1x64xbf16>
    tpu.vector_store %arg9[%c0_23, %c0_24, %c17_25, %c0_26], %16 {strides = array<i32>} : memref<1x18x18x64xbf16, #tpu.memory_space<vmem>>, vector<1x18x1x64xbf16>,
    %18 = vector.shape_cast %9 : vector<256x64xbf16> to vector<1x16x16x64xbf16>
    %c0_27 = arith.constant 0 : index
    %c1 = arith.constant 1 : index
    %c1_28 = arith.constant 1 : index
    %c0_29 = arith.constant 0 : index
    %19 = vector.load %arg9[%c0_27, %c1, %c1_28, %c0_29] : memref<1x18x18x64xbf16, #tpu.memory_space<vmem>>, vector<1x16x16x64xbf16>
    tpu.vector_store %arg9[%c0_27, %c1, %c1_28, %c0_29], %18 {strides = array<i32>} : memref<1x18x18x64xbf16, #tpu.memory_space<vmem>>, vector<1x16x16x64xbf16>,
    %cst_30 = arith.constant 0.000000e+00 : f32
    %20 = vector.broadcast %cst_30 : f32 to vector<256x64xf32>
    %c0_31 = arith.constant 0 : index
    %c0_32 = arith.constant 0 : index
    %c0_33 = arith.constant 0 : index
    %c0_34 = arith.constant 0 : index
    %21 = vector.load %arg9[%c0_31, %c0_32, %c0_33, %c0_34] : memref<1x18x18x64xbf16, #tpu.memory_space<vmem>>, vector<1x16x16x64xbf16>
    %22 = vector.shape_cast %21 : vector<1x16x16x64xbf16> to vector<256x64xbf16>
    %c0_35 = arith.constant 0 : index
    %c0_36 = arith.constant 0 : index
    %23 = vector.load %arg4[%c0_35, %c0_36] : memref<576x64xbf16, #tpu.memory_space<vmem>>, vector<64x64xbf16>
    %cst_37 = arith.constant dense<0.000000e+00> : vector<256x64xf32>
    %24 = tpu.matmul %22, %23, %cst_37 {dimension_numbers = #tpu.dot_dimension_numbers<[1], [0], [0], [1], [0, 0, 1, 1], [], []>} : vector<256x64xbf16>, vector<64x64xbf16>, vector<256x64xf32> -> vector<256x64xf32>
    %25 = arith.addf %20, %24 : vector<256x64xf32>
    %c0_38 = arith.constant 0 : index
    %c0_39 = arith.constant 0 : index
    %c1_40 = arith.constant 1 : index
    %c0_41 = arith.constant 0 : index
    %26 = vector.load %arg9[%c0_38, %c0_39, %c1_40, %c0_41] : memref<1x18x18x64xbf16, #tpu.memory_space<vmem>>, vector<1x16x16x64xbf16>
    %27 = vector.shape_cast %26 : vector<1x16x16x64xbf16> to vector<256x64xbf16>
    %c64 = arith.constant 64 : index
    %c0_42 = arith.constant 0 : index
    %28 = vector.load %arg4[%c64, %c0_42] : memref<576x64xbf16, #tpu.memory_space<vmem>>, vector<64x64xbf16>
    %cst_43 = arith.constant dense<0.000000e+00> : vector<256x64xf32>
    %29 = tpu.matmul %27, %28, %cst_43 {dimension_numbers = #tpu.dot_dimension_numbers<[1], [0], [0], [1], [0, 0, 1, 1], [], []>} : vector<256x64xbf16>, vector<64x64xbf16>, vector<256x64xf32> -> vector<256x64xf32>
    %30 = arith.addf %25, %29 : vector<256x64xf32>
    %c0_44 = arith.constant 0 : index
    %c0_45 = arith.constant 0 : index
    %c2 = arith.constant 2 : index
    %c0_46 = arith.constant 0 : index
    %31 = vector.load %arg9[%c0_44, %c0_45, %c2, %c0_46] : memref<1x18x18x64xbf16, #tpu.memory_space<vmem>>, vector<1x16x16x64xbf16>
    %32 = vector.shape_cast %31 : vector<1x16x16x64xbf16> to vector<256x64xbf16>
    %c128 = arith.constant 128 : index
    %c0_47 = arith.constant 0 : index
    %33 = vector.load %arg4[%c128, %c0_47] : memref<576x64xbf16, #tpu.memory_space<vmem>>, vector<64x64xbf16>
    %cst_48 = arith.constant dense<0.000000e+00> : vector<256x64xf32>
    %34 = tpu.matmul %32, %33, %cst_48 {dimension_numbers = #tpu.dot_dimension_numbers<[1], [0], [0], [1], [0, 0, 1, 1], [], []>} : vector<256x64xbf16>, vector<64x64xbf16>, vector<256x64xf32> -> vector<256x64xf32>
    %35 = arith.addf %30, %34 : vector<256x64xf32>
    %c0_49 = arith.constant 0 : index
    %c1_50 = arith.constant 1 : index
    %c0_51 = arith.constant 0 : index
    %c0_52 = arith.constant 0 : index
    %36 = vector.load %arg9[%c0_49, %c1_50, %c0_51, %c0_52] : memref<1x18x18x64xbf16, #tpu.memory_space<vmem>>, vector<1x16x16x64xbf16>
    %37 = vector.shape_cast %36 : vector<1x16x16x64xbf16> to vector<256x64xbf16>
    %c192 = arith.constant 192 : index
    %c0_53 = arith.constant 0 : index
    %38 = vector.load %arg4[%c192, %c0_53] : memref<576x64xbf16, #tpu.memory_space<vmem>>, vector<64x64xbf16>
    %cst_54 = arith.constant dense<0.000000e+00> : vector<256x64xf32>
    %39 = tpu.matmul %37, %38, %cst_54 {dimension_numbers = #tpu.dot_dimension_numbers<[1], [0], [0], [1], [0, 0, 1, 1], [], []>} : vector<256x64xbf16>, vector<64x64xbf16>, vector<256x64xf32> -> vector<256x64xf32>
    %40 = arith.addf %35, %39 : vector<256x64xf32>
    %c0_55 = arith.constant 0 : index
    %c1_56 = arith.constant 1 : index
    %c1_57 = arith.constant 1 : index
    %c0_58 = arith.constant 0 : index
    %41 = vector.load %arg9[%c0_55, %c1_56, %c1_57, %c0_58] : memref<1x18x18x64xbf16, #tpu.memory_space<vmem>>, vector<1x16x16x64xbf16>
    %42 = vector.shape_cast %41 : vector<1x16x16x64xbf16> to vector<256x64xbf16>
    %c256 = arith.constant 256 : index
    %c0_59 = arith.constant 0 : index
    %43 = vector.load %arg4[%c256, %c0_59] : memref<576x64xbf16, #tpu.memory_space<vmem>>, vector<64x64xbf16>
    %cst_60 = arith.constant dense<0.000000e+00> : vector<256x64xf32>
    %44 = tpu.matmul %42, %43, %cst_60 {dimension_numbers = #tpu.dot_dimension_numbers<[1], [0], [0], [1], [0, 0, 1, 1], [], []>} : vector<256x64xbf16>, vector<64x64xbf16>, vector<256x64xf32> -> vector<256x64xf32>
    %45 = arith.addf %40, %44 : vector<256x64xf32>
    %c0_61 = arith.constant 0 : index
    %c1_62 = arith.constant 1 : index
    %c2_63 = arith.constant 2 : index
    %c0_64 = arith.constant 0 : index
    %46 = vector.load %arg9[%c0_61, %c1_62, %c2_63, %c0_64] : memref<1x18x18x64xbf16, #tpu.memory_space<vmem>>, vector<1x16x16x64xbf16>
    %47 = vector.shape_cast %46 : vector<1x16x16x64xbf16> to vector<256x64xbf16>
    %c320 = arith.constant 320 : index
    %c0_65 = arith.constant 0 : index
    %48 = vector.load %arg4[%c320, %c0_65] : memref<576x64xbf16, #tpu.memory_space<vmem>>, vector<64x64xbf16>
    %cst_66 = arith.constant dense<0.000000e+00> : vector<256x64xf32>
    %49 = tpu.matmul %47, %48, %cst_66 {dimension_numbers = #tpu.dot_dimension_numbers<[1], [0], [0], [1], [0, 0, 1, 1], [], []>} : vector<256x64xbf16>, vector<64x64xbf16>, vector<256x64xf32> -> vector<256x64xf32>
    %50 = arith.addf %45, %49 : vector<256x64xf32>
    %c0_67 = arith.constant 0 : index
    %c2_68 = arith.constant 2 : index
    %c0_69 = arith.constant 0 : index
    %c0_70 = arith.constant 0 : index
    %51 = vector.load %arg9[%c0_67, %c2_68, %c0_69, %c0_70] : memref<1x18x18x64xbf16, #tpu.memory_space<vmem>>, vector<1x16x16x64xbf16>
    %52 = vector.shape_cast %51 : vector<1x16x16x64xbf16> to vector<256x64xbf16>
    %c384 = arith.constant 384 : index
    %c0_71 = arith.constant 0 : index
    %53 = vector.load %arg4[%c384, %c0_71] : memref<576x64xbf16, #tpu.memory_space<vmem>>, vector<64x64xbf16>
    %cst_72 = arith.constant dense<0.000000e+00> : vector<256x64xf32>
    %54 = tpu.matmul %52, %53, %cst_72 {dimension_numbers = #tpu.dot_dimension_numbers<[1], [0], [0], [1], [0, 0, 1, 1], [], []>} : vector<256x64xbf16>, vector<64x64xbf16>, vector<256x64xf32> -> vector<256x64xf32>
    %55 = arith.addf %50, %54 : vector<256x64xf32>
    %c0_73 = arith.constant 0 : index
    %c2_74 = arith.constant 2 : index
    %c1_75 = arith.constant 1 : index
    %c0_76 = arith.constant 0 : index
    %56 = vector.load %arg9[%c0_73, %c2_74, %c1_75, %c0_76] : memref<1x18x18x64xbf16, #tpu.memory_space<vmem>>, vector<1x16x16x64xbf16>
    %57 = vector.shape_cast %56 : vector<1x16x16x64xbf16> to vector<256x64xbf16>
    %c448 = arith.constant 448 : index
    %c0_77 = arith.constant 0 : index
    %58 = vector.load %arg4[%c448, %c0_77] : memref<576x64xbf16, #tpu.memory_space<vmem>>, vector<64x64xbf16>
    %cst_78 = arith.constant dense<0.000000e+00> : vector<256x64xf32>
    %59 = tpu.matmul %57, %58, %cst_78 {dimension_numbers = #tpu.dot_dimension_numbers<[1], [0], [0], [1], [0, 0, 1, 1], [], []>} : vector<256x64xbf16>, vector<64x64xbf16>, vector<256x64xf32> -> vector<256x64xf32>
    %60 = arith.addf %55, %59 : vector<256x64xf32>
    %c0_79 = arith.constant 0 : index
    %c2_80 = arith.constant 2 : index
    %c2_81 = arith.constant 2 : index
    %c0_82 = arith.constant 0 : index
    %61 = vector.load %arg9[%c0_79, %c2_80, %c2_81, %c0_82] : memref<1x18x18x64xbf16, #tpu.memory_space<vmem>>, vector<1x16x16x64xbf16>
    %62 = vector.shape_cast %61 : vector<1x16x16x64xbf16> to vector<256x64xbf16>
    %c512 = arith.constant 512 : index
    %c0_83 = arith.constant 0 : index
    %63 = vector.load %arg4[%c512, %c0_83] : memref<576x64xbf16, #tpu.memory_space<vmem>>, vector<64x64xbf16>
    %cst_84 = arith.constant dense<0.000000e+00> : vector<256x64xf32>
    %64 = tpu.matmul %62, %63, %cst_84 {dimension_numbers = #tpu.dot_dimension_numbers<[1], [0], [0], [1], [0, 0, 1, 1], [], []>} : vector<256x64xbf16>, vector<64x64xbf16>, vector<256x64xf32> -> vector<256x64xf32>
    %65 = arith.addf %60, %64 : vector<256x64xf32>
    %c0_85 = arith.constant 0 : index
    %c0_86 = arith.constant 0 : index
    %66 = vector.load %arg5[%c0_85, %c0_86] : memref<1x64xf32, #tpu.memory_space<vmem>>, vector<1x64xf32>
    %67 = vector.broadcast %66 : vector<1x64xf32> to vector<256x64xf32>
    %68 = arith.addf %65, %67 : vector<256x64xf32>
    %cst_87 = arith.constant 0.000000e+00 : f32
    %69 = vector.broadcast %cst_87 : f32 to vector<256x64xf32>
    %70 = arith.maximumf %68, %69 : vector<256x64xf32>
    %71 = arith.truncf %70 : vector<256x64xf32> to vector<256x64xbf16>
    %c0_88 = arith.constant 0 : index
    %c0_89 = arith.constant 0 : index
    %72 = vector.load %arg6[%c0_88, %c0_89] : memref<64x256xbf16, #tpu.memory_space<vmem>>, vector<64x256xbf16>
    %cst_90 = arith.constant dense<0.000000e+00> : vector<256x256xf32>
    %73 = tpu.matmul %71, %72, %cst_90 {dimension_numbers = #tpu.dot_dimension_numbers<[1], [0], [0], [1], [0, 0, 1, 1], [], []>} : vector<256x64xbf16>, vector<64x256xbf16>, vector<256x256xf32> -> vector<256x256xf32>
    %c0_91 = arith.constant 0 : index
    %c0_92 = arith.constant 0 : index
    %74 = vector.load %arg7[%c0_91, %c0_92] : memref<1x256xf32, #tpu.memory_space<vmem>>, vector<1x256xf32>
    %75 = vector.broadcast %74 : vector<1x256xf32> to vector<256x256xf32>
    %76 = arith.addf %73, %75 : vector<256x256xf32>
    %77 = arith.extf %1 : vector<256x256xbf16> to vector<256x256xf32>
    %78 = arith.addf %76, %77 : vector<256x256xf32>
    %cst_93 = arith.constant 0.000000e+00 : f32
    %79 = vector.broadcast %cst_93 : f32 to vector<256x256xf32>
    %80 = arith.maximumf %78, %79 : vector<256x256xf32>
    %81 = arith.truncf %80 : vector<256x256xf32> to vector<256x256xbf16>
    %82 = vector.shape_cast %81 : vector<256x256xbf16> to vector<1x16x16x256xbf16>
    %c0_94 = arith.constant 0 : index
    %c0_95 = arith.constant 0 : index
    %c0_96 = arith.constant 0 : index
    %c0_97 = arith.constant 0 : index
    %83 = vector.load %arg8[%c0_94, %c0_95, %c0_96, %c0_97] : memref<1x16x16x256xbf16, #tpu.memory_space<vmem>>, vector<1x16x16x256xbf16>
    tpu.vector_store %arg8[%c0_94, %c0_95, %c0_96, %c0_97], %82 {strides = array<i32>} : memref<1x16x16x256xbf16, #tpu.memory_space<vmem>>, vector<1x16x16x256xbf16>,
    return
  }
  func.func @transform_0(%arg0: i32) -> (i32, i32, i32, i32) {
    %c0_i32 = arith.constant 0 : i32
    %c0_i32_0 = arith.constant 0 : i32
    %c0_i32_1 = arith.constant 0 : i32
    %c0_i32_2 = arith.constant 0 : i32
    return %arg0, %c0_i32, %c0_i32_0, %c0_i32_1 : i32, i32, i32, i32
  }
  func.func @transform_1(%arg0: i32) -> (i32, i32) {
    %c0_i32 = arith.constant 0 : i32
    %c0_i32_0 = arith.constant 0 : i32
    %c0_i32_1 = arith.constant 0 : i32
    return %c0_i32, %c0_i32_0 : i32, i32
  }
  func.func @transform_2(%arg0: i32) -> (i32, i32) {
    %c0_i32 = arith.constant 0 : i32
    %c0_i32_0 = arith.constant 0 : i32
    %c0_i32_1 = arith.constant 0 : i32
    return %c0_i32, %c0_i32_0 : i32, i32
  }
  func.func @transform_3(%arg0: i32) -> (i32, i32) {
    %c0_i32 = arith.constant 0 : i32
    %c0_i32_0 = arith.constant 0 : i32
    %c0_i32_1 = arith.constant 0 : i32
    return %c0_i32, %c0_i32_0 : i32, i32
  }
  func.func @transform_4(%arg0: i32) -> (i32, i32) {
    %c0_i32 = arith.constant 0 : i32
    %c0_i32_0 = arith.constant 0 : i32
    %c0_i32_1 = arith.constant 0 : i32
    return %c0_i32, %c0_i32_0 : i32, i32
  }
  func.func @transform_5(%arg0: i32) -> (i32, i32) {
    %c0_i32 = arith.constant 0 : i32
    %c0_i32_0 = arith.constant 0 : i32
    %c0_i32_1 = arith.constant 0 : i32
    return %c0_i32, %c0_i32_0 : i32, i32
  }
  func.func @transform_6(%arg0: i32) -> (i32, i32) {
    %c0_i32 = arith.constant 0 : i32
    %c0_i32_0 = arith.constant 0 : i32
    %c0_i32_1 = arith.constant 0 : i32
    return %c0_i32, %c0_i32_0 : i32, i32
  }
  func.func @transform_7(%arg0: i32) -> (i32, i32, i32, i32) {
    %c0_i32 = arith.constant 0 : i32
    %c0_i32_0 = arith.constant 0 : i32
    %c0_i32_1 = arith.constant 0 : i32
    %c0_i32_2 = arith.constant 0 : i32
    return %arg0, %c0_i32, %c0_i32_0, %c0_i32_1 : i32, i32, i32, i32
  }
}

</mosaic_0001>

<llo_original>
// kernel: bottleneck_forward.1
$region0: #{bottleneck_forward.1}
  #allocation0 [shape = 'u32[]', space=smem, size = 0x4, offset = 0x4, fixed_abs, tag = 'smem constant byte address 0x4 - core index']
  #allocation1 [shape = 'u32[144,128]{1,0:T(1,128)}', space=vmem, size = 0x12000, scoped, tag = 'internal scratch']
  #allocation2 [shape = 'bf16[1,18,18,64]{3,2,1,0:T(8,128)(2,1)}', space=vmem, size = 0x1b000, scoped, tag = 'scratch operand']
  %s0 = inlined_call_operand.vmem [shape: bf16[2,16,16,256], index: 0, kind: input, shape index: {}]
  %s1 = inlined_call_operand.vmem [shape: bf16[256,64], index: 1, kind: input, shape index: {}]
  %s2 = inlined_call_operand.vmem [shape: f32[1,64], index: 2, kind: input, shape index: {}]
  %s3 = inlined_call_operand.vmem [shape: bf16[576,64], index: 3, kind: input, shape index: {}]
  %s4 = inlined_call_operand.vmem [shape: f32[1,64], index: 4, kind: input, shape index: {}]
  %s5 = inlined_call_operand.vmem [shape: bf16[64,256], index: 5, kind: input, shape index: {}]
  %s6 = inlined_call_operand.vmem [shape: f32[1,256], index: 6, kind: input, shape index: {}]
  %s7 = inlined_call_operand.hbm [shape: bf16[2,16,16,256], index: 7, kind: output, shape index: {}]
  %s8 = sld [smem:[#allocation0]]
  $region61: #{bottleneck_forward.1} parent=0
    _
  %s10 = ssub.s32 1, %s8
  %s11 = scalar_select 0, %s10, %s8
  $region1: #{bottleneck_forward.1} parent=0
    #allocation3 [shape = 'u8[262144]{0}', space=vmem, size = 0x40000, scoped, tag = 'output window, operand 0']
    #allocation4 [shape = 's32[2]{0}', space=sflag, size = 0x8, scoped, tag = 'scoped memory for bottleneck_forward.1']
    %12 = vsyncpa [#allocation4], 0
    %s13 = scalar_lea.sflag [#allocation4], 1
    %14 = vsyncpa %s13, 0
    loop: start=0, step=1, limit=4
    $region2: #{bottleneck_forward.1} parent=1 // loop_pre_header
      _
    $region3: #{bottleneck_forward.1} parent=1 // loop_header
      %s16 = sphi 0, %s20
      %p17 = scmp.ge.s32.totalorder %s16, 4
      %s26 = sphi 0, %s28
      %s29 = sphi 0, %s26
      %s30 = sphi 0, %s29
      %s46 = sphi 0, %s30
      %s50 = sphi 0, %s50
      %s52 = sphi 0, %s50
      %s53 = sphi 0, %s52
      %s67 = sphi 0, %s53
      %s71 = sphi 0, %s71
      %s73 = sphi 0, %s71
      %s74 = sphi 0, %s73
      %s88 = sphi 0, %s74
      %s92 = sphi 0, %s92
      %s94 = sphi 0, %s92
      %s95 = sphi 0, %s94
      %s109 = sphi 0, %s95
      %s113 = sphi 0, %s113
      %s115 = sphi 0, %s113
      %s116 = sphi 0, %s115
      %s130 = sphi 0, %s116
      %s134 = sphi 0, %s134
      %s136 = sphi 0, %s134
      %s137 = sphi 0, %s136
      %s151 = sphi 0, %s137
      %s155 = sphi 0, %s155
      %s157 = sphi 0, %s155
      %s158 = sphi 0, %s157
      %s172 = sphi 0, %s158
      %s178 = sphi 0, %s180
      %s181 = sphi 0, %s178
      %s182 = sphi 0, %s181
      %s198 = sphi 0, %s182
    $region4: #{bottleneck_forward.1} parent=1 // loop_header_branch
      %19 = sbr.rel (%p17) target = $region8
    $region5: #{bottleneck_forward.1} parent=1 // loop_body
      %s21 = ssub.s32 %s16, 1
      %s22 = ssub.s32 %s16, 2
      %s23 = sadd.s32 %s16, 1
      %s24 = ssub.s32 %s16, %s23
      %p25 = scmp.eq.s32.totalorder %s24, 0
      %s27 = sadd.s32 %s26, 1
      %s28 = scalar_select %p25, %s26, %s27
      %p31 = pneg %p25
      %p32 = scmp.eq.s32.totalorder %s16, 1
      %p33 = por %p31, %p32
      %p34 = scmp.ne.s32.totalorder %s26, %s29
      %p35 = scmp.eq.s32.totalorder %s16, 0
      %p36 = por %p34, %p35
      %p37 = scmp.ne.s32.totalorder %s26, %s29
      %p38 = scmp.eq.s32.totalorder %s21, 1
      %p39 = por %p37, %p38
      %p40 = scmp.ne.s32.totalorder %s29, %s30
      %p41 = scmp.eq.s32.totalorder %s21, 0
      %p42 = por %p40, %p41
      %p43 = scmp.ne.s32.totalorder %s29, %s30
      %p44 = scmp.eq.s32.totalorder %s22, 1
      %p45 = por %p43, %p44
      %p47 = scmp.ne.s32.totalorder %s30, %s46
      %p48 = scmp.eq.s32.totalorder %s22, 0
      %p49 = por %p47, %p48
      %s51 = sadd.s32 %s50, 1
      %p54 = scmp.eq.s32.totalorder %s16, 1
      %p55 = scmp.ne.s32.totalorder %s50, %s52
      %p56 = scmp.eq.s32.totalorder %s16, 0
      %p57 = por %p55, %p56
      %p58 = scmp.ne.s32.totalorder %s50, %s52
      %p59 = scmp.eq.s32.totalorder %s21, 1
      %p60 = por %p58, %p59
      %p61 = scmp.ne.s32.totalorder %s52, %s53
      %p62 = scmp.eq.s32.totalorder %s21, 0
      %p63 = por %p61, %p62
      %p64 = scmp.ne.s32.totalorder %s52, %s53
      %p65 = scmp.eq.s32.totalorder %s22, 1
      %p66 = por %p64, %p65
      %p68 = scmp.ne.s32.totalorder %s53, %s67
      %p69 = scmp.eq.s32.totalorder %s22, 0
      %p70 = por %p68, %p69
      %s72 = sadd.s32 %s71, 1
      %p75 = scmp.eq.s32.totalorder %s16, 1
      %p76 = scmp.ne.s32.totalorder %s71, %s73
      %p77 = scmp.eq.s32.totalorder %s16, 0
      %p78 = por %p76, %p77
      %p79 = scmp.ne.s32.totalorder %s71, %s73
      %p80 = scmp.eq.s32.totalorder %s21, 1
      %p81 = por %p79, %p80
      %p82 = scmp.ne.s32.totalorder %s73, %s74
      %p83 = scmp.eq.s32.totalorder %s21, 0
      %p84 = por %p82, %p83
      %p85 = scmp.ne.s32.totalorder %s73, %s74
      %p86 = scmp.eq.s32.totalorder %s22, 1
      %p87 = por %p85, %p86
      %p89 = scmp.ne.s32.totalorder %s74, %s88
      %p90 = scmp.eq.s32.totalorder %s22, 0
      %p91 = por %p89, %p90
      %s93 = sadd.s32 %s92, 1
      %p96 = scmp.eq.s32.totalorder %s16, 1
      %p97 = scmp.ne.s32.totalorder %s92, %s94
      %p98 = scmp.eq.s32.totalorder %s16, 0
      %p99 = por %p97, %p98
      %p100 = scmp.ne.s32.totalorder %s92, %s94
      %p101 = scmp.eq.s32.totalorder %s21, 1
      %p102 = por %p100, %p101
      %p103 = scmp.ne.s32.totalorder %s94, %s95
      %p104 = scmp.eq.s32.totalorder %s21, 0
      %p105 = por %p103, %p104
      %p106 = scmp.ne.s32.totalorder %s94, %s95
      %p107 = scmp.eq.s32.totalorder %s22, 1
      %p108 = por %p106, %p107
      %p110 = scmp.ne.s32.totalorder %s95, %s109
      %p111 = scmp.eq.s32.totalorder %s22, 0
      %p112 = por %p110, %p111
      %s114 = sadd.s32 %s113, 1
      %p117 = scmp.eq.s32.totalorder %s16, 1
      %p118 = scmp.ne.s32.totalorder %s113, %s115
      %p119 = scmp.eq.s32.totalorder %s16, 0
      %p120 = por %p118, %p119
      %p121 = scmp.ne.s32.totalorder %s113, %s115
      %p122 = scmp.eq.s32.totalorder %s21, 1
      %p123 = por %p121, %p122
      %p124 = scmp.ne.s32.totalorder %s115, %s116
      %p125 = scmp.eq.s32.totalorder %s21, 0
      %p126 = por %p124, %p125
      %p127 = scmp.ne.s32.totalorder %s115, %s116
      %p128 = scmp.eq.s32.totalorder %s22, 1
      %p129 = por %p127, %p128
      %p131 = scmp.ne.s32.totalorder %s116, %s130
      %p132 = scmp.eq.s32.totalorder %s22, 0
      %p133 = por %p131, %p132
      %s135 = sadd.s32 %s134, 1
      %p138 = scmp.eq.s32.totalorder %s16, 1
      %p139 = scmp.ne.s32.totalorder %s134, %s136
      %p140 = scmp.eq.s32.totalorder %s16, 0
      %p141 = por %p139, %p140
      %p142 = scmp.ne.s32.totalorder %s134, %s136
      %p143 = scmp.eq.s32.totalorder %s21, 1
      %p144 = por %p142, %p143
      %p145 = scmp.ne.s32.totalorder %s136, %s137
      %p146 = scmp.eq.s32.totalorder %s21, 0
      %p147 = por %p145, %p146
      %p148 = scmp.ne.s32.totalorder %s136, %s137
      %p149 = scmp.eq.s32.totalorder %s22, 1
      %p150 = por %p148, %p149
      %p152 = scmp.ne.s32.totalorder %s137, %s151
      %p153 = scmp.eq.s32.totalorder %s22, 0
      %p154 = por %p152, %p153
      %s156 = sadd.s32 %s155, 1
      %p159 = scmp.eq.s32.totalorder %s16, 1
      %p160 = scmp.ne.s32.totalorder %s155, %s157
      %p161 = scmp.eq.s32.totalorder %s16, 0
      %p162 = por %p160, %p161
      %p163 = scmp.ne.s32.totalorder %s155, %s157
      %p164 = scmp.eq.s32.totalorder %s21, 1
      %p165 = por %p163, %p164
      %p166 = scmp.ne.s32.totalorder %s157, %s158
      %p167 = scmp.eq.s32.totalorder %s21, 0
      %p168 = por %p166, %p167
      %p169 = scmp.ne.s32.totalorder %s157, %s158
      %p170 = scmp.eq.s32.totalorder %s22, 1
      %p171 = por %p169, %p170
      %p173 = scmp.ne.s32.totalorder %s158, %s172
      %p174 = scmp.eq.s32.totalorder %s22, 0
      %p175 = por %p173, %p174
      %s176 = ssub.s32 %s16, %s23
      %p177 = scmp.eq.s32.totalorder %s176, 0
      %s179 = sadd.s32 %s178, 1
      %s180 = scalar_select %p177, %s178, %s179
      %p183 = pneg %p177
      %p184 = scmp.eq.s32.totalorder %s16, 1
      %p185 = por %p183, %p184
      %p186 = scmp.ne.s32.totalorder %s178, %s181
      %p187 = scmp.eq.s32.totalorder %s16, 0
      %p188 = por %p186, %p187
      %p189 = scmp.ne.s32.totalorder %s178, %s181
      %p190 = scmp.eq.s32.totalorder %s21, 1
      %p191 = por %p189, %p190
      %p192 = scmp.ne.s32.totalorder %s181, %s182
      %p193 = scmp.eq.s32.totalorder %s21, 0
      %p194 = por %p192, %p193
      %p195 = scmp.ne.s32.totalorder %s181, %s182
      %p196 = scmp.eq.s32.totalorder %s22, 1
      %p197 = por %p195, %p196
      %p199 = scmp.ne.s32.totalorder %s182, %s198
      %p200 = scmp.eq.s32.totalorder %s22, 0
      %p201 = por %p199, %p200
      %p202 = scmp.le.s32.totalorder 1, %s16
      %p203 = scmp.lt.s32.totalorder %s16, 3
      %p204 = pnand %p202, %p203
      %p205 = pneg %p204
      // Predicated region
      $region9: #{bottleneck_forward.1} parent=5 // pred_check
        _
      $region10: #{bottleneck_forward.1} parent=5 // pred_check_branch
        %207 = sbr.rel (%p204) target = $region12
      $region11: #{bottleneck_forward.1} parent=5 // pred_region
        %s208 = ssub.s32 %s16, 1
        // Predicated region
        $region13: #{bottleneck_forward.1} parent=11 // pred_check
          %p209 = pneg %p63
        $region14: #{bottleneck_forward.1} parent=11 // pred_check_branch
          %211 = sbr.rel (%p209) target = $region16
        $region15: #{bottleneck_forward.1} parent=11 // pred_region
          _
        $region16: #{bottleneck_forward.1} parent=11 // pred_fallthru
          _
        // Predicated region
        $region17: #{bottleneck_forward.1} parent=11 // pred_check
          %p212 = pneg %p84
        $region18: #{bottleneck_forward.1} parent=11 // pred_check_branch
          %214 = sbr.rel (%p212) target = $region20
        $region19: #{bottleneck_forward.1} parent=11 // pred_region
          _
        $region20: #{bottleneck_forward.1} parent=11 // pred_fallthru
          _
        // Predicated region
        $region21: #{bottleneck_forward.1} parent=11 // pred_check
          %p215 = pneg %p105
        $region22: #{bottleneck_forward.1} parent=11 // pred_check_branch
          %217 = sbr.rel (%p215) target = $region24
        $region23: #{bottleneck_forward.1} parent=11 // pred_region
          _
        $region24: #{bottleneck_forward.1} parent=11 // pred_fallthru
          _
        // Predicated region
        $region25: #{bottleneck_forward.1} parent=11 // pred_check
          %p218 = pneg %p126
        $region26: #{bottleneck_forward.1} parent=11 // pred_check_branch
          %220 = sbr.rel (%p218) target = $region28
        $region27: #{bottleneck_forward.1} parent=11 // pred_region
          _
        $region28: #{bottleneck_forward.1} parent=11 // pred_fallthru
          _
        // Predicated region
        $region29: #{bottleneck_forward.1} parent=11 // pred_check
          %p221 = pneg %p147
        $region30: #{bottleneck_forward.1} parent=11 // pred_check_branch
          %223 = sbr.rel (%p221) target = $region32
        $region31: #{bottleneck_forward.1} parent=11 // pred_region
          _
        $region32: #{bottleneck_forward.1} parent=11 // pred_fallthru
          _
        // Predicated region
        $region33: #{bottleneck_forward.1} parent=11 // pred_check
          %p224 = pneg %p168
        $region34: #{bottleneck_forward.1} parent=11 // pred_check_branch
          %226 = sbr.rel (%p224) target = $region36
        $region35: #{bottleneck_forward.1} parent=11 // pred_region
          _
        $region36: #{bottleneck_forward.1} parent=11 // pred_fallthru
          _
      $region12: #{bottleneck_forward.1} parent=5 // pred_fallthru
        _
      %p227 = scmp.lt.s32.totalorder %s16, 2
      // Predicated region
      $region37: #{bottleneck_forward.1} parent=5 // pred_check
        %p228 = pneg %p227
      $region38: #{bottleneck_forward.1} parent=5 // pred_check_branch
        %230 = sbr.rel (%p228) target = $region40
      $region39: #{bottleneck_forward.1} parent=5 // pred_region
        // Predicated region
        $region41: #{bottleneck_forward.1} parent=39 // pred_check
          %p231 = pneg %p36
        $region42: #{bottleneck_forward.1} parent=39 // pred_check_branch
          %233 = sbr.rel (%p231) target = $region44
        $region43: #{bottleneck_forward.1} parent=39 // pred_region
          %p234 = scmp.lt.s32.totalorder %s16, 1
          %s235 = scalar_select %p234, %s16, 1
          %s236 = smul.addr %s235, 64
          %s237 = smul.addr %s236, 4
          %s238 = scalar_lea.vmem %s0, %s237
        $region44: #{bottleneck_forward.1} parent=39 // pred_fallthru
          _
      $region40: #{bottleneck_forward.1} parent=5 // pred_fallthru
        _
      %p239 = scmp.le.s32.totalorder 1, %s16
      %p240 = scmp.lt.s32.totalorder %s16, 3
      %p241 = pnand %p239, %p240
      %p242 = pneg %p241
      // Predicated region
      $region45: #{bottleneck_forward.1} parent=5 // pred_check
        _
      $region46: #{bottleneck_forward.1} parent=5 // pred_check_branch
        %244 = sbr.rel (%p241) target = $region48
      $region47: #{bottleneck_forward.1} parent=5 // pred_region
        %s245 = ssub.s32 %s16, 1
        %p246 = scmp.lt.s32.totalorder %s21, 1
        %s247 = scalar_select %p246, %s21, 1
        %s248 = smul.addr %s247, 64
        %s249 = smul.addr %s248, 4
        %s250 = scalar_lea.vmem %s0, %s249
        %p251 = pneg %p42
        %p252 = pneg %p39
        %p253 = pneg %p63
        %p254 = pneg %p60
        %p255 = pneg %p84
        %p256 = pneg %p81
        %p257 = pneg %p105
        %p258 = pneg %p102
        %p259 = pneg %p126
        %p260 = pneg %p123
        %p261 = pneg %p147
        %p262 = pneg %p144
        %p263 = pneg %p168
        %p264 = pneg %p165
        %p265 = pneg %p194
        %p266 = pneg %p191
        %s267 = sand.u32 %s181, 1
        %s268 = scalar_lea.sflag [#allocation4], %s267
        %s269 = sand.u32 %s181, 1
        %s270 = smul.addr %s269, 256
        %s271 = scalar_lea.vmem [#allocation3], %s270
        %p272 = scmp.lt.s32.totalorder %s21, 1
        %s273 = scalar_select %p272, %s21, 1
        %s274 = smul.addr %s273, 64
        %s275 = smul.addr %s274, 4
        %s276 = scalar_lea.vmem %s0, %s275
        %v278 = vld [vmem:[%s276] sm:$0xff]
        %v279 = vld [vmem:[%s276 + $0x8] sm:$0xff]
        %v280 = vld [vmem:[%s276 + $0x10] sm:$0xff]
        %v281 = vld [vmem:[%s276 + $0x18] sm:$0xff]
        %v282 = vld [vmem:[%s276 + $0x20] sm:$0xff]
        %v283 = vld [vmem:[%s276 + $0x28] sm:$0xff]
        %v284 = vld [vmem:[%s276 + $0x30] sm:$0xff]
        %v285 = vld [vmem:[%s276 + $0x38] sm:$0xff]
        %v286 = vld [vmem:[%s276 + $0x40] sm:$0xff]
        %v287 = vld [vmem:[%s276 + $0x48] sm:$0xff]
        %v288 = vld [vmem:[%s276 + $0x50] sm:$0xff]
        %v289 = vld [vmem:[%s276 + $0x58] sm:$0xff]
        %v290 = vld [vmem:[%s276 + $0x60] sm:$0xff]
        %v291 = vld [vmem:[%s276 + $0x68] sm:$0xff]
        %v292 = vld [vmem:[%s276 + $0x70] sm:$0xff]
        %v293 = vld [vmem:[%s276 + $0x78] sm:$0xff]
        %v294 = vld [vmem:[%s276 + $0x80] sm:$0xff]
        %v295 = vld [vmem:[%s276 + $0x88] sm:$0xff]
        %v296 = vld [vmem:[%s276 + $0x90] sm:$0xff]
        %v297 = vld [vmem:[%s276 + $0x98] sm:$0xff]
        %v298 = vld [vmem:[%s276 + $0xa0] sm:$0xff]
        %v299 = vld [vmem:[%s276 + $0xa8] sm:$0xff]
        %v300 = vld [vmem:[%s276 + $0xb0] sm:$0xff]
        %v301 = vld [vmem:[%s276 + $0xb8] sm:$0xff]
        %v302 = vld [vmem:[%s276 + $0xc0] sm:$0xff]
        %v303 = vld [vmem:[%s276 + $0xc8] sm:$0xff]
        %v304 = vld [vmem:[%s276 + $0xd0] sm:$0xff]
        %v305 = vld [vmem:[%s276 + $0xd8] sm:$0xff]
        %v306 = vld [vmem:[%s276 + $0xe0] sm:$0xff]
        %v307 = vld [vmem:[%s276 + $0xe8] sm:$0xff]
        %v308 = vld [vmem:[%s276 + $0xf0] sm:$0xff]
        %v309 = vld [vmem:[%s276 + $0xf8] sm:$0xff]
        %v310 = vld [vmem:[%s1] sm:$0xf]
        %v311 = vld [vmem:[%s1 + $0x4] sm:$0xf]
        %v312 = vld [vmem:[%s1 + $0x8] sm:$0xf]
        %v313 = vld [vmem:[%s1 + $0xc] sm:$0xf]
        %v314 = vld [vmem:[%s1 + $0x10] sm:$0xf]
        %v315 = vld [vmem:[%s1 + $0x14] sm:$0xf]
        %v316 = vld [vmem:[%s1 + $0x18] sm:$0xf]
        %v317 = vld [vmem:[%s1 + $0x1c] sm:$0xf]
        %v318 = vld [vmem:[%s1 + $0x20] sm:$0xf]
        %v319 = vld [vmem:[%s1 + $0x24] sm:$0xf]
        %v320 = vld [vmem:[%s1 + $0x28] sm:$0xf]
        %v321 = vld [vmem:[%s1 + $0x2c] sm:$0xf]
        %v322 = vld [vmem:[%s1 + $0x30] sm:$0xf]
        %v323 = vld [vmem:[%s1 + $0x34] sm:$0xf]
        %v324 = vld [vmem:[%s1 + $0x38] sm:$0xf]
        %v325 = vld [vmem:[%s1 + $0x3c] sm:$0xf]
        %v326 = vld [vmem:[%s1 + $0x40] sm:$0xf]
        %v327 = vld [vmem:[%s1 + $0x44] sm:$0xf]
        %v328 = vld [vmem:[%s1 + $0x48] sm:$0xf]
        %v329 = vld [vmem:[%s1 + $0x4c] sm:$0xf]
        %v330 = vld [vmem:[%s1 + $0x50] sm:$0xf]
        %v331 = vld [vmem:[%s1 + $0x54] sm:$0xf]
        %v332 = vld [vmem:[%s1 + $0x58] sm:$0xf]
        %v333 = vld [vmem:[%s1 + $0x5c] sm:$0xf]
        %v334 = vld [vmem:[%s1 + $0x60] sm:$0xf]
        %v335 = vld [vmem:[%s1 + $0x64] sm:$0xf]
        %v336 = vld [vmem:[%s1 + $0x68] sm:$0xf]
        %v337 = vld [vmem:[%s1 + $0x6c] sm:$0xf]
        %v338 = vld [vmem:[%s1 + $0x70] sm:$0xf]
        %v339 = vld [vmem:[%s1 + $0x74] sm:$0xf]
        %v340 = vld [vmem:[%s1 + $0x78] sm:$0xf]
        %v341 = vld [vmem:[%s1 + $0x7c] sm:$0xf]
        %v342 = vld [vmem:[%s2] sm:$0x1]
        %v344 = vlaneseq
        %v345 = vshrl.u32 %v344, 7
        %v346 = vsub.s32 0, %v345
        %v347 = vrot.slane %v342, %v346
        %v381 = vunpack.c.l.b16 %v278
        %v382 = vunpack.c.h.b16 %v278
        %v383 = vunpack.c.l.b16 %v279
        %v384 = vunpack.c.h.b16 %v279
        %v385 = vunpack.c.l.b16 %v280
        %v386 = vunpack.c.h.b16 %v280
        %v387 = vunpack.c.l.b16 %v281
        %v388 = vunpack.c.h.b16 %v281
        %v389 = vunpack.c.l.b16 %v282
        %v390 = vunpack.c.h.b16 %v282
        %v391 = vunpack.c.l.b16 %v283
        %v392 = vunpack.c.h.b16 %v283
        %v393 = vunpack.c.l.b16 %v284
        %v394 = vunpack.c.h.b16 %v284
        %v395 = vunpack.c.l.b16 %v285
        %v396 = vunpack.c.h.b16 %v285
        %v397 = vunpack.c.l.b16 %v286
        %v398 = vunpack.c.h.b16 %v286
        %v399 = vunpack.c.l.b16 %v287
        %v400 = vunpack.c.h.b16 %v287
        %v401 = vunpack.c.l.b16 %v288
        %v402 = vunpack.c.h.b16 %v288
        %v403 = vunpack.c.l.b16 %v289
        %v404 = vunpack.c.h.b16 %v289
        %v405 = vunpack.c.l.b16 %v290
        %v406 = vunpack.c.h.b16 %v290
        %v407 = vunpack.c.l.b16 %v291
        %v408 = vunpack.c.h.b16 %v291
        %v409 = vunpack.c.l.b16 %v292
        %v410 = vunpack.c.h.b16 %v292
        %v411 = vunpack.c.l.b16 %v293
        %v412 = vunpack.c.h.b16 %v293
        %v413 = vunpack.c.l.b16 %v294
        %v414 = vunpack.c.h.b16 %v294
        %v415 = vunpack.c.l.b16 %v295
        %v416 = vunpack.c.h.b16 %v295
        %v417 = vunpack.c.l.b16 %v296
        %v418 = vunpack.c.h.b16 %v296
        %v419 = vunpack.c.l.b16 %v297
        %v420 = vunpack.c.h.b16 %v297
        %v421 = vunpack.c.l.b16 %v298
        %v422 = vunpack.c.h.b16 %v298
        %v423 = vunpack.c.l.b16 %v299
        %v424 = vunpack.c.h.b16 %v299
        %v425 = vunpack.c.l.b16 %v300
        %v426 = vunpack.c.h.b16 %v300
        %v427 = vunpack.c.l.b16 %v301
        %v428 = vunpack.c.h.b16 %v301
        %v429 = vunpack.c.l.b16 %v302
        %v430 = vunpack.c.h.b16 %v302
        %v431 = vunpack.c.l.b16 %v303
        %v432 = vunpack.c.h.b16 %v303
        %v433 = vunpack.c.l.b16 %v304
        %v434 = vunpack.c.h.b16 %v304
        %v435 = vunpack.c.l.b16 %v305
        %v436 = vunpack.c.h.b16 %v305
        %v437 = vunpack.c.l.b16 %v306
        %v438 = vunpack.c.h.b16 %v306
        %v439 = vunpack.c.l.b16 %v307
        %v440 = vunpack.c.h.b16 %v307
        %v441 = vunpack.c.l.b16 %v308
        %v442 = vunpack.c.h.b16 %v308
        %v443 = vunpack.c.l.b16 %v309
        %v444 = vunpack.c.h.b16 %v309
        %v445 = vpack.c.b16 %v383, %v381
        %v446 = vpack.c.b16 %v384, %v382
        %v447 = vpack.c.b16 %v387, %v385
        %v448 = vpack.c.b16 %v388, %v386
        %v449 = vpack.c.b16 %v391, %v389
        %v450 = vpack.c.b16 %v392, %v390
        %v451 = vpack.c.b16 %v395, %v393
        %v452 = vpack.c.b16 %v396, %v394
        %v453 = vpack.c.b16 %v399, %v397
        %v454 = vpack.c.b16 %v400, %v398
        %v455 = vpack.c.b16 %v403, %v401
        %v456 = vpack.c.b16 %v404, %v402
        %v457 = vpack.c.b16 %v407, %v405
        %v458 = vpack.c.b16 %v408, %v406
        %v459 = vpack.c.b16 %v411, %v409
        %v460 = vpack.c.b16 %v412, %v410
        %v461 = vpack.c.b16 %v415, %v413
        %v462 = vpack.c.b16 %v416, %v414
        %v463 = vpack.c.b16 %v419, %v417
        %v464 = vpack.c.b16 %v420, %v418
        %v465 = vpack.c.b16 %v423, %v421
        %v466 = vpack.c.b16 %v424, %v422
        %v467 = vpack.c.b16 %v427, %v425
        %v468 = vpack.c.b16 %v428, %v426
        %v469 = vpack.c.b16 %v431, %v429
        %v470 = vpack.c.b16 %v432, %v430
        %v471 = vpack.c.b16 %v435, %v433
        %v472 = vpack.c.b16 %v436, %v434
        %v473 = vpack.c.b16 %v439, %v437
        %v474 = vpack.c.b16 %v440, %v438
        %v475 = vpack.c.b16 %v443, %v441
        %v476 = vpack.c.b16 %v444, %v442
        %v541 = vunpack.c.l.b16 %v310
        %v542 = vunpack.c.l.b16 %v311
        %v543 = vunpack.c.l.b16 %v312
        %v544 = vunpack.c.l.b16 %v313
        %v545 = vunpack.c.l.b16 %v314
        %v546 = vunpack.c.l.b16 %v315
        %v547 = vunpack.c.l.b16 %v316
        %v548 = vunpack.c.l.b16 %v317
        %v549 = vunpack.c.l.b16 %v318
        %v550 = vunpack.c.l.b16 %v319
        %v551 = vunpack.c.l.b16 %v320
        %v552 = vunpack.c.l.b16 %v321
        %v553 = vunpack.c.l.b16 %v322
        %v554 = vunpack.c.l.b16 %v323
        %v555 = vunpack.c.l.b16 %v324
        %v556 = vunpack.c.l.b16 %v325
        %v557 = vunpack.c.l.b16 %v326
        %v558 = vunpack.c.l.b16 %v327
        %v559 = vunpack.c.l.b16 %v328
        %v560 = vunpack.c.l.b16 %v329
        %v561 = vunpack.c.l.b16 %v330
        %v562 = vunpack.c.l.b16 %v331
        %v563 = vunpack.c.l.b16 %v332
        %v564 = vunpack.c.l.b16 %v333
        %v565 = vunpack.c.l.b16 %v334
        %v566 = vunpack.c.l.b16 %v335
        %v567 = vunpack.c.l.b16 %v336
        %v568 = vunpack.c.l.b16 %v337
        %v569 = vunpack.c.l.b16 %v338
        %v570 = vunpack.c.l.b16 %v339
        %v571 = vunpack.c.l.b16 %v340
        %v572 = vunpack.c.l.b16 %v341
        %v573 = vpack.c.b16 %v542, %v541
        %v574 = vpack.c.b16 %v544, %v543
        %v575 = vpack.c.b16 %v546, %v545
        %v576 = vpack.c.b16 %v548, %v547
        %v577 = vpack.c.b16 %v550, %v549
        %v578 = vpack.c.b16 %v552, %v551
        %v579 = vpack.c.b16 %v554, %v553
        %v580 = vpack.c.b16 %v556, %v555
        %v581 = vpack.c.b16 %v558, %v557
        %v582 = vpack.c.b16 %v560, %v559
        %v583 = vpack.c.b16 %v562, %v561
        %v584 = vpack.c.b16 %v564, %v563
        %v585 = vpack.c.b16 %v566, %v565
        %v586 = vpack.c.b16 %v568, %v567
        %v587 = vpack.c.b16 %v570, %v569
        %v588 = vpack.c.b16 %v572, %v571
        %605 = vmatprep.subr.bf16.mxu0 0
        %606 = vmatpush1.bf16.msra.mxu0 %v580
        %607 = vmatprep.subr.bf16.mxu0 0
        %608 = vmatpush1.bf16.msra.mxu0 %v579
        %609 = vmatprep.subr.bf16.mxu0 0
        %610 = vmatpush1.bf16.msra.mxu0 %v578
        %611 = vmatprep.subr.bf16.mxu0 0
        %612 = vmatpush1.bf16.msra.mxu0 %v577
        %613 = vmatprep.subr.bf16.mxu0 0
        %614 = vmatpush1.bf16.msra.mxu0 %v576
        %615 = vmatprep.subr.bf16.mxu0 0
        %616 = vmatpush1.bf16.msra.mxu0 %v575
        %617 = vmatprep.subr.bf16.mxu0 0
        %618 = vmatpush1.bf16.msra.mxu0 %v574
        %619 = vmatprep.subr.bf16.mxu0 0
        %620 = vmatpush1.bf16.msra.mxu0 %v573
        %621 = vmatprep.subr.bf16.mxu0 0
        %622 = vmatpush2.bf16.msra.mxu0 %v588
        %623 = vmatprep.subr.bf16.mxu0 0
        %624 = vmatpush2.bf16.msra.mxu0 %v587
        %625 = vmatprep.subr.bf16.mxu0 0
        %626 = vmatpush2.bf16.msra.mxu0 %v586
        %627 = vmatprep.subr.bf16.mxu0 0
        %628 = vmatpush2.bf16.msra.mxu0 %v585
        %629 = vmatprep.subr.bf16.mxu0 0
        %630 = vmatpush2.bf16.msra.mxu0 %v584
        %631 = vmatprep.subr.bf16.mxu0 0
        %632 = vmatpush2.bf16.msra.mxu0 %v583
        %633 = vmatprep.subr.bf16.mxu0 0
        %634 = vmatpush2.bf16.msra.mxu0 %v582
        %635 = vmatprep.subr.bf16.mxu0 0
        %636 = vmatpush2.bf16.msra.mxu0 %v581
        %637 = vmatprep.mubr.bf16.mxu0 %v446
        %638 = vmatmul.mubr.bf16.gmra.mxu0 %v445
        %v639 = vpop.f32.mrf.mxu0
        %v640 = vadd.f32 %v347, %v639
        %v641 = vpop.f32.mrf.mxu0
        %v642 = vpop.f32.mrf.mxu0
        %v643 = vadd.f32 %v347, %v642
        %v644 = vpop.f32.mrf.mxu0
        %645 = vmatprep.mubr.bf16.mxu0 %v448
        %646 = vmatmul.mubr.bf16.gmra.mxu0 %v447
        %v647 = vpop.f32.mrf.mxu0
        %v648 = vadd.f32 %v347, %v647
        %v649 = vpop.f32.mrf.mxu0
        %v650 = vpop.f32.mrf.mxu0
        %v651 = vadd.f32 %v347, %v650
        %v652 = vpop.f32.mrf.mxu0
        %653 = vmatprep.mubr.bf16.mxu0 %v450
        %654 = vmatmul.mubr.bf16.gmra.mxu0 %v449
        %v655 = vpop.f32.mrf.mxu0
        %v656 = vadd.f32 %v347, %v655
        %v657 = vpop.f32.mrf.mxu0
        %v658 = vpop.f32.mrf.mxu0
        %v659 = vadd.f32 %v347, %v658
        %v660 = vpop.f32.mrf.mxu0
        %661 = vmatprep.mubr.bf16.mxu0 %v452
        %662 = vmatmul.mubr.bf16.gmra.mxu0 %v451
        %v663 = vpop.f32.mrf.mxu0
        %v664 = vadd.f32 %v347, %v663
        %v665 = vpop.f32.mrf.mxu0
        %v666 = vpop.f32.mrf.mxu0
        %v667 = vadd.f32 %v347, %v666
        %v668 = vpop.f32.mrf.mxu0
        %669 = vmatprep.mubr.bf16.mxu0 %v454
        %670 = vmatmul.mubr.bf16.gmra.mxu0 %v453
        %v671 = vpop.f32.mrf.mxu0
        %v672 = vadd.f32 %v347, %v671
        %v673 = vpop.f32.mrf.mxu0
        %v674 = vpop.f32.mrf.mxu0
        %v675 = vadd.f32 %v347, %v674
        %v676 = vpop.f32.mrf.mxu0
        %677 = vmatprep.mubr.bf16.mxu0 %v456
        %678 = vmatmul.mubr.bf16.gmra.mxu0 %v455
        %v679 = vpop.f32.mrf.mxu0
        %v680 = vadd.f32 %v347, %v679
        %v681 = vpop.f32.mrf.mxu0
        %v682 = vpop.f32.mrf.mxu0
        %v683 = vadd.f32 %v347, %v682
        %v684 = vpop.f32.mrf.mxu0
        %685 = vmatprep.mubr.bf16.mxu0 %v458
        %686 = vmatmul.mubr.bf16.gmra.mxu0 %v457
        %v687 = vpop.f32.mrf.mxu0
        %v688 = vadd.f32 %v347, %v687
        %v689 = vpop.f32.mrf.mxu0
        %v690 = vpop.f32.mrf.mxu0
        %v691 = vadd.f32 %v347, %v690
        %v692 = vpop.f32.mrf.mxu0
        %693 = vmatprep.mubr.bf16.mxu0 %v460
        %694 = vmatmul.mubr.bf16.gmra.mxu0 %v459
        %v695 = vpop.f32.mrf.mxu0
        %v696 = vadd.f32 %v347, %v695
        %v697 = vpop.f32.mrf.mxu0
        %v698 = vpop.f32.mrf.mxu0
        %v699 = vadd.f32 %v347, %v698
        %v700 = vpop.f32.mrf.mxu0
        %701 = vmatprep.mubr.bf16.mxu0 %v462
        %702 = vmatmul.mubr.bf16.gmra.mxu0 %v461
        %v703 = vpop.f32.mrf.mxu0
        %v704 = vadd.f32 %v347, %v703
        %v705 = vpop.f32.mrf.mxu0
        %v706 = vpop.f32.mrf.mxu0
        %v707 = vadd.f32 %v347, %v706
        %v708 = vpop.f32.mrf.mxu0
        %709 = vmatprep.mubr.bf16.mxu0 %v464
        %710 = vmatmul.mubr.bf16.gmra.mxu0 %v463
        %v711 = vpop.f32.mrf.mxu0
        %v712 = vadd.f32 %v347, %v711
        %v713 = vpop.f32.mrf.mxu0
        %v714 = vpop.f32.mrf.mxu0
        %v715 = vadd.f32 %v347, %v714
        %v716 = vpop.f32.mrf.mxu0
        %717 = vmatprep.mubr.bf16.mxu0 %v466
        %718 = vmatmul.mubr.bf16.gmra.mxu0 %v465
        %v719 = vpop.f32.mrf.mxu0
        %v720 = vadd.f32 %v347, %v719
        %v721 = vpop.f32.mrf.mxu0
        %v722 = vpop.f32.mrf.mxu0
        %v723 = vadd.f32 %v347, %v722
        %v724 = vpop.f32.mrf.mxu0
        %725 = vmatprep.mubr.bf16.mxu0 %v468
        %726 = vmatmul.mubr.bf16.gmra.mxu0 %v467
        %v727 = vpop.f32.mrf.mxu0
        %v728 = vadd.f32 %v347, %v727
        %v729 = vpop.f32.mrf.mxu0
        %v730 = vpop.f32.mrf.mxu0
        %v731 = vadd.f32 %v347, %v730
        %v732 = vpop.f32.mrf.mxu0
        %733 = vmatprep.mubr.bf16.mxu0 %v470
        %734 = vmatmul.mubr.bf16.gmra.mxu0 %v469
        %v735 = vpop.f32.mrf.mxu0
        %v736 = vadd.f32 %v347, %v735
        %v737 = vpop.f32.mrf.mxu0
        %v738 = vpop.f32.mrf.mxu0
        %v739 = vadd.f32 %v347, %v738
        %v740 = vpop.f32.mrf.mxu0
        %741 = vmatprep.mubr.bf16.mxu0 %v472
        %742 = vmatmul.mubr.bf16.gmra.mxu0 %v471
        %v743 = vpop.f32.mrf.mxu0
        %v744 = vadd.f32 %v347, %v743
        %v745 = vpop.f32.mrf.mxu0
        %v746 = vpop.f32.mrf.mxu0
        %v747 = vadd.f32 %v347, %v746
        %v748 = vpop.f32.mrf.mxu0
        %749 = vmatprep.mubr.bf16.mxu0 %v474
        %750 = vmatmul.mubr.bf16.gmra.mxu0 %v473
        %v751 = vpop.f32.mrf.mxu0
        %v752 = vadd.f32 %v347, %v751
        %v753 = vpop.f32.mrf.mxu0
        %v754 = vpop.f32.mrf.mxu0
        %v755 = vadd.f32 %v347, %v754
        %v756 = vpop.f32.mrf.mxu0
        %757 = vmatprep.mubr.bf16.mxu0 %v476
        %758 = vmatmul.mubr.bf16.gmra.mxu0 %v475
        %v759 = vpop.f32.mrf.mxu0
        %v760 = vadd.f32 %v347, %v759
        %v761 = vpop.f32.mrf.mxu0
        %v762 = vpop.f32.mrf.mxu0
        %v763 = vadd.f32 %v347, %v762
        %v764 = vpop.f32.mrf.mxu0
        %765 = vdwg.mxu0
        %v766 = vmax.f32 %v640, 0.0
        %v767 = vmax.f32 %v643, 0.0
        %v768 = vmax.f32 %v648, 0.0
        %v769 = vmax.f32 %v651, 0.0
        %v770 = vmax.f32 %v656, 0.0
        %v771 = vmax.f32 %v659, 0.0
        %v772 = vmax.f32 %v664, 0.0
        %v773 = vmax.f32 %v667, 0.0
        %v774 = vmax.f32 %v672, 0.0
        %v775 = vmax.f32 %v675, 0.0
        %v776 = vmax.f32 %v680, 0.0
        %v777 = vmax.f32 %v683, 0.0
        %v778 = vmax.f32 %v688, 0.0
        %v779 = vmax.f32 %v691, 0.0
        %v780 = vmax.f32 %v696, 0.0
        %v781 = vmax.f32 %v699, 0.0
        %v782 = vmax.f32 %v704, 0.0
        %v783 = vmax.f32 %v707, 0.0
        %v784 = vmax.f32 %v712, 0.0
        %v785 = vmax.f32 %v715, 0.0
        %v786 = vmax.f32 %v720, 0.0
        %v787 = vmax.f32 %v723, 0.0
        %v788 = vmax.f32 %v728, 0.0
        %v789 = vmax.f32 %v731, 0.0
        %v790 = vmax.f32 %v736, 0.0
        %v791 = vmax.f32 %v739, 0.0
        %v792 = vmax.f32 %v744, 0.0
        %v793 = vmax.f32 %v747, 0.0
        %v794 = vmax.f32 %v752, 0.0
        %v795 = vmax.f32 %v755, 0.0
        %v796 = vmax.f32 %v760, 0.0
        %v797 = vmax.f32 %v763, 0.0
        %v798 = vpack.c.bf16 %v767, %v766
        %v799 = vpack.c.bf16 %v769, %v768
        %v800 = vpack.c.bf16 %v771, %v770
        %v801 = vpack.c.bf16 %v773, %v772
        %v802 = vpack.c.bf16 %v775, %v774
        %v803 = vpack.c.bf16 %v777, %v776
        %v804 = vpack.c.bf16 %v779, %v778
        %v805 = vpack.c.bf16 %v781, %v780
        %v806 = vpack.c.bf16 %v783, %v782
        %v807 = vpack.c.bf16 %v785, %v784
        %v808 = vpack.c.bf16 %v787, %v786
        %v809 = vpack.c.bf16 %v789, %v788
        %v810 = vpack.c.bf16 %v791, %v790
        %v811 = vpack.c.bf16 %v793, %v792
        %v812 = vpack.c.bf16 %v795, %v794
        %v813 = vpack.c.bf16 %v797, %v796
        %vm814 = vcmask 519168
        %815 = vst.msk [vmem:[#allocation2] sm:$0xf] %vm814, 0
        %816 = vst.msk [vmem:[#allocation2 + $0x4] sm:$0xf] %vm814, 0
        %vm817 = vcmask 516096
        %818 = vst.msk [vmem:[#allocation2 + $0x8] sm:$0x1] %vm817, 0
        %s819 = scalar_lea.vmem [#allocation2], 204
        %820 = vst.msk [vmem:[%s819] sm:$0xf] %vm814, 0
        %821 = vst.msk [vmem:[%s819 + $0x4] sm:$0xf] %vm814, 0
        %822 = vst.msk [vmem:[%s819 + $0x8] sm:$0x1] %vm817, 0
        %vm823 = vcmask 516096
        %vm824 = vsmask.f32 256
        %vm825 = vmand %vm823, %vm824
        %v826 = vld [vmem:[#allocation2] sm:$0x1]
        %v827 = vsel %vm825, 0, %v826
        %828 = vst [vmem:[#allocation2] sm:$0x1] %v827
        %v829 = vld [vmem:[#allocation2 + $0xc] sm:$0x1]
        %v830 = vsel %vm825, 0, %v829
        %831 = vst [vmem:[#allocation2 + $0xc] sm:$0x1] %v830
        %v832 = vld [vmem:[#allocation2 + $0x18] sm:$0x1]
        %v833 = vsel %vm825, 0, %v832
        %834 = vst [vmem:[#allocation2 + $0x18] sm:$0x1] %v833
        %v835 = vld [vmem:[#allocation2 + $0x24] sm:$0x1]
        %v836 = vsel %vm825, 0, %v835
        %837 = vst [vmem:[#allocation2 + $0x24] sm:$0x1] %v836
        %v838 = vld [vmem:[#allocation2 + $0x30] sm:$0x1]
        %v839 = vsel %vm825, 0, %v838
        %840 = vst [vmem:[#allocation2 + $0x30] sm:$0x1] %v839
        %v841 = vld [vmem:[#allocation2 + $0x3c] sm:$0x1]
        %v842 = vsel %vm825, 0, %v841
        %843 = vst [vmem:[#allocation2 + $0x3c] sm:$0x1] %v842
        %v844 = vld [vmem:[#allocation2 + $0x48] sm:$0x1]
        %v845 = vsel %vm825, 0, %v844
        %846 = vst [vmem:[#allocation2 + $0x48] sm:$0x1] %v845
        %v847 = vld [vmem:[#allocation2 + $0x54] sm:$0x1]
        %v848 = vsel %vm825, 0, %v847
        %849 = vst [vmem:[#allocation2 + $0x54] sm:$0x1] %v848
        %v850 = vld [vmem:[#allocation2 + $0x60] sm:$0x1]
        %v851 = vsel %vm825, 0, %v850
        %852 = vst [vmem:[#allocation2 + $0x60] sm:$0x1] %v851
        %v853 = vld [vmem:[#allocation2 + $0x6c] sm:$0x1]
        %v854 = vsel %vm825, 0, %v853
        %855 = vst [vmem:[#allocation2 + $0x6c] sm:$0x1] %v854
        %v856 = vld [vmem:[#allocation2 + $0x78] sm:$0x1]
        %v857 = vsel %vm825, 0, %v856
        %858 = vst [vmem:[#allocation2 + $0x78] sm:$0x1] %v857
        %v859 = vld [vmem:[#allocation2 + $0x84] sm:$0x1]
        %v860 = vsel %vm825, 0, %v859
        %861 = vst [vmem:[#allocation2 + $0x84] sm:$0x1] %v860
        %v862 = vld [vmem:[#allocation2 + $0x90] sm:$0x1]
        %v863 = vsel %vm825, 0, %v862
        %864 = vst [vmem:[#allocation2 + $0x90] sm:$0x1] %v863
        %v865 = vld [vmem:[#allocation2 + $0x9c] sm:$0x1]
        %v866 = vsel %vm825, 0, %v865
        %867 = vst [vmem:[#allocation2 + $0x9c] sm:$0x1] %v866
        %v868 = vld [vmem:[#allocation2 + $0xa8] sm:$0x1]
        %v869 = vsel %vm825, 0, %v868
        %870 = vst [vmem:[#allocation2 + $0xa8] sm:$0x1] %v869
        %v871 = vld [vmem:[#allocation2 + $0xb4] sm:$0x1]
        %v872 = vsel %vm825, 0, %v871
        %873 = vst [vmem:[#allocation2 + $0xb4] sm:$0x1] %v872
        %v874 = vld [vmem:[#allocation2 + $0xc0] sm:$0x1]
        %v875 = vsel %vm825, 0, %v874
        %876 = vst [vmem:[#allocation2 + $0xc0] sm:$0x1] %v875
        %v877 = vld [vmem:[#allocation2 + $0xcc] sm:$0x1]
        %v878 = vsel %vm825, 0, %v877
        %879 = vst [vmem:[#allocation2 + $0xcc] sm:$0x1] %v878
        %vm880 = vsmask.f32 7938
        %vm881 = vmand %vm823, %vm880
        %v882 = vld [vmem:[#allocation2 + $0x8] sm:$0x1]
        %v883 = vsel %vm881, 0, %v882
        %884 = vst [vmem:[#allocation2 + $0x8] sm:$0x1] %v883
        %v885 = vld [vmem:[#allocation2 + $0x14] sm:$0x1]
        %v886 = vsel %vm881, 0, %v885
        %887 = vst [vmem:[#allocation2 + $0x14] sm:$0x1] %v886
        %v888 = vld [vmem:[#allocation2 + $0x20] sm:$0x1]
        %v889 = vsel %vm881, 0, %v888
        %890 = vst [vmem:[#allocation2 + $0x20] sm:$0x1] %v889
        %v891 = vld [vmem:[#allocation2 + $0x2c] sm:$0x1]
        %v892 = vsel %vm881, 0, %v891
        %893 = vst [vmem:[#allocation2 + $0x2c] sm:$0x1] %v892
        %v894 = vld [vmem:[#allocation2 + $0x38] sm:$0x1]
        %v895 = vsel %vm881, 0, %v894
        %896 = vst [vmem:[#allocation2 + $0x38] sm:$0x1] %v895
        %v897 = vld [vmem:[#allocation2 + $0x44] sm:$0x1]
        %v898 = vsel %vm881, 0, %v897
        %899 = vst [vmem:[#allocation2 + $0x44] sm:$0x1] %v898
        %v900 = vld [vmem:[#allocation2 + $0x50] sm:$0x1]
        %v901 = vsel %vm881, 0, %v900
        %902 = vst [vmem:[#allocation2 + $0x50] sm:$0x1] %v901
        %v903 = vld [vmem:[#allocation2 + $0x5c] sm:$0x1]
        %v904 = vsel %vm881, 0, %v903
        %905 = vst [vmem:[#allocation2 + $0x5c] sm:$0x1] %v904
        %v906 = vld [vmem:[#allocation2 + $0x68] sm:$0x1]
        %v907 = vsel %vm881, 0, %v906
        %908 = vst [vmem:[#allocation2 + $0x68] sm:$0x1] %v907
        %v909 = vld [vmem:[#allocation2 + $0x74] sm:$0x1]
        %v910 = vsel %vm881, 0, %v909
        %911 = vst [vmem:[#allocation2 + $0x74] sm:$0x1] %v910
        %v912 = vld [vmem:[#allocation2 + $0x80] sm:$0x1]
        %v913 = vsel %vm881, 0, %v912
        %914 = vst [vmem:[#allocation2 + $0x80] sm:$0x1] %v913
        %v915 = vld [vmem:[#allocation2 + $0x8c] sm:$0x1]
        %v916 = vsel %vm881, 0, %v915
        %917 = vst [vmem:[#allocation2 + $0x8c] sm:$0x1] %v916
        %v918 = vld [vmem:[#allocation2 + $0x98] sm:$0x1]
        %v919 = vsel %vm881, 0, %v918
        %920 = vst [vmem:[#allocation2 + $0x98] sm:$0x1] %v919
        %v921 = vld [vmem:[#allocation2 + $0xa4] sm:$0x1]
        %v922 = vsel %vm881, 0, %v921
        %923 = vst [vmem:[#allocation2 + $0xa4] sm:$0x1] %v922
        %v924 = vld [vmem:[#allocation2 + $0xb0] sm:$0x1]
        %v925 = vsel %vm881, 0, %v924
        %926 = vst [vmem:[#allocation2 + $0xb0] sm:$0x1] %v925
        %v927 = vld [vmem:[#allocation2 + $0xbc] sm:$0x1]
        %v928 = vsel %vm881, 0, %v927
        %929 = vst [vmem:[#allocation2 + $0xbc] sm:$0x1] %v928
        %v930 = vld [vmem:[#allocation2 + $0xc8] sm:$0x1]
        %v931 = vsel %vm881, 0, %v930
        %932 = vst [vmem:[#allocation2 + $0xc8] sm:$0x1] %v931
        %v933 = vld [vmem:[#allocation2 + $0xd4] sm:$0x1]
        %v934 = vsel %vm881, 0, %v933
        %935 = vst [vmem:[#allocation2 + $0xd4] sm:$0x1] %v934
        %v952 = vunpack.c.l.b16 %v798
        %v953 = vunpack.c.h.b16 %v798
        %v954 = vunpack.c.l.b16 %v799
        %v955 = vunpack.c.h.b16 %v799
        %v956 = vunpack.c.l.b16 %v800
        %v957 = vunpack.c.h.b16 %v800
        %v958 = vunpack.c.l.b16 %v801
        %v959 = vunpack.c.h.b16 %v801
        %v960 = vunpack.c.l.b16 %v802
        %v961 = vunpack.c.h.b16 %v802
        %v962 = vunpack.c.l.b16 %v803
        %v963 = vunpack.c.h.b16 %v803
        %v964 = vunpack.c.l.b16 %v804
        %v965 = vunpack.c.h.b16 %v804
        %v966 = vunpack.c.l.b16 %v805
        %v967 = vunpack.c.h.b16 %v805
        %v968 = vunpack.c.l.b16 %v806
        %v969 = vunpack.c.h.b16 %v806
        %v970 = vunpack.c.l.b16 %v807
        %v971 = vunpack.c.h.b16 %v807
        %v972 = vunpack.c.l.b16 %v808
        %v973 = vunpack.c.h.b16 %v808
        %v974 = vunpack.c.l.b16 %v809
        %v975 = vunpack.c.h.b16 %v809
        %v976 = vunpack.c.l.b16 %v810
        %v977 = vunpack.c.h.b16 %v810
        %v978 = vunpack.c.l.b16 %v811
        %v979 = vunpack.c.h.b16 %v811
        %v980 = vunpack.c.l.b16 %v812
        %v981 = vunpack.c.h.b16 %v812
        %v982 = vunpack.c.l.b16 %v813
        %v983 = vunpack.c.h.b16 %v813
        %v984 = vpack.c.b16 %v952, %v952
        %v985 = vpack.c.b16 %v953, %v953
        %v986 = vpack.c.b16 %v954, %v954
        %v987 = vpack.c.b16 %v955, %v955
        %v988 = vpack.c.b16 %v956, %v956
        %v989 = vpack.c.b16 %v957, %v957
        %v990 = vpack.c.b16 %v958, %v958
        %v991 = vpack.c.b16 %v959, %v959
        %v992 = vpack.c.b16 %v960, %v960
        %v993 = vpack.c.b16 %v961, %v961
        %v994 = vpack.c.b16 %v962, %v962
        %v995 = vpack.c.b16 %v963, %v963
        %v996 = vpack.c.b16 %v964, %v964
        %v997 = vpack.c.b16 %v965, %v965
        %v998 = vpack.c.b16 %v966, %v966
        %v999 = vpack.c.b16 %v967, %v967
        %v1000 = vpack.c.b16 %v968, %v968
        %v1001 = vpack.c.b16 %v969, %v969
        %v1002 = vpack.c.b16 %v970, %v970
        %v1003 = vpack.c.b16 %v971, %v971
        %v1004 = vpack.c.b16 %v972, %v972
        %v1005 = vpack.c.b16 %v973, %v973
        %v1006 = vpack.c.b16 %v974, %v974
        %v1007 = vpack.c.b16 %v975, %v975
        %v1008 = vpack.c.b16 %v976, %v976
        %v1009 = vpack.c.b16 %v977, %v977
        %v1010 = vpack.c.b16 %v978, %v978
        %v1011 = vpack.c.b16 %v979, %v979
        %v1012 = vpack.c.b16 %v980, %v980
        %v1013 = vpack.c.b16 %v981, %v981
        %v1014 = vpack.c.b16 %v982, %v982
        %v1015 = vpack.c.b16 %v983, %v983
        %vm1016 = vsmask.f32 4368
        %vm1017 = vmor %vm824, %vm1016
        %v1019 = vshrl.u32 %v984, 16
        %v1021 = vrot.slane %v1019, 7
        %v1022 = vshll.u32 %v984, 16
        %v1024 = vor.u32 %v1021, %v1022
        %v1025 = vrot.slane %v1021, 4
        %v1027 = vshrl.u32 %v985, 16
        %v1029 = vrot.slane %v1027, 7
        %v1030 = vshll.u32 %v985, 16
        %v1032 = vor.u32 %v1029, %v1030
        %v1033 = vsel %vm1017, %v1025, %v1032
        %v1034 = vrot.slane %v1029, 4
        %v1036 = vshrl.u32 %v986, 16
        %v1038 = vrot.slane %v1036, 7
        %v1039 = vshll.u32 %v986, 16
        %v1041 = vor.u32 %v1038, %v1039
        %v1042 = vrot.slane %v1038, 4
        %v1044 = vshrl.u32 %v987, 16
        %v1046 = vrot.slane %v1044, 7
        %v1047 = vshll.u32 %v987, 16
        %v1049 = vor.u32 %v1046, %v1047
        %v1050 = vsel %vm1017, %v1042, %v1049
        %v1051 = vrot.slane %v1046, 4
        %v1053 = vshrl.u32 %v988, 16
        %v1055 = vrot.slane %v1053, 7
        %v1056 = vshll.u32 %v988, 16
        %v1058 = vor.u32 %v1055, %v1056
        %v1059 = vrot.slane %v1055, 4
        %v1061 = vshrl.u32 %v989, 16
        %v1063 = vrot.slane %v1061, 7
        %v1064 = vshll.u32 %v989, 16
        %v1066 = vor.u32 %v1063, %v1064
        %v1067 = vsel %vm1017, %v1059, %v1066
        %v1068 = vrot.slane %v1063, 4
        %v1070 = vshrl.u32 %v990, 16
        %v1072 = vrot.slane %v1070, 7
        %v1073 = vshll.u32 %v990, 16
        %v1075 = vor.u32 %v1072, %v1073
        %v1076 = vrot.slane %v1072, 4
        %v1078 = vshrl.u32 %v991, 16
        %v1080 = vrot.slane %v1078, 7
        %v1081 = vshll.u32 %v991, 16
        %v1083 = vor.u32 %v1080, %v1081
        %v1084 = vsel %vm1017, %v1076, %v1083
        %v1085 = vrot.slane %v1080, 4
        %v1087 = vshrl.u32 %v992, 16
        %v1089 = vrot.slane %v1087, 7
        %v1090 = vshll.u32 %v992, 16
        %v1092 = vor.u32 %v1089, %v1090
        %v1093 = vrot.slane %v1089, 4
        %v1095 = vshrl.u32 %v993, 16
        %v1097 = vrot.slane %v1095, 7
        %v1098 = vshll.u32 %v993, 16
        %v1100 = vor.u32 %v1097, %v1098
        %v1101 = vsel %vm1017, %v1093, %v1100
        %v1102 = vrot.slane %v1097, 4
        %v1104 = vshrl.u32 %v994, 16
        %v1106 = vrot.slane %v1104, 7
        %v1107 = vshll.u32 %v994, 16
        %v1109 = vor.u32 %v1106, %v1107
        %v1110 = vrot.slane %v1106, 4
        %v1112 = vshrl.u32 %v995, 16
        %v1114 = vrot.slane %v1112, 7
        %v1115 = vshll.u32 %v995, 16
        %v1117 = vor.u32 %v1114, %v1115
        %v1118 = vsel %vm1017, %v1110, %v1117
        %v1119 = vrot.slane %v1114, 4
        %v1121 = vshrl.u32 %v996, 16
        %v1123 = vrot.slane %v1121, 7
        %v1124 = vshll.u32 %v996, 16
        %v1126 = vor.u32 %v1123, %v1124
        %v1127 = vrot.slane %v1123, 4
        %v1129 = vshrl.u32 %v997, 16
        %v1131 = vrot.slane %v1129, 7
        %v1132 = vshll.u32 %v997, 16
        %v1134 = vor.u32 %v1131, %v1132
        %v1135 = vsel %vm1017, %v1127, %v1134
        %v1136 = vrot.slane %v1131, 4
        %v1138 = vshrl.u32 %v998, 16
        %v1140 = vrot.slane %v1138, 7
        %v1141 = vshll.u32 %v998, 16
        %v1143 = vor.u32 %v1140, %v1141
        %v1144 = vrot.slane %v1140, 4
        %v1146 = vshrl.u32 %v999, 16
        %v1148 = vrot.slane %v1146, 7
        %v1149 = vshll.u32 %v999, 16
        %v1151 = vor.u32 %v1148, %v1149
        %v1152 = vsel %vm1017, %v1144, %v1151
        %v1153 = vrot.slane %v1148, 4
        %v1155 = vshrl.u32 %v1000, 16
        %v1157 = vrot.slane %v1155, 7
        %v1158 = vshll.u32 %v1000, 16
        %v1160 = vor.u32 %v1157, %v1158
        %v1161 = vrot.slane %v1157, 4
        %v1163 = vshrl.u32 %v1001, 16
        %v1165 = vrot.slane %v1163, 7
        %v1166 = vshll.u32 %v1001, 16
        %v1168 = vor.u32 %v1165, %v1166
        %v1169 = vsel %vm1017, %v1161, %v1168
        %v1170 = vrot.slane %v1165, 4
        %v1172 = vshrl.u32 %v1002, 16
        %v1174 = vrot.slane %v1172, 7
        %v1175 = vshll.u32 %v1002, 16
        %v1177 = vor.u32 %v1174, %v1175
        %v1178 = vrot.slane %v1174, 4
        %v1180 = vshrl.u32 %v1003, 16
        %v1182 = vrot.slane %v1180, 7
        %v1183 = vshll.u32 %v1003, 16
        %v1185 = vor.u32 %v1182, %v1183
        %v1186 = vsel %vm1017, %v1178, %v1185
        %v1187 = vrot.slane %v1182, 4
        %v1189 = vshrl.u32 %v1004, 16
        %v1191 = vrot.slane %v1189, 7
        %v1192 = vshll.u32 %v1004, 16
        %v1194 = vor.u32 %v1191, %v1192
        %v1195 = vrot.slane %v1191, 4
        %v1197 = vshrl.u32 %v1005, 16
        %v1199 = vrot.slane %v1197, 7
        %v1200 = vshll.u32 %v1005, 16
        %v1202 = vor.u32 %v1199, %v1200
        %v1203 = vsel %vm1017, %v1195, %v1202
        %v1204 = vrot.slane %v1199, 4
        %v1206 = vshrl.u32 %v1006, 16
        %v1208 = vrot.slane %v1206, 7
        %v1209 = vshll.u32 %v1006, 16
        %v1211 = vor.u32 %v1208, %v1209
        %v1212 = vrot.slane %v1208, 4
        %v1214 = vshrl.u32 %v1007, 16
        %v1216 = vrot.slane %v1214, 7
        %v1217 = vshll.u32 %v1007, 16
        %v1219 = vor.u32 %v1216, %v1217
        %v1220 = vsel %vm1017, %v1212, %v1219
        %v1221 = vrot.slane %v1216, 4
        %v1223 = vshrl.u32 %v1008, 16
        %v1225 = vrot.slane %v1223, 7
        %v1226 = vshll.u32 %v1008, 16
        %v1228 = vor.u32 %v1225, %v1226
        %v1229 = vrot.slane %v1225, 4
        %v1231 = vshrl.u32 %v1009, 16
        %v1233 = vrot.slane %v1231, 7
        %v1234 = vshll.u32 %v1009, 16
        %v1236 = vor.u32 %v1233, %v1234
        %v1237 = vsel %vm1017, %v1229, %v1236
        %v1238 = vrot.slane %v1233, 4
        %v1240 = vshrl.u32 %v1010, 16
        %v1242 = vrot.slane %v1240, 7
        %v1243 = vshll.u32 %v1010, 16
        %v1245 = vor.u32 %v1242, %v1243
        %v1246 = vrot.slane %v1242, 4
        %v1248 = vshrl.u32 %v1011, 16
        %v1250 = vrot.slane %v1248, 7
        %v1251 = vshll.u32 %v1011, 16
        %v1253 = vor.u32 %v1250, %v1251
        %v1254 = vsel %vm1017, %v1246, %v1253
        %v1255 = vrot.slane %v1250, 4
        %v1257 = vshrl.u32 %v1012, 16
        %v1259 = vrot.slane %v1257, 7
        %v1260 = vshll.u32 %v1012, 16
        %v1262 = vor.u32 %v1259, %v1260
        %v1263 = vrot.slane %v1259, 4
        %v1265 = vshrl.u32 %v1013, 16
        %v1267 = vrot.slane %v1265, 7
        %v1268 = vshll.u32 %v1013, 16
        %v1270 = vor.u32 %v1267, %v1268
        %v1271 = vsel %vm1017, %v1263, %v1270
        %v1272 = vrot.slane %v1267, 4
        %v1274 = vshrl.u32 %v1014, 16
        %v1276 = vrot.slane %v1274, 7
        %v1277 = vshll.u32 %v1014, 16
        %v1279 = vor.u32 %v1276, %v1277
        %v1280 = vrot.slane %v1276, 4
        %v1282 = vshrl.u32 %v1015, 16
        %v1284 = vrot.slane %v1282, 7
        %v1285 = vshll.u32 %v1015, 16
        %v1287 = vor.u32 %v1284, %v1285
        %v1288 = vsel %vm1017, %v1280, %v1287
        %v1289 = vrot.slane %v1284, 4
        %s1338 = scalar_lea.vmem [#allocation2], 12
        %vm1339 = vcmask 519168
        %vm1340 = vmand %vm1339, %vm880
        %v1341 = vld [vmem:[%s1338] sm:$0xf]
        %v1342 = vsel %vm1340, %v1024, %v1341
        %1343 = vst [vmem:[%s1338] sm:$0xf] %v1342
        %1344 = vst.msk [vmem:[%s1338 + $0x4] sm:$0xf] %vm814, %v1033
        %v1345 = vld [vmem:[%s1338 + $0x8] sm:$0x1]
        %v1346 = vsel %vm825, %v1034, %v1345
        %1347 = vst [vmem:[%s1338 + $0x8] sm:$0x1] %v1346
        %v1348 = vld [vmem:[%s1338 + $0xc] sm:$0xf]
        %v1349 = vsel %vm1340, %v1041, %v1348
        %1350 = vst [vmem:[%s1338 + $0xc] sm:$0xf] %v1349
        %1351 = vst.msk [vmem:[%s1338 + $0x10] sm:$0xf] %vm814, %v1050
        %v1352 = vld [vmem:[%s1338 + $0x14] sm:$0x1]
        %v1353 = vsel %vm825, %v1051, %v1352
        %1354 = vst [vmem:[%s1338 + $0x14] sm:$0x1] %v1353
        %v1355 = vld [vmem:[%s1338 + $0x18] sm:$0xf]
        %v1356 = vsel %vm1340, %v1058, %v1355
        %1357 = vst [vmem:[%s1338 + $0x18] sm:$0xf] %v1356
        %1358 = vst.msk [vmem:[%s1338 + $0x1c] sm:$0xf] %vm814, %v1067
        %v1359 = vld [vmem:[%s1338 + $0x20] sm:$0x1]
        %v1360 = vsel %vm825, %v1068, %v1359
        %1361 = vst [vmem:[%s1338 + $0x20] sm:$0x1] %v1360
        %v1362 = vld [vmem:[%s1338 + $0x24] sm:$0xf]
        %v1363 = vsel %vm1340, %v1075, %v1362
        %1364 = vst [vmem:[%s1338 + $0x24] sm:$0xf] %v1363
        %1365 = vst.msk [vmem:[%s1338 + $0x28] sm:$0xf] %vm814, %v1084
        %v1366 = vld [vmem:[%s1338 + $0x2c] sm:$0x1]
        %v1367 = vsel %vm825, %v1085, %v1366
        %1368 = vst [vmem:[%s1338 + $0x2c] sm:$0x1] %v1367
        %v1369 = vld [vmem:[%s1338 + $0x30] sm:$0xf]
        %v1370 = vsel %vm1340, %v1092, %v1369
        %1371 = vst [vmem:[%s1338 + $0x30] sm:$0xf] %v1370
        %1372 = vst.msk [vmem:[%s1338 + $0x34] sm:$0xf] %vm814, %v1101
        %v1373 = vld [vmem:[%s1338 + $0x38] sm:$0x1]
        %v1374 = vsel %vm825, %v1102, %v1373
        %1375 = vst [vmem:[%s1338 + $0x38] sm:$0x1] %v1374
        %v1376 = vld [vmem:[%s1338 + $0x3c] sm:$0xf]
        %v1377 = vsel %vm1340, %v1109, %v1376
        %1378 = vst [vmem:[%s1338 + $0x3c] sm:$0xf] %v1377
        %1379 = vst.msk [vmem:[%s1338 + $0x40] sm:$0xf] %vm814, %v1118
        %v1380 = vld [vmem:[%s1338 + $0x44] sm:$0x1]
        %v1381 = vsel %vm825, %v1119, %v1380
        %1382 = vst [vmem:[%s1338 + $0x44] sm:$0x1] %v1381
        %v1383 = vld [vmem:[%s1338 + $0x48] sm:$0xf]
        %v1384 = vsel %vm1340, %v1126, %v1383
        %1385 = vst [vmem:[%s1338 + $0x48] sm:$0xf] %v1384
        %1386 = vst.msk [vmem:[%s1338 + $0x4c] sm:$0xf] %vm814, %v1135
        %v1387 = vld [vmem:[%s1338 + $0x50] sm:$0x1]
        %v1388 = vsel %vm825, %v1136, %v1387
        %1389 = vst [vmem:[%s1338 + $0x50] sm:$0x1] %v1388
        %v1390 = vld [vmem:[%s1338 + $0x54] sm:$0xf]
        %v1391 = vsel %vm1340, %v1143, %v1390
        %1392 = vst [vmem:[%s1338 + $0x54] sm:$0xf] %v1391
        %1393 = vst.msk [vmem:[%s1338 + $0x58] sm:$0xf] %vm814, %v1152
        %v1394 = vld [vmem:[%s1338 + $0x5c] sm:$0x1]
        %v1395 = vsel %vm825, %v1153, %v1394
        %1396 = vst [vmem:[%s1338 + $0x5c] sm:$0x1] %v1395
        %v1397 = vld [vmem:[%s1338 + $0x60] sm:$0xf]
        %v1398 = vsel %vm1340, %v1160, %v1397
        %1399 = vst [vmem:[%s1338 + $0x60] sm:$0xf] %v1398
        %1400 = vst.msk [vmem:[%s1338 + $0x64] sm:$0xf] %vm814, %v1169
        %v1401 = vld [vmem:[%s1338 + $0x68] sm:$0x1]
        %v1402 = vsel %vm825, %v1170, %v1401
        %1403 = vst [vmem:[%s1338 + $0x68] sm:$0x1] %v1402
        %v1404 = vld [vmem:[%s1338 + $0x6c] sm:$0xf]
        %v1405 = vsel %vm1340, %v1177, %v1404
        %1406 = vst [vmem:[%s1338 + $0x6c] sm:$0xf] %v1405
        %1407 = vst.msk [vmem:[%s1338 + $0x70] sm:$0xf] %vm814, %v1186
        %v1408 = vld [vmem:[%s1338 + $0x74] sm:$0x1]
        %v1409 = vsel %vm825, %v1187, %v1408
        %1410 = vst [vmem:[%s1338 + $0x74] sm:$0x1] %v1409
        %v1411 = vld [vmem:[%s1338 + $0x78] sm:$0xf]
        %v1412 = vsel %vm1340, %v1194, %v1411
        %1413 = vst [vmem:[%s1338 + $0x78] sm:$0xf] %v1412
        %1414 = vst.msk [vmem:[%s1338 + $0x7c] sm:$0xf] %vm814, %v1203
        %v1415 = vld [vmem:[%s1338 + $0x80] sm:$0x1]
        %v1416 = vsel %vm825, %v1204, %v1415
        %1417 = vst [vmem:[%s1338 + $0x80] sm:$0x1] %v1416
        %v1418 = vld [vmem:[%s1338 + $0x84] sm:$0xf]
        %v1419 = vsel %vm1340, %v1211, %v1418
        %1420 = vst [vmem:[%s1338 + $0x84] sm:$0xf] %v1419
        %1421 = vst.msk [vmem:[%s1338 + $0x88] sm:$0xf] %vm814, %v1220
        %v1422 = vld [vmem:[%s1338 + $0x8c] sm:$0x1]
        %v1423 = vsel %vm825, %v1221, %v1422
        %1424 = vst [vmem:[%s1338 + $0x8c] sm:$0x1] %v1423
        %v1425 = vld [vmem:[%s1338 + $0x90] sm:$0xf]
        %v1426 = vsel %vm1340, %v1228, %v1425
        %1427 = vst [vmem:[%s1338 + $0x90] sm:$0xf] %v1426
        %1428 = vst.msk [vmem:[%s1338 + $0x94] sm:$0xf] %vm814, %v1237
        %v1429 = vld [vmem:[%s1338 + $0x98] sm:$0x1]
        %v1430 = vsel %vm825, %v1238, %v1429
        %1431 = vst [vmem:[%s1338 + $0x98] sm:$0x1] %v1430
        %v1432 = vld [vmem:[%s1338 + $0x9c] sm:$0xf]
        %v1433 = vsel %vm1340, %v1245, %v1432
        %1434 = vst [vmem:[%s1338 + $0x9c] sm:$0xf] %v1433
        %1435 = vst.msk [vmem:[%s1338 + $0xa0] sm:$0xf] %vm814, %v1254
        %v1436 = vld [vmem:[%s1338 + $0xa4] sm:$0x1]
        %v1437 = vsel %vm825, %v1255, %v1436
        %1438 = vst [vmem:[%s1338 + $0xa4] sm:$0x1] %v1437
        %v1439 = vld [vmem:[%s1338 + $0xa8] sm:$0xf]
        %v1440 = vsel %vm1340, %v1262, %v1439
        %1441 = vst [vmem:[%s1338 + $0xa8] sm:$0xf] %v1440
        %1442 = vst.msk [vmem:[%s1338 + $0xac] sm:$0xf] %vm814, %v1271
        %v1443 = vld [vmem:[%s1338 + $0xb0] sm:$0x1]
        %v1444 = vsel %vm825, %v1272, %v1443
        %1445 = vst [vmem:[%s1338 + $0xb0] sm:$0x1] %v1444
        %v1446 = vld [vmem:[%s1338 + $0xb4] sm:$0xf]
        %v1447 = vsel %vm1340, %v1279, %v1446
        %1448 = vst [vmem:[%s1338 + $0xb4] sm:$0xf] %v1447
        %1449 = vst.msk [vmem:[%s1338 + $0xb8] sm:$0xf] %vm814, %v1288
        %v1450 = vld [vmem:[%s1338 + $0xbc] sm:$0x1]
        %v1451 = vsel %vm825, %v1289, %v1450
        %1452 = vst [vmem:[%s1338 + $0xbc] sm:$0x1] %v1451
        %v1453 = vld [vmem:[#allocation2] sm:$0xf]
        %v1454 = vld [vmem:[#allocation2 + $0x4] sm:$0xf]
        %v1455 = vld [vmem:[#allocation2 + $0xc] sm:$0xf]
        %v1456 = vld [vmem:[#allocation2 + $0x10] sm:$0xf]
        %v1457 = vld [vmem:[#allocation2 + $0x18] sm:$0xf]
        %v1458 = vld [vmem:[#allocation2 + $0x1c] sm:$0xf]
        %v1459 = vld [vmem:[#allocation2 + $0x24] sm:$0xf]
        %v1460 = vld [vmem:[#allocation2 + $0x28] sm:$0xf]
        %v1461 = vld [vmem:[#allocation2 + $0x30] sm:$0xf]
        %v1462 = vld [vmem:[#allocation2 + $0x34] sm:$0xf]
        %v1463 = vld [vmem:[#allocation2 + $0x3c] sm:$0xf]
        %v1464 = vld [vmem:[#allocation2 + $0x40] sm:$0xf]
        %v1465 = vld [vmem:[#allocation2 + $0x48] sm:$0xf]
        %v1466 = vld [vmem:[#allocation2 + $0x4c] sm:$0xf]
        %v1467 = vld [vmem:[#allocation2 + $0x54] sm:$0xf]
        %v1468 = vld [vmem:[#allocation2 + $0x58] sm:$0xf]
        %v1469 = vld [vmem:[#allocation2 + $0x60] sm:$0xf]
        %v1470 = vld [vmem:[#allocation2 + $0x64] sm:$0xf]
        %v1471 = vld [vmem:[#allocation2 + $0x6c] sm:$0xf]
        %v1472 = vld [vmem:[#allocation2 + $0x70] sm:$0xf]
        %v1473 = vld [vmem:[#allocation2 + $0x78] sm:$0xf]
        %v1474 = vld [vmem:[#allocation2 + $0x7c] sm:$0xf]
        %v1475 = vld [vmem:[#allocation2 + $0x84] sm:$0xf]
        %v1476 = vld [vmem:[#allocation2 + $0x88] sm:$0xf]
        %v1477 = vld [vmem:[#allocation2 + $0x90] sm:$0xf]
        %v1478 = vld [vmem:[#allocation2 + $0x94] sm:$0xf]
        %v1479 = vld [vmem:[#allocation2 + $0x9c] sm:$0xf]
        %v1480 = vld [vmem:[#allocation2 + $0xa0] sm:$0xf]
        %v1481 = vld [vmem:[#allocation2 + $0xa8] sm:$0xf]
        %v1482 = vld [vmem:[#allocation2 + $0xac] sm:$0xf]
        %v1483 = vld [vmem:[#allocation2 + $0xb4] sm:$0xf]
        %v1484 = vld [vmem:[#allocation2 + $0xb8] sm:$0xf]
        %v1485 = vld [vmem:[%s3] sm:$0xf]
        %v1486 = vld [vmem:[%s3 + $0x4] sm:$0xf]
        %v1487 = vld [vmem:[%s3 + $0x8] sm:$0xf]
        %v1488 = vld [vmem:[%s3 + $0xc] sm:$0xf]
        %v1489 = vld [vmem:[%s3 + $0x10] sm:$0xf]
        %v1490 = vld [vmem:[%s3 + $0x14] sm:$0xf]
        %v1491 = vld [vmem:[%s3 + $0x18] sm:$0xf]
        %v1492 = vld [vmem:[%s3 + $0x1c] sm:$0xf]
        %v1493 = vld [vmem:[#allocation2 + $0x8] sm:$0x1]
        %v1494 = vld [vmem:[#allocation2 + $0x14] sm:$0x1]
        %v1495 = vld [vmem:[#allocation2 + $0x20] sm:$0x1]
        %v1496 = vld [vmem:[#allocation2 + $0x2c] sm:$0x1]
        %v1497 = vld [vmem:[#allocation2 + $0x38] sm:$0x1]
        %v1498 = vld [vmem:[#allocation2 + $0x44] sm:$0x1]
        %v1499 = vld [vmem:[#allocation2 + $0x50] sm:$0x1]
        %v1500 = vld [vmem:[#allocation2 + $0x5c] sm:$0x1]
        %v1501 = vld [vmem:[#allocation2 + $0x68] sm:$0x1]
        %v1502 = vld [vmem:[#allocation2 + $0x74] sm:$0x1]
        %v1503 = vld [vmem:[#allocation2 + $0x80] sm:$0x1]
        %v1504 = vld [vmem:[#allocation2 + $0x8c] sm:$0x1]
        %v1505 = vld [vmem:[#allocation2 + $0x98] sm:$0x1]
        %v1506 = vld [vmem:[#allocation2 + $0xa4] sm:$0x1]
        %v1507 = vld [vmem:[#allocation2 + $0xb0] sm:$0x1]
        %v1508 = vld [vmem:[#allocation2 + $0xbc] sm:$0x1]
        %vm1509 = vsmask.f32 3328
        %vm1510 = vsmask.f32 7440
        %vm1511 = vmor %vm1509, %vm1510
        %v1513 = vshrl.u32 %v1453, 16
        %v1515 = vrot.slane %v1513, 4
        %v1516 = vshll.u32 %v1453, 16
        %v1518 = vrot.slane %v1516, 5
        %v1519 = vor.u32 %v1515, %v1518
        %v1520 = vrot.slane %v1519, 4
        %v1522 = vshll.u32 %v1454, 16
        %v1524 = vrot.slane %v1522, 5
        %v1525 = vsel %vm1511, %v1520, %v1524
        %v1526 = vshrl.u32 %v1454, 16
        %v1528 = vrot.slane %v1526, 4
        %v1529 = vor.u32 %v1528, %v1524
        %v1530 = vrot.slane %v1529, 4
        %v1532 = vshll.u32 %v1493, 16
        %v1534 = vrot.slane %v1532, 5
        %v1535 = vsel %vm1511, %v1530, %v1534
        %v1537 = vshrl.u32 %v1455, 16
        %v1539 = vrot.slane %v1537, 4
        %v1540 = vshll.u32 %v1455, 16
        %v1542 = vrot.slane %v1540, 5
        %v1543 = vor.u32 %v1539, %v1542
        %v1544 = vrot.slane %v1543, 4
        %v1546 = vshll.u32 %v1456, 16
        %v1548 = vrot.slane %v1546, 5
        %v1549 = vsel %vm1511, %v1544, %v1548
        %v1550 = vshrl.u32 %v1456, 16
        %v1552 = vrot.slane %v1550, 4
        %v1553 = vor.u32 %v1552, %v1548
        %v1554 = vrot.slane %v1553, 4
        %v1556 = vshll.u32 %v1494, 16
        %v1558 = vrot.slane %v1556, 5
        %v1559 = vsel %vm1511, %v1554, %v1558
        %v1561 = vshrl.u32 %v1457, 16
        %v1563 = vrot.slane %v1561, 4
        %v1564 = vshll.u32 %v1457, 16
        %v1566 = vrot.slane %v1564, 5
        %v1567 = vor.u32 %v1563, %v1566
        %v1568 = vrot.slane %v1567, 4
        %v1570 = vshll.u32 %v1458, 16
        %v1572 = vrot.slane %v1570, 5
        %v1573 = vsel %vm1511, %v1568, %v1572
        %v1574 = vshrl.u32 %v1458, 16
        %v1576 = vrot.slane %v1574, 4
        %v1577 = vor.u32 %v1576, %v1572
        %v1578 = vrot.slane %v1577, 4
        %v1580 = vshll.u32 %v1495, 16
        %v1582 = vrot.slane %v1580, 5
        %v1583 = vsel %vm1511, %v1578, %v1582
        %v1585 = vshrl.u32 %v1459, 16
        %v1587 = vrot.slane %v1585, 4
        %v1588 = vshll.u32 %v1459, 16
        %v1590 = vrot.slane %v1588, 5
        %v1591 = vor.u32 %v1587, %v1590
        %v1592 = vrot.slane %v1591, 4
        %v1594 = vshll.u32 %v1460, 16
        %v1596 = vrot.slane %v1594, 5
        %v1597 = vsel %vm1511, %v1592, %v1596
        %v1598 = vshrl.u32 %v1460, 16
        %v1600 = vrot.slane %v1598, 4
        %v1601 = vor.u32 %v1600, %v1596
        %v1602 = vrot.slane %v1601, 4
        %v1604 = vshll.u32 %v1496, 16
        %v1606 = vrot.slane %v1604, 5
        %v1607 = vsel %vm1511, %v1602, %v1606
        %v1609 = vshrl.u32 %v1461, 16
        %v1611 = vrot.slane %v1609, 4
        %v1612 = vshll.u32 %v1461, 16
        %v1614 = vrot.slane %v1612, 5
        %v1615 = vor.u32 %v1611, %v1614
        %v1616 = vrot.slane %v1615, 4
        %v1618 = vshll.u32 %v1462, 16
        %v1620 = vrot.slane %v1618, 5
        %v1621 = vsel %vm1511, %v1616, %v1620
        %v1622 = vshrl.u32 %v1462, 16
        %v1624 = vrot.slane %v1622, 4
        %v1625 = vor.u32 %v1624, %v1620
        %v1626 = vrot.slane %v1625, 4
        %v1628 = vshll.u32 %v1497, 16
        %v1630 = vrot.slane %v1628, 5
        %v1631 = vsel %vm1511, %v1626, %v1630
        %v1633 = vshrl.u32 %v1463, 16
        %v1635 = vrot.slane %v1633, 4
        %v1636 = vshll.u32 %v1463, 16
        %v1638 = vrot.slane %v1636, 5
        %v1639 = vor.u32 %v1635, %v1638
        %v1640 = vrot.slane %v1639, 4
        %v1642 = vshll.u32 %v1464, 16
        %v1644 = vrot.slane %v1642, 5
        %v1645 = vsel %vm1511, %v1640, %v1644
        %v1646 = vshrl.u32 %v1464, 16
        %v1648 = vrot.slane %v1646, 4
        %v1649 = vor.u32 %v1648, %v1644
        %v1650 = vrot.slane %v1649, 4
        %v1652 = vshll.u32 %v1498, 16
        %v1654 = vrot.slane %v1652, 5
        %v1655 = vsel %vm1511, %v1650, %v1654
        %v1657 = vshrl.u32 %v1465, 16
        %v1659 = vrot.slane %v1657, 4
        %v1660 = vshll.u32 %v1465, 16
        %v1662 = vrot.slane %v1660, 5
        %v1663 = vor.u32 %v1659, %v1662
        %v1664 = vrot.slane %v1663, 4
        %v1666 = vshll.u32 %v1466, 16
        %v1668 = vrot.slane %v1666, 5
        %v1669 = vsel %vm1511, %v1664, %v1668
        %v1670 = vshrl.u32 %v1466, 16
        %v1672 = vrot.slane %v1670, 4
        %v1673 = vor.u32 %v1672, %v1668
        %v1674 = vrot.slane %v1673, 4
        %v1676 = vshll.u32 %v1499, 16
        %v1678 = vrot.slane %v1676, 5
        %v1679 = vsel %vm1511, %v1674, %v1678
        %v1681 = vshrl.u32 %v1467, 16
        %v1683 = vrot.slane %v1681, 4
        %v1684 = vshll.u32 %v1467, 16
        %v1686 = vrot.slane %v1684, 5
        %v1687 = vor.u32 %v1683, %v1686
        %v1688 = vrot.slane %v1687, 4
        %v1690 = vshll.u32 %v1468, 16
        %v1692 = vrot.slane %v1690, 5
        %v1693 = vsel %vm1511, %v1688, %v1692
        %v1694 = vshrl.u32 %v1468, 16
        %v1696 = vrot.slane %v1694, 4
        %v1697 = vor.u32 %v1696, %v1692
        %v1698 = vrot.slane %v1697, 4
        %v1700 = vshll.u32 %v1500, 16
        %v1702 = vrot.slane %v1700, 5
        %v1703 = vsel %vm1511, %v1698, %v1702
        %v1705 = vshrl.u32 %v1469, 16
        %v1707 = vrot.slane %v1705, 4
        %v1708 = vshll.u32 %v1469, 16
        %v1710 = vrot.slane %v1708, 5
        %v1711 = vor.u32 %v1707, %v1710
        %v1712 = vrot.slane %v1711, 4
        %v1714 = vshll.u32 %v1470, 16
        %v1716 = vrot.slane %v1714, 5
        %v1717 = vsel %vm1511, %v1712, %v1716
        %v1718 = vshrl.u32 %v1470, 16
        %v1720 = vrot.slane %v1718, 4
        %v1721 = vor.u32 %v1720, %v1716
        %v1722 = vrot.slane %v1721, 4
        %v1724 = vshll.u32 %v1501, 16
        %v1726 = vrot.slane %v1724, 5
        %v1727 = vsel %vm1511, %v1722, %v1726
        %v1729 = vshrl.u32 %v1471, 16
        %v1731 = vrot.slane %v1729, 4
        %v1732 = vshll.u32 %v1471, 16
        %v1734 = vrot.slane %v1732, 5
        %v1735 = vor.u32 %v1731, %v1734
        %v1736 = vrot.slane %v1735, 4
        %v1738 = vshll.u32 %v1472, 16
        %v1740 = vrot.slane %v1738, 5
        %v1741 = vsel %vm1511, %v1736, %v1740
        %v1742 = vshrl.u32 %v1472, 16
        %v1744 = vrot.slane %v1742, 4
        %v1745 = vor.u32 %v1744, %v1740
        %v1746 = vrot.slane %v1745, 4
        %v1748 = vshll.u32 %v1502, 16
        %v1750 = vrot.slane %v1748, 5
        %v1751 = vsel %vm1511, %v1746, %v1750
        %v1753 = vshrl.u32 %v1473, 16
        %v1755 = vrot.slane %v1753, 4
        %v1756 = vshll.u32 %v1473, 16
        %v1758 = vrot.slane %v1756, 5
        %v1759 = vor.u32 %v1755, %v1758
        %v1760 = vrot.slane %v1759, 4
        %v1762 = vshll.u32 %v1474, 16
        %v1764 = vrot.slane %v1762, 5
        %v1765 = vsel %vm1511, %v1760, %v1764
        %v1766 = vshrl.u32 %v1474, 16
        %v1768 = vrot.slane %v1766, 4
        %v1769 = vor.u32 %v1768, %v1764
        %v1770 = vrot.slane %v1769, 4
        %v1772 = vshll.u32 %v1503, 16
        %v1774 = vrot.slane %v1772, 5
        %v1775 = vsel %vm1511, %v1770, %v1774
        %v1777 = vshrl.u32 %v1475, 16
        %v1779 = vrot.slane %v1777, 4
        %v1780 = vshll.u32 %v1475, 16
        %v1782 = vrot.slane %v1780, 5
        %v1783 = vor.u32 %v1779, %v1782
        %v1784 = vrot.slane %v1783, 4
        %v1786 = vshll.u32 %v1476, 16
        %v1788 = vrot.slane %v1786, 5
        %v1789 = vsel %vm1511, %v1784, %v1788
        %v1790 = vshrl.u32 %v1476, 16
        %v1792 = vrot.slane %v1790, 4
        %v1793 = vor.u32 %v1792, %v1788
        %v1794 = vrot.slane %v1793, 4
        %v1796 = vshll.u32 %v1504, 16
        %v1798 = vrot.slane %v1796, 5
        %v1799 = vsel %vm1511, %v1794, %v1798
        %v1801 = vshrl.u32 %v1477, 16
        %v1803 = vrot.slane %v1801, 4
        %v1804 = vshll.u32 %v1477, 16
        %v1806 = vrot.slane %v1804, 5
        %v1807 = vor.u32 %v1803, %v1806
        %v1808 = vrot.slane %v1807, 4
        %v1810 = vshll.u32 %v1478, 16
        %v1812 = vrot.slane %v1810, 5
        %v1813 = vsel %vm1511, %v1808, %v1812
        %v1814 = vshrl.u32 %v1478, 16
        %v1816 = vrot.slane %v1814, 4
        %v1817 = vor.u32 %v1816, %v1812
        %v1818 = vrot.slane %v1817, 4
        %v1820 = vshll.u32 %v1505, 16
        %v1822 = vrot.slane %v1820, 5
        %v1823 = vsel %vm1511, %v1818, %v1822
        %v1825 = vshrl.u32 %v1479, 16
        %v1827 = vrot.slane %v1825, 4
        %v1828 = vshll.u32 %v1479, 16
        %v1830 = vrot.slane %v1828, 5
        %v1831 = vor.u32 %v1827, %v1830
        %v1832 = vrot.slane %v1831, 4
        %v1834 = vshll.u32 %v1480, 16
        %v1836 = vrot.slane %v1834, 5
        %v1837 = vsel %vm1511, %v1832, %v1836
        %v1838 = vshrl.u32 %v1480, 16
        %v1840 = vrot.slane %v1838, 4
        %v1841 = vor.u32 %v1840, %v1836
        %v1842 = vrot.slane %v1841, 4
        %v1844 = vshll.u32 %v1506, 16
        %v1846 = vrot.slane %v1844, 5
        %v1847 = vsel %vm1511, %v1842, %v1846
        %v1849 = vshrl.u32 %v1481, 16
        %v1851 = vrot.slane %v1849, 4
        %v1852 = vshll.u32 %v1481, 16
        %v1854 = vrot.slane %v1852, 5
        %v1855 = vor.u32 %v1851, %v1854
        %v1856 = vrot.slane %v1855, 4
        %v1858 = vshll.u32 %v1482, 16
        %v1860 = vrot.slane %v1858, 5
        %v1861 = vsel %vm1511, %v1856, %v1860
        %v1862 = vshrl.u32 %v1482, 16
        %v1864 = vrot.slane %v1862, 4
        %v1865 = vor.u32 %v1864, %v1860
        %v1866 = vrot.slane %v1865, 4
        %v1868 = vshll.u32 %v1507, 16
        %v1870 = vrot.slane %v1868, 5
        %v1871 = vsel %vm1511, %v1866, %v1870
        %v1873 = vshrl.u32 %v1483, 16
        %v1875 = vrot.slane %v1873, 4
        %v1876 = vshll.u32 %v1483, 16
        %v1878 = vrot.slane %v1876, 5
        %v1879 = vor.u32 %v1875, %v1878
        %v1880 = vrot.slane %v1879, 4
        %v1882 = vshll.u32 %v1484, 16
        %v1884 = vrot.slane %v1882, 5
        %v1885 = vsel %vm1511, %v1880, %v1884
        %v1886 = vshrl.u32 %v1484, 16
        %v1888 = vrot.slane %v1886, 4
        %v1889 = vor.u32 %v1888, %v1884
        %v1890 = vrot.slane %v1889, 4
        %v1892 = vshll.u32 %v1508, 16
        %v1894 = vrot.slane %v1892, 5
        %v1895 = vsel %vm1511, %v1890, %v1894
        %v1896 = vld [vmem:[%s3 + $0x20] sm:$0xf]
        %v1897 = vld [vmem:[%s3 + $0x24] sm:$0xf]
        %v1898 = vld [vmem:[%s3 + $0x28] sm:$0xf]
        %v1899 = vld [vmem:[%s3 + $0x2c] sm:$0xf]
        %v1900 = vld [vmem:[%s3 + $0x30] sm:$0xf]
        %v1901 = vld [vmem:[%s3 + $0x34] sm:$0xf]
        %v1902 = vld [vmem:[%s3 + $0x38] sm:$0xf]
        %v1903 = vld [vmem:[%s3 + $0x3c] sm:$0xf]
        %v1904 = vunpack.c.l.b16 %v1525
        %v1905 = vunpack.c.l.b16 %v1535
        %v1906 = vunpack.c.l.b16 %v1549
        %v1907 = vunpack.c.l.b16 %v1559
        %v1908 = vunpack.c.l.b16 %v1573
        %v1909 = vunpack.c.l.b16 %v1583
        %v1910 = vunpack.c.l.b16 %v1597
        %v1911 = vunpack.c.l.b16 %v1607
        %v1912 = vunpack.c.l.b16 %v1621
        %v1913 = vunpack.c.l.b16 %v1631
        %v1914 = vunpack.c.l.b16 %v1645
        %v1915 = vunpack.c.l.b16 %v1655
        %v1916 = vunpack.c.l.b16 %v1669
        %v1917 = vunpack.c.l.b16 %v1679
        %v1918 = vunpack.c.l.b16 %v1693
        %v1919 = vunpack.c.l.b16 %v1703
        %v1920 = vunpack.c.l.b16 %v1717
        %v1921 = vunpack.c.l.b16 %v1727
        %v1922 = vunpack.c.l.b16 %v1741
        %v1923 = vunpack.c.l.b16 %v1751
        %v1924 = vunpack.c.l.b16 %v1765
        %v1925 = vunpack.c.l.b16 %v1775
        %v1926 = vunpack.c.l.b16 %v1789
        %v1927 = vunpack.c.l.b16 %v1799
        %v1928 = vunpack.c.l.b16 %v1813
        %v1929 = vunpack.c.l.b16 %v1823
        %v1930 = vunpack.c.l.b16 %v1837
        %v1931 = vunpack.c.l.b16 %v1847
        %v1932 = vunpack.c.l.b16 %v1861
        %v1933 = vunpack.c.l.b16 %v1871
        %v1934 = vunpack.c.l.b16 %v1885
        %v1935 = vunpack.c.l.b16 %v1895
        %v1936 = vpack.c.b16 %v1905, %v1904
        %v1937 = vpack.c.b16 %v1907, %v1906
        %v1938 = vpack.c.b16 %v1909, %v1908
        %v1939 = vpack.c.b16 %v1911, %v1910
        %v1940 = vpack.c.b16 %v1913, %v1912
        %v1941 = vpack.c.b16 %v1915, %v1914
        %v1942 = vpack.c.b16 %v1917, %v1916
        %v1943 = vpack.c.b16 %v1919, %v1918
        %v1944 = vpack.c.b16 %v1921, %v1920
        %v1945 = vpack.c.b16 %v1923, %v1922
        %v1946 = vpack.c.b16 %v1925, %v1924
        %v1947 = vpack.c.b16 %v1927, %v1926
        %v1948 = vpack.c.b16 %v1929, %v1928
        %v1949 = vpack.c.b16 %v1931, %v1930
        %v1950 = vpack.c.b16 %v1933, %v1932
        %v1951 = vpack.c.b16 %v1935, %v1934
        %v1960 = vunpack.c.l.b16 %v1896
        %v1961 = vunpack.c.l.b16 %v1897
        %v1962 = vunpack.c.l.b16 %v1898
        %v1963 = vunpack.c.l.b16 %v1899
        %v1964 = vunpack.c.l.b16 %v1900
        %v1965 = vunpack.c.l.b16 %v1901
        %v1966 = vunpack.c.l.b16 %v1902
        %v1967 = vunpack.c.l.b16 %v1903
        %v1968 = vpack.c.b16 %v1961, %v1960
        %v1969 = vpack.c.b16 %v1963, %v1962
        %v1970 = vpack.c.b16 %v1965, %v1964
        %v1971 = vpack.c.b16 %v1967, %v1966
        %vm1976 = vcmask 523264
        %v1978 = vsel %vm1976, %v1936, 0
        %v1981 = vsel %vm1976, %v1937, 0
        %v1984 = vsel %vm1976, %v1938, 0
        %v1987 = vsel %vm1976, %v1939, 0
        %v1990 = vsel %vm1976, %v1940, 0
        %v1993 = vsel %vm1976, %v1941, 0
        %v1996 = vsel %vm1976, %v1942, 0
        %v1999 = vsel %vm1976, %v1943, 0
        %v2002 = vsel %vm1976, %v1944, 0
        %v2005 = vsel %vm1976, %v1945, 0
        %v2008 = vsel %vm1976, %v1946, 0
        %v2011 = vsel %vm1976, %v1947, 0
        %v2014 = vsel %vm1976, %v1948, 0
        %v2017 = vsel %vm1976, %v1949, 0
        %v2020 = vsel %vm1976, %v1950, 0
        %v2023 = vsel %vm1976, %v1951, 0
        %2025 = vmatprep.subr.bf16.mxu0 0
        %2026 = vmatpush1.bf16.msra.mxu0 0
        %2027 = vmatprep.subr.bf16.mxu0 0
        %2028 = vmatpush1.bf16.msra.mxu0 0
        %2029 = vmatprep.subr.bf16.mxu0 0
        %2030 = vmatpush1.bf16.msra.mxu0 0
        %2031 = vmatprep.subr.bf16.mxu0 0
        %2032 = vmatpush1.bf16.msra.mxu0 0
        %2033 = vmatprep.subr.bf16.mxu0 0
        %2034 = vmatpush1.bf16.msra.mxu0 %v1971
        %2035 = vmatprep.subr.bf16.mxu0 0
        %2036 = vmatpush1.bf16.msra.mxu0 %v1970
        %2037 = vmatprep.subr.bf16.mxu0 0
        %2038 = vmatpush1.bf16.msra.mxu0 %v1969
        %2039 = vmatprep.subr.bf16.mxu0 0
        %2040 = vmatpush1.bf16.msra.mxu0 %v1968
        %2041 = vmatprep.subr.bf16.mxu0 0
        %2042 = vmatpush2.bf16.msra.mxu0 0
        %2043 = vmatprep.subr.bf16.mxu0 0
        %2044 = vmatpush2.bf16.msra.mxu0 0
        %2045 = vmatprep.subr.bf16.mxu0 0
        %2046 = vmatpush2.bf16.msra.mxu0 0
        %2047 = vmatprep.subr.bf16.mxu0 0
        %2048 = vmatpush2.bf16.msra.mxu0 0
        %2049 = vmatprep.subr.bf16.mxu0 0
        %2050 = vmatpush2.bf16.msra.mxu0 0
        %2051 = vmatprep.subr.bf16.mxu0 0
        %2052 = vmatpush2.bf16.msra.mxu0 0
        %2053 = vmatprep.subr.bf16.mxu0 0
        %2054 = vmatpush2.bf16.msra.mxu0 0
        %2055 = vmatprep.subr.bf16.mxu0 0
        %2056 = vmatpush2.bf16.msra.mxu0 0
        %2057 = vmatprep.mubr.bf16.mxu0 0
        %2058 = vmatmul.mubr.bf16.gmra.mxu0 %v1978
        %v2059 = vpop.f32.mrf.mxu0
        %v2060 = vadd.f32 0.0, %v2059
        %v2061 = vpop.f32.mrf.mxu0
        %v2062 = vpop.f32.mrf.mxu0
        %v2063 = vadd.f32 0.0, %v2062
        %v2064 = vpop.f32.mrf.mxu0
        %2065 = vmatprep.mubr.bf16.mxu0 0
        %2066 = vmatmul.mubr.bf16.gmra.mxu0 %v1981
        %v2067 = vpop.f32.mrf.mxu0
        %v2068 = vadd.f32 0.0, %v2067
        %v2069 = vpop.f32.mrf.mxu0
        %v2070 = vpop.f32.mrf.mxu0
        %v2071 = vadd.f32 0.0, %v2070
        %v2072 = vpop.f32.mrf.mxu0
        %2073 = vmatprep.mubr.bf16.mxu0 0
        %2074 = vmatmul.mubr.bf16.gmra.mxu0 %v1984
        %v2075 = vpop.f32.mrf.mxu0
        %v2076 = vadd.f32 0.0, %v2075
        %v2077 = vpop.f32.mrf.mxu0
        %v2078 = vpop.f32.mrf.mxu0
        %v2079 = vadd.f32 0.0, %v2078
        %v2080 = vpop.f32.mrf.mxu0
        %2081 = vmatprep.mubr.bf16.mxu0 0
        %2082 = vmatmul.mubr.bf16.gmra.mxu0 %v1987
        %v2083 = vpop.f32.mrf.mxu0
        %v2084 = vadd.f32 0.0, %v2083
        %v2085 = vpop.f32.mrf.mxu0
        %v2086 = vpop.f32.mrf.mxu0
        %v2087 = vadd.f32 0.0, %v2086
        %v2088 = vpop.f32.mrf.mxu0
        %2089 = vmatprep.mubr.bf16.mxu0 0
        %2090 = vmatmul.mubr.bf16.gmra.mxu0 %v1990
        %v2091 = vpop.f32.mrf.mxu0
        %v2092 = vadd.f32 0.0, %v2091
        %v2093 = vpop.f32.mrf.mxu0
        %v2094 = vpop.f32.mrf.mxu0
        %v2095 = vadd.f32 0.0, %v2094
        %v2096 = vpop.f32.mrf.mxu0
        %2097 = vmatprep.mubr.bf16.mxu0 0
        %2098 = vmatmul.mubr.bf16.gmra.mxu0 %v1993
        %v2099 = vpop.f32.mrf.mxu0
        %v2100 = vadd.f32 0.0, %v2099
        %v2101 = vpop.f32.mrf.mxu0
        %v2102 = vpop.f32.mrf.mxu0
        %v2103 = vadd.f32 0.0, %v2102
        %v2104 = vpop.f32.mrf.mxu0
        %2105 = vmatprep.mubr.bf16.mxu0 0
        %2106 = vmatmul.mubr.bf16.gmra.mxu0 %v1996
        %v2107 = vpop.f32.mrf.mxu0
        %v2108 = vadd.f32 0.0, %v2107
        %v2109 = vpop.f32.mrf.mxu0
        %v2110 = vpop.f32.mrf.mxu0
        %v2111 = vadd.f32 0.0, %v2110
        %v2112 = vpop.f32.mrf.mxu0
        %2113 = vmatprep.mubr.bf16.mxu0 0
        %2114 = vmatmul.mubr.bf16.gmra.mxu0 %v1999
        %v2115 = vpop.f32.mrf.mxu0
        %v2116 = vadd.f32 0.0, %v2115
        %v2117 = vpop.f32.mrf.mxu0
        %v2118 = vpop.f32.mrf.mxu0
        %v2119 = vadd.f32 0.0, %v2118
        %v2120 = vpop.f32.mrf.mxu0
        %2121 = vmatprep.mubr.bf16.mxu0 0
        %2122 = vmatmul.mubr.bf16.gmra.mxu0 %v2002
        %v2123 = vpop.f32.mrf.mxu0
        %v2124 = vadd.f32 0.0, %v2123
        %v2125 = vpop.f32.mrf.mxu0
        %v2126 = vpop.f32.mrf.mxu0
        %v2127 = vadd.f32 0.0, %v2126
        %v2128 = vpop.f32.mrf.mxu0
        %2129 = vmatprep.mubr.bf16.mxu0 0
        %2130 = vmatmul.mubr.bf16.gmra.mxu0 %v2005
        %v2131 = vpop.f32.mrf.mxu0
        %v2132 = vadd.f32 0.0, %v2131
        %v2133 = vpop.f32.mrf.mxu0
        %v2134 = vpop.f32.mrf.mxu0
        %v2135 = vadd.f32 0.0, %v2134
        %v2136 = vpop.f32.mrf.mxu0
        %2137 = vmatprep.mubr.bf16.mxu0 0
        %2138 = vmatmul.mubr.bf16.gmra.mxu0 %v2008
        %v2139 = vpop.f32.mrf.mxu0
        %v2140 = vadd.f32 0.0, %v2139
        %v2141 = vpop.f32.mrf.mxu0
        %v2142 = vpop.f32.mrf.mxu0
        %v2143 = vadd.f32 0.0, %v2142
        %v2144 = vpop.f32.mrf.mxu0
        %2145 = vmatprep.mubr.bf16.mxu0 0
        %2146 = vmatmul.mubr.bf16.gmra.mxu0 %v2011
        %v2147 = vpop.f32.mrf.mxu0
        %v2148 = vadd.f32 0.0, %v2147
        %v2149 = vpop.f32.mrf.mxu0
        %v2150 = vpop.f32.mrf.mxu0
        %v2151 = vadd.f32 0.0, %v2150
        %v2152 = vpop.f32.mrf.mxu0
        %2153 = vmatprep.mubr.bf16.mxu0 0
        %2154 = vmatmul.mubr.bf16.gmra.mxu0 %v2014
        %v2155 = vpop.f32.mrf.mxu0
        %v2156 = vadd.f32 0.0, %v2155
        %v2157 = vpop.f32.mrf.mxu0
        %v2158 = vpop.f32.mrf.mxu0
        %v2159 = vadd.f32 0.0, %v2158
        %v2160 = vpop.f32.mrf.mxu0
        %2161 = vmatprep.mubr.bf16.mxu0 0
        %2162 = vmatmul.mubr.bf16.gmra.mxu0 %v2017
        %v2163 = vpop.f32.mrf.mxu0
        %v2164 = vadd.f32 0.0, %v2163
        %v2165 = vpop.f32.mrf.mxu0
        %v2166 = vpop.f32.mrf.mxu0
        %v2167 = vadd.f32 0.0, %v2166
        %v2168 = vpop.f32.mrf.mxu0
        %2169 = vmatprep.mubr.bf16.mxu0 0
        %2170 = vmatmul.mubr.bf16.gmra.mxu0 %v2020
        %v2171 = vpop.f32.mrf.mxu0
        %v2172 = vadd.f32 0.0, %v2171
        %v2173 = vpop.f32.mrf.mxu0
        %v2174 = vpop.f32.mrf.mxu0
        %v2175 = vadd.f32 0.0, %v2174
        %v2176 = vpop.f32.mrf.mxu0
        %2177 = vmatprep.mubr.bf16.mxu0 0
        %2178 = vmatmul.mubr.bf16.gmra.mxu0 %v2023
        %v2179 = vpop.f32.mrf.mxu0
        %v2180 = vadd.f32 0.0, %v2179
        %v2181 = vpop.f32.mrf.mxu0
        %v2182 = vpop.f32.mrf.mxu0
        %v2183 = vadd.f32 0.0, %v2182
        %v2184 = vpop.f32.mrf.mxu0
        %2185 = vdwg.mxu0
        %v2218 = vunpack.c.l.b16 %v1453
        %v2219 = vunpack.c.l.b16 %v1454
        %v2220 = vunpack.c.l.b16 %v1455
        %v2221 = vunpack.c.l.b16 %v1456
        %v2222 = vunpack.c.l.b16 %v1457
        %v2223 = vunpack.c.l.b16 %v1458
        %v2224 = vunpack.c.l.b16 %v1459
        %v2225 = vunpack.c.l.b16 %v1460
        %v2226 = vunpack.c.l.b16 %v1461
        %v2227 = vunpack.c.l.b16 %v1462
        %v2228 = vunpack.c.l.b16 %v1463
        %v2229 = vunpack.c.l.b16 %v1464
        %v2230 = vunpack.c.l.b16 %v1465
        %v2231 = vunpack.c.l.b16 %v1466
        %v2232 = vunpack.c.l.b16 %v1467
        %v2233 = vunpack.c.l.b16 %v1468
        %v2234 = vunpack.c.l.b16 %v1469
        %v2235 = vunpack.c.l.b16 %v1470
        %v2236 = vunpack.c.l.b16 %v1471
        %v2237 = vunpack.c.l.b16 %v1472
        %v2238 = vunpack.c.l.b16 %v1473
        %v2239 = vunpack.c.l.b16 %v1474
        %v2240 = vunpack.c.l.b16 %v1475
        %v2241 = vunpack.c.l.b16 %v1476
        %v2242 = vunpack.c.l.b16 %v1477
        %v2243 = vunpack.c.l.b16 %v1478
        %v2244 = vunpack.c.l.b16 %v1479
        %v2245 = vunpack.c.l.b16 %v1480
        %v2246 = vunpack.c.l.b16 %v1481
        %v2247 = vunpack.c.l.b16 %v1482
        %v2248 = vunpack.c.l.b16 %v1483
        %v2249 = vunpack.c.l.b16 %v1484
        %v2250 = vpack.c.b16 %v2219, %v2218
        %v2251 = vpack.c.b16 %v2221, %v2220
        %v2252 = vpack.c.b16 %v2223, %v2222
        %v2253 = vpack.c.b16 %v2225, %v2224
        %v2254 = vpack.c.b16 %v2227, %v2226
        %v2255 = vpack.c.b16 %v2229, %v2228
        %v2256 = vpack.c.b16 %v2231, %v2230
        %v2257 = vpack.c.b16 %v2233, %v2232
        %v2258 = vpack.c.b16 %v2235, %v2234
        %v2259 = vpack.c.b16 %v2237, %v2236
        %v2260 = vpack.c.b16 %v2239, %v2238
        %v2261 = vpack.c.b16 %v2241, %v2240
        %v2262 = vpack.c.b16 %v2243, %v2242
        %v2263 = vpack.c.b16 %v2245, %v2244
        %v2264 = vpack.c.b16 %v2247, %v2246
        %v2265 = vpack.c.b16 %v2249, %v2248
        %v2274 = vunpack.c.l.b16 %v1485
        %v2275 = vunpack.c.l.b16 %v1486
        %v2276 = vunpack.c.l.b16 %v1487
        %v2277 = vunpack.c.l.b16 %v1488
        %v2278 = vunpack.c.l.b16 %v1489
        %v2279 = vunpack.c.l.b16 %v1490
        %v2280 = vunpack.c.l.b16 %v1491
        %v2281 = vunpack.c.l.b16 %v1492
        %v2282 = vpack.c.b16 %v2275, %v2274
        %v2283 = vpack.c.b16 %v2277, %v2276
        %v2284 = vpack.c.b16 %v2279, %v2278
        %v2285 = vpack.c.b16 %v2281, %v2280
        %v2291 = vsel %vm1976, %v2250, 0
        %v2294 = vsel %vm1976, %v2251, 0
        %v2297 = vsel %vm1976, %v2252, 0
        %v2300 = vsel %vm1976, %v2253, 0
        %v2303 = vsel %vm1976, %v2254, 0
        %v2306 = vsel %vm1976, %v2255, 0
        %v2309 = vsel %vm1976, %v2256, 0
        %v2312 = vsel %vm1976, %v2257, 0
        %v2315 = vsel %vm1976, %v2258, 0
        %v2318 = vsel %vm1976, %v2259, 0
        %v2321 = vsel %vm1976, %v2260, 0
        %v2324 = vsel %vm1976, %v2261, 0
        %v2327 = vsel %vm1976, %v2262, 0
        %v2330 = vsel %vm1976, %v2263, 0
        %v2333 = vsel %vm1976, %v2264, 0
        %v2336 = vsel %vm1976, %v2265, 0
        %2338 = vmatprep.subr.bf16.mxu0 0
        %2339 = vmatpush1.bf16.msra.mxu0 0
        %2340 = vmatprep.subr.bf16.mxu0 0
        %2341 = vmatpush1.bf16.msra.mxu0 0
        %2342 = vmatprep.subr.bf16.mxu0 0
        %2343 = vmatpush1.bf16.msra.mxu0 0
        %2344 = vmatprep.subr.bf16.mxu0 0
        %2345 = vmatpush1.bf16.msra.mxu0 0
        %2346 = vmatprep.subr.bf16.mxu0 0
        %2347 = vmatpush1.bf16.msra.mxu0 %v2285
        %2348 = vmatprep.subr.bf16.mxu0 0
        %2349 = vmatpush1.bf16.msra.mxu0 %v2284
        %2350 = vmatprep.subr.bf16.mxu0 0
        %2351 = vmatpush1.bf16.msra.mxu0 %v2283
        %2352 = vmatprep.subr.bf16.mxu0 0
        %2353 = vmatpush1.bf16.msra.mxu0 %v2282
        %2354 = vmatprep.subr.bf16.mxu0 0
        %2355 = vmatpush2.bf16.msra.mxu0 0
        %2356 = vmatprep.subr.bf16.mxu0 0
        %2357 = vmatpush2.bf16.msra.mxu0 0
        %2358 = vmatprep.subr.bf16.mxu0 0
        %2359 = vmatpush2.bf16.msra.mxu0 0
        %2360 = vmatprep.subr.bf16.mxu0 0
        %2361 = vmatpush2.bf16.msra.mxu0 0
        %2362 = vmatprep.subr.bf16.mxu0 0
        %2363 = vmatpush2.bf16.msra.mxu0 0
        %2364 = vmatprep.subr.bf16.mxu0 0
        %2365 = vmatpush2.bf16.msra.mxu0 0
        %2366 = vmatprep.subr.bf16.mxu0 0
        %2367 = vmatpush2.bf16.msra.mxu0 0
        %2368 = vmatprep.subr.bf16.mxu0 0
        %2369 = vmatpush2.bf16.msra.mxu0 0
        %2370 = vmatprep.mubr.bf16.mxu0 0
        %2371 = vmatmul.mubr.bf16.gmra.mxu0 %v2291
        %v2372 = vpop.f32.mrf.mxu0
        %v2373 = vadd.f32 %v2060, %v2372
        %v2374 = vpop.f32.mrf.mxu0
        %v2375 = vpop.f32.mrf.mxu0
        %v2376 = vadd.f32 %v2063, %v2375
        %v2377 = vpop.f32.mrf.mxu0
        %2378 = vmatprep.mubr.bf16.mxu0 0
        %2379 = vmatmul.mubr.bf16.gmra.mxu0 %v2294
        %v2380 = vpop.f32.mrf.mxu0
        %v2381 = vadd.f32 %v2068, %v2380
        %v2382 = vpop.f32.mrf.mxu0
        %v2383 = vpop.f32.mrf.mxu0
        %v2384 = vadd.f32 %v2071, %v2383
        %v2385 = vpop.f32.mrf.mxu0
        %2386 = vmatprep.mubr.bf16.mxu0 0
        %2387 = vmatmul.mubr.bf16.gmra.mxu0 %v2297
        %v2388 = vpop.f32.mrf.mxu0
        %v2389 = vadd.f32 %v2076, %v2388
        %v2390 = vpop.f32.mrf.mxu0
        %v2391 = vpop.f32.mrf.mxu0
        %v2392 = vadd.f32 %v2079, %v2391
        %v2393 = vpop.f32.mrf.mxu0
        %2394 = vmatprep.mubr.bf16.mxu0 0
        %2395 = vmatmul.mubr.bf16.gmra.mxu0 %v2300
        %v2396 = vpop.f32.mrf.mxu0
        %v2397 = vadd.f32 %v2084, %v2396
        %v2398 = vpop.f32.mrf.mxu0
        %v2399 = vpop.f32.mrf.mxu0
        %v2400 = vadd.f32 %v2087, %v2399
        %v2401 = vpop.f32.mrf.mxu0
        %2402 = vmatprep.mubr.bf16.mxu0 0
        %2403 = vmatmul.mubr.bf16.gmra.mxu0 %v2303
        %v2404 = vpop.f32.mrf.mxu0
        %v2405 = vadd.f32 %v2092, %v2404
        %v2406 = vpop.f32.mrf.mxu0
        %v2407 = vpop.f32.mrf.mxu0
        %v2408 = vadd.f32 %v2095, %v2407
        %v2409 = vpop.f32.mrf.mxu0
        %2410 = vmatprep.mubr.bf16.mxu0 0
        %2411 = vmatmul.mubr.bf16.gmra.mxu0 %v2306
        %v2412 = vpop.f32.mrf.mxu0
        %v2413 = vadd.f32 %v2100, %v2412
        %v2414 = vpop.f32.mrf.mxu0
        %v2415 = vpop.f32.mrf.mxu0
        %v2416 = vadd.f32 %v2103, %v2415
        %v2417 = vpop.f32.mrf.mxu0
        %2418 = vmatprep.mubr.bf16.mxu0 0
        %2419 = vmatmul.mubr.bf16.gmra.mxu0 %v2309
        %v2420 = vpop.f32.mrf.mxu0
        %v2421 = vadd.f32 %v2108, %v2420
        %v2422 = vpop.f32.mrf.mxu0
        %v2423 = vpop.f32.mrf.mxu0
        %v2424 = vadd.f32 %v2111, %v2423
        %v2425 = vpop.f32.mrf.mxu0
        %2426 = vmatprep.mubr.bf16.mxu0 0
        %2427 = vmatmul.mubr.bf16.gmra.mxu0 %v2312
        %v2428 = vpop.f32.mrf.mxu0
        %v2429 = vadd.f32 %v2116, %v2428
        %v2430 = vpop.f32.mrf.mxu0
        %v2431 = vpop.f32.mrf.mxu0
        %v2432 = vadd.f32 %v2119, %v2431
        %v2433 = vpop.f32.mrf.mxu0
        %2434 = vmatprep.mubr.bf16.mxu0 0
        %2435 = vmatmul.mubr.bf16.gmra.mxu0 %v2315
        %v2436 = vpop.f32.mrf.mxu0
        %v2437 = vadd.f32 %v2124, %v2436
        %v2438 = vpop.f32.mrf.mxu0
        %v2439 = vpop.f32.mrf.mxu0
        %v2440 = vadd.f32 %v2127, %v2439
        %v2441 = vpop.f32.mrf.mxu0
        %2442 = vmatprep.mubr.bf16.mxu0 0
        %2443 = vmatmul.mubr.bf16.gmra.mxu0 %v2318
        %v2444 = vpop.f32.mrf.mxu0
        %v2445 = vadd.f32 %v2132, %v2444
        %v2446 = vpop.f32.mrf.mxu0
        %v2447 = vpop.f32.mrf.mxu0
        %v2448 = vadd.f32 %v2135, %v2447
        %v2449 = vpop.f32.mrf.mxu0
        %2450 = vmatprep.mubr.bf16.mxu0 0
        %2451 = vmatmul.mubr.bf16.gmra.mxu0 %v2321
        %v2452 = vpop.f32.mrf.mxu0
        %v2453 = vadd.f32 %v2140, %v2452
        %v2454 = vpop.f32.mrf.mxu0
        %v2455 = vpop.f32.mrf.mxu0
        %v2456 = vadd.f32 %v2143, %v2455
        %v2457 = vpop.f32.mrf.mxu0
        %2458 = vmatprep.mubr.bf16.mxu0 0
        %2459 = vmatmul.mubr.bf16.gmra.mxu0 %v2324
        %v2460 = vpop.f32.mrf.mxu0
        %v2461 = vadd.f32 %v2148, %v2460
        %v2462 = vpop.f32.mrf.mxu0
        %v2463 = vpop.f32.mrf.mxu0
        %v2464 = vadd.f32 %v2151, %v2463
        %v2465 = vpop.f32.mrf.mxu0
        %2466 = vmatprep.mubr.bf16.mxu0 0
        %2467 = vmatmul.mubr.bf16.gmra.mxu0 %v2327
        %v2468 = vpop.f32.mrf.mxu0
        %v2469 = vadd.f32 %v2156, %v2468
        %v2470 = vpop.f32.mrf.mxu0
        %v2471 = vpop.f32.mrf.mxu0
        %v2472 = vadd.f32 %v2159, %v2471
        %v2473 = vpop.f32.mrf.mxu0
        %2474 = vmatprep.mubr.bf16.mxu0 0
        %2475 = vmatmul.mubr.bf16.gmra.mxu0 %v2330
        %v2476 = vpop.f32.mrf.mxu0
        %v2477 = vadd.f32 %v2164, %v2476
        %v2478 = vpop.f32.mrf.mxu0
        %v2479 = vpop.f32.mrf.mxu0
        %v2480 = vadd.f32 %v2167, %v2479
        %v2481 = vpop.f32.mrf.mxu0
        %2482 = vmatprep.mubr.bf16.mxu0 0
        %2483 = vmatmul.mubr.bf16.gmra.mxu0 %v2333
        %v2484 = vpop.f32.mrf.mxu0
        %v2485 = vadd.f32 %v2172, %v2484
        %v2486 = vpop.f32.mrf.mxu0
        %v2487 = vpop.f32.mrf.mxu0
        %v2488 = vadd.f32 %v2175, %v2487
        %v2489 = vpop.f32.mrf.mxu0
        %2490 = vmatprep.mubr.bf16.mxu0 0
        %2491 = vmatmul.mubr.bf16.gmra.mxu0 %v2336
        %v2492 = vpop.f32.mrf.mxu0
        %v2493 = vadd.f32 %v2180, %v2492
        %v2494 = vpop.f32.mrf.mxu0
        %v2495 = vpop.f32.mrf.mxu0
        %v2496 = vadd.f32 %v2183, %v2495
        %v2497 = vpop.f32.mrf.mxu0
        %2498 = vdwg.mxu0
        %v2499 = vld [vmem:[#allocation2] sm:$0xe]
        %v2500 = vld [vmem:[#allocation2 + $0xc] sm:$0xe]
        %v2501 = vld [vmem:[#allocation2 + $0x18] sm:$0xe]
        %v2502 = vld [vmem:[#allocation2 + $0x24] sm:$0xe]
        %v2503 = vld [vmem:[#allocation2 + $0x30] sm:$0xe]
        %v2504 = vld [vmem:[#allocation2 + $0x3c] sm:$0xe]
        %v2505 = vld [vmem:[#allocation2 + $0x48] sm:$0xe]
        %v2506 = vld [vmem:[#allocation2 + $0x54] sm:$0xe]
        %v2507 = vld [vmem:[#allocation2 + $0x60] sm:$0xe]
        %v2508 = vld [vmem:[#allocation2 + $0x6c] sm:$0xe]
        %v2509 = vld [vmem:[#allocation2 + $0x78] sm:$0xe]
        %v2510 = vld [vmem:[#allocation2 + $0x84] sm:$0xe]
        %v2511 = vld [vmem:[#allocation2 + $0x90] sm:$0xe]
        %v2512 = vld [vmem:[#allocation2 + $0x9c] sm:$0xe]
        %v2513 = vld [vmem:[#allocation2 + $0xa8] sm:$0xe]
        %v2514 = vld [vmem:[#allocation2 + $0xb4] sm:$0xe]
        %vm2547 = vcmask 1042432
        %vm2548 = vcmask 1046532
        %vm2549 = vmor %vm2547, %vm2548
        %v2550 = vrot.slane %v2499, 5
        %v2551 = vrot.slane %v2550, 4
        %v2552 = vrot.slane %v1454, 5
        %v2553 = vsel %vm2549, %v2551, %v2552
        %v2554 = vrot.slane %v2552, 4
        %v2555 = vrot.slane %v1493, 5
        %v2556 = vsel %vm2549, %v2554, %v2555
        %v2557 = vrot.slane %v2500, 5
        %v2558 = vrot.slane %v2557, 4
        %v2559 = vrot.slane %v1456, 5
        %v2560 = vsel %vm2549, %v2558, %v2559
        %v2561 = vrot.slane %v2559, 4
        %v2562 = vrot.slane %v1494, 5
        %v2563 = vsel %vm2549, %v2561, %v2562
        %v2564 = vrot.slane %v2501, 5
        %v2565 = vrot.slane %v2564, 4
        %v2566 = vrot.slane %v1458, 5
        %v2567 = vsel %vm2549, %v2565, %v2566
        %v2568 = vrot.slane %v2566, 4
        %v2569 = vrot.slane %v1495, 5
        %v2570 = vsel %vm2549, %v2568, %v2569
        %v2571 = vrot.slane %v2502, 5
        %v2572 = vrot.slane %v2571, 4
        %v2573 = vrot.slane %v1460, 5
        %v2574 = vsel %vm2549, %v2572, %v2573
        %v2575 = vrot.slane %v2573, 4
        %v2576 = vrot.slane %v1496, 5
        %v2577 = vsel %vm2549, %v2575, %v2576
        %v2578 = vrot.slane %v2503, 5
        %v2579 = vrot.slane %v2578, 4
        %v2580 = vrot.slane %v1462, 5
        %v2581 = vsel %vm2549, %v2579, %v2580
        %v2582 = vrot.slane %v2580, 4
        %v2583 = vrot.slane %v1497, 5
        %v2584 = vsel %vm2549, %v2582, %v2583
        %v2585 = vrot.slane %v2504, 5
        %v2586 = vrot.slane %v2585, 4
        %v2587 = vrot.slane %v1464, 5
        %v2588 = vsel %vm2549, %v2586, %v2587
        %v2589 = vrot.slane %v2587, 4
        %v2590 = vrot.slane %v1498, 5
        %v2591 = vsel %vm2549, %v2589, %v2590
        %v2592 = vrot.slane %v2505, 5
        %v2593 = vrot.slane %v2592, 4
        %v2594 = vrot.slane %v1466, 5
        %v2595 = vsel %vm2549, %v2593, %v2594
        %v2596 = vrot.slane %v2594, 4
        %v2597 = vrot.slane %v1499, 5
        %v2598 = vsel %vm2549, %v2596, %v2597
        %v2599 = vrot.slane %v2506, 5
        %v2600 = vrot.slane %v2599, 4
        %v2601 = vrot.slane %v1468, 5
        %v2602 = vsel %vm2549, %v2600, %v2601
        %v2603 = vrot.slane %v2601, 4
        %v2604 = vrot.slane %v1500, 5
        %v2605 = vsel %vm2549, %v2603, %v2604
        %v2606 = vrot.slane %v2507, 5
        %v2607 = vrot.slane %v2606, 4
        %v2608 = vrot.slane %v1470, 5
        %v2609 = vsel %vm2549, %v2607, %v2608
        %v2610 = vrot.slane %v2608, 4
        %v2611 = vrot.slane %v1501, 5
        %v2612 = vsel %vm2549, %v2610, %v2611
        %v2613 = vrot.slane %v2508, 5
        %v2614 = vrot.slane %v2613, 4
        %v2615 = vrot.slane %v1472, 5
        %v2616 = vsel %vm2549, %v2614, %v2615
        %v2617 = vrot.slane %v2615, 4
        %v2618 = vrot.slane %v1502, 5
        %v2619 = vsel %vm2549, %v2617, %v2618
        %v2620 = vrot.slane %v2509, 5
        %v2621 = vrot.slane %v2620, 4
        %v2622 = vrot.slane %v1474, 5
        %v2623 = vsel %vm2549, %v2621, %v2622
        %v2624 = vrot.slane %v2622, 4
        %v2625 = vrot.slane %v1503, 5
        %v2626 = vsel %vm2549, %v2624, %v2625
        %v2627 = vrot.slane %v2510, 5
        %v2628 = vrot.slane %v2627, 4
        %v2629 = vrot.slane %v1476, 5
        %v2630 = vsel %vm2549, %v2628, %v2629
        %v2631 = vrot.slane %v2629, 4
        %v2632 = vrot.slane %v1504, 5
        %v2633 = vsel %vm2549, %v2631, %v2632
        %v2634 = vrot.slane %v2511, 5
        %v2635 = vrot.slane %v2634, 4
        %v2636 = vrot.slane %v1478, 5
        %v2637 = vsel %vm2549, %v2635, %v2636
        %v2638 = vrot.slane %v2636, 4
        %v2639 = vrot.slane %v1505, 5
        %v2640 = vsel %vm2549, %v2638, %v2639
        %v2641 = vrot.slane %v2512, 5
        %v2642 = vrot.slane %v2641, 4
        %v2643 = vrot.slane %v1480, 5
        %v2644 = vsel %vm2549, %v2642, %v2643
        %v2645 = vrot.slane %v2643, 4
        %v2646 = vrot.slane %v1506, 5
        %v2647 = vsel %vm2549, %v2645, %v2646
        %v2648 = vrot.slane %v2513, 5
        %v2649 = vrot.slane %v2648, 4
        %v2650 = vrot.slane %v1482, 5
        %v2651 = vsel %vm2549, %v2649, %v2650
        %v2652 = vrot.slane %v2650, 4
        %v2653 = vrot.slane %v1507, 5
        %v2654 = vsel %vm2549, %v2652, %v2653
        %v2655 = vrot.slane %v2514, 5
        %v2656 = vrot.slane %v2655, 4
        %v2657 = vrot.slane %v1484, 5
        %v2658 = vsel %vm2549, %v2656, %v2657
        %v2659 = vrot.slane %v2657, 4
        %v2660 = vrot.slane %v1508, 5
        %v2661 = vsel %vm2549, %v2659, %v2660
        %v2662 = vld [vmem:[%s3 + $0x40] sm:$0xf]
        %v2663 = vld [vmem:[%s3 + $0x44] sm:$0xf]
        %v2664 = vld [vmem:[%s3 + $0x48] sm:$0xf]
        %v2665 = vld [vmem:[%s3 + $0x4c] sm:$0xf]
        %v2666 = vld [vmem:[%s3 + $0x50] sm:$0xf]
        %v2667 = vld [vmem:[%s3 + $0x54] sm:$0xf]
        %v2668 = vld [vmem:[%s3 + $0x58] sm:$0xf]
        %v2669 = vld [vmem:[%s3 + $0x5c] sm:$0xf]
        %v2670 = vunpack.c.l.b16 %v2553
        %v2671 = vunpack.c.l.b16 %v2556
        %v2672 = vunpack.c.l.b16 %v2560
        %v2673 = vunpack.c.l.b16 %v2563
        %v2674 = vunpack.c.l.b16 %v2567
        %v2675 = vunpack.c.l.b16 %v2570
        %v2676 = vunpack.c.l.b16 %v2574
        %v2677 = vunpack.c.l.b16 %v2577
        %v2678 = vunpack.c.l.b16 %v2581
        %v2679 = vunpack.c.l.b16 %v2584
        %v2680 = vunpack.c.l.b16 %v2588
        %v2681 = vunpack.c.l.b16 %v2591
        %v2682 = vunpack.c.l.b16 %v2595
        %v2683 = vunpack.c.l.b16 %v2598
        %v2684 = vunpack.c.l.b16 %v2602
        %v2685 = vunpack.c.l.b16 %v2605
        %v2686 = vunpack.c.l.b16 %v2609
        %v2687 = vunpack.c.l.b16 %v2612
        %v2688 = vunpack.c.l.b16 %v2616
        %v2689 = vunpack.c.l.b16 %v2619
        %v2690 = vunpack.c.l.b16 %v2623
        %v2691 = vunpack.c.l.b16 %v2626
        %v2692 = vunpack.c.l.b16 %v2630
        %v2693 = vunpack.c.l.b16 %v2633
        %v2694 = vunpack.c.l.b16 %v2637
        %v2695 = vunpack.c.l.b16 %v2640
        %v2696 = vunpack.c.l.b16 %v2644
        %v2697 = vunpack.c.l.b16 %v2647
        %v2698 = vunpack.c.l.b16 %v2651
        %v2699 = vunpack.c.l.b16 %v2654
        %v2700 = vunpack.c.l.b16 %v2658
        %v2701 = vunpack.c.l.b16 %v2661
        %v2702 = vpack.c.b16 %v2671, %v2670
        %v2703 = vpack.c.b16 %v2673, %v2672
        %v2704 = vpack.c.b16 %v2675, %v2674
        %v2705 = vpack.c.b16 %v2677, %v2676
        %v2706 = vpack.c.b16 %v2679, %v2678
        %v2707 = vpack.c.b16 %v2681, %v2680
        %v2708 = vpack.c.b16 %v2683, %v2682
        %v2709 = vpack.c.b16 %v2685, %v2684
        %v2710 = vpack.c.b16 %v2687, %v2686
        %v2711 = vpack.c.b16 %v2689, %v2688
        %v2712 = vpack.c.b16 %v2691, %v2690
        %v2713 = vpack.c.b16 %v2693, %v2692
        %v2714 = vpack.c.b16 %v2695, %v2694
        %v2715 = vpack.c.b16 %v2697, %v2696
        %v2716 = vpack.c.b16 %v2699, %v2698
        %v2717 = vpack.c.b16 %v2701, %v2700
        %v2726 = vunpack.c.l.b16 %v2662
        %v2727 = vunpack.c.l.b16 %v2663
        %v2728 = vunpack.c.l.b16 %v2664
        %v2729 = vunpack.c.l.b16 %v2665
        %v2730 = vunpack.c.l.b16 %v2666
        %v2731 = vunpack.c.l.b16 %v2667
        %v2732 = vunpack.c.l.b16 %v2668
        %v2733 = vunpack.c.l.b16 %v2669
        %v2734 = vpack.c.b16 %v2727, %v2726
        %v2735 = vpack.c.b16 %v2729, %v2728
        %v2736 = vpack.c.b16 %v2731, %v2730
        %v2737 = vpack.c.b16 %v2733, %v2732
        %v2743 = vsel %vm1976, %v2702, 0
        %v2746 = vsel %vm1976, %v2703, 0
        %v2749 = vsel %vm1976, %v2704, 0
        %v2752 = vsel %vm1976, %v2705, 0
        %v2755 = vsel %vm1976, %v2706, 0
        %v2758 = vsel %vm1976, %v2707, 0
        %v2761 = vsel %vm1976, %v2708, 0
        %v2764 = vsel %vm1976, %v2709, 0
        %v2767 = vsel %vm1976, %v2710, 0
        %v2770 = vsel %vm1976, %v2711, 0
        %v2773 = vsel %vm1976, %v2712, 0
        %v2776 = vsel %vm1976, %v2713, 0
        %v2779 = vsel %vm1976, %v2714, 0
        %v2782 = vsel %vm1976, %v2715, 0
        %v2785 = vsel %vm1976, %v2716, 0
        %v2788 = vsel %vm1976, %v2717, 0
        %2790 = vmatprep.subr.bf16.mxu0 0
        %2791 = vmatpush1.bf16.msra.mxu0 0
        %2792 = vmatprep.subr.bf16.mxu0 0
        %2793 = vmatpush1.bf16.msra.mxu0 0
        %2794 = vmatprep.subr.bf16.mxu0 0
        %2795 = vmatpush1.bf16.msra.mxu0 0
        %2796 = vmatprep.subr.bf16.mxu0 0
        %2797 = vmatpush1.bf16.msra.mxu0 0
        %2798 = vmatprep.subr.bf16.mxu0 0
        %2799 = vmatpush1.bf16.msra.mxu0 %v2737
        %2800 = vmatprep.subr.bf16.mxu0 0
        %2801 = vmatpush1.bf16.msra.mxu0 %v2736
        %2802 = vmatprep.subr.bf16.mxu0 0
        %2803 = vmatpush1.bf16.msra.mxu0 %v2735
        %2804 = vmatprep.subr.bf16.mxu0 0
        %2805 = vmatpush1.bf16.msra.mxu0 %v2734
        %2806 = vmatprep.subr.bf16.mxu0 0
        %2807 = vmatpush2.bf16.msra.mxu0 0
        %2808 = vmatprep.subr.bf16.mxu0 0
        %2809 = vmatpush2.bf16.msra.mxu0 0
        %2810 = vmatprep.subr.bf16.mxu0 0
        %2811 = vmatpush2.bf16.msra.mxu0 0
        %2812 = vmatprep.subr.bf16.mxu0 0
        %2813 = vmatpush2.bf16.msra.mxu0 0
        %2814 = vmatprep.subr.bf16.mxu0 0
        %2815 = vmatpush2.bf16.msra.mxu0 0
        %2816 = vmatprep.subr.bf16.mxu0 0
        %2817 = vmatpush2.bf16.msra.mxu0 0
        %2818 = vmatprep.subr.bf16.mxu0 0
        %2819 = vmatpush2.bf16.msra.mxu0 0
        %2820 = vmatprep.subr.bf16.mxu0 0
        %2821 = vmatpush2.bf16.msra.mxu0 0
        %2822 = vmatprep.mubr.bf16.mxu0 0
        %2823 = vmatmul.mubr.bf16.gmra.mxu0 %v2743
        %v2824 = vpop.f32.mrf.mxu0
        %v2825 = vadd.f32 0.0, %v2824
        %v2826 = vpop.f32.mrf.mxu0
        %v2827 = vpop.f32.mrf.mxu0
        %v2828 = vadd.f32 0.0, %v2827
        %v2829 = vpop.f32.mrf.mxu0
        %2830 = vmatprep.mubr.bf16.mxu0 0
        %2831 = vmatmul.mubr.bf16.gmra.mxu0 %v2746
        %v2832 = vpop.f32.mrf.mxu0
        %v2833 = vadd.f32 0.0, %v2832
        %v2834 = vpop.f32.mrf.mxu0
        %v2835 = vpop.f32.mrf.mxu0
        %v2836 = vadd.f32 0.0, %v2835
        %v2837 = vpop.f32.mrf.mxu0
        %2838 = vmatprep.mubr.bf16.mxu0 0
        %2839 = vmatmul.mubr.bf16.gmra.mxu0 %v2749
        %v2840 = vpop.f32.mrf.mxu0
        %v2841 = vadd.f32 0.0, %v2840
        %v2842 = vpop.f32.mrf.mxu0
        %v2843 = vpop.f32.mrf.mxu0
        %v2844 = vadd.f32 0.0, %v2843
        %v2845 = vpop.f32.mrf.mxu0
        %2846 = vmatprep.mubr.bf16.mxu0 0
        %2847 = vmatmul.mubr.bf16.gmra.mxu0 %v2752
        %v2848 = vpop.f32.mrf.mxu0
        %v2849 = vadd.f32 0.0, %v2848
        %v2850 = vpop.f32.mrf.mxu0
        %v2851 = vpop.f32.mrf.mxu0
        %v2852 = vadd.f32 0.0, %v2851
        %v2853 = vpop.f32.mrf.mxu0
        %2854 = vmatprep.mubr.bf16.mxu0 0
        %2855 = vmatmul.mubr.bf16.gmra.mxu0 %v2755
        %v2856 = vpop.f32.mrf.mxu0
        %v2857 = vadd.f32 0.0, %v2856
        %v2858 = vpop.f32.mrf.mxu0
        %v2859 = vpop.f32.mrf.mxu0
        %v2860 = vadd.f32 0.0, %v2859
        %v2861 = vpop.f32.mrf.mxu0
        %2862 = vmatprep.mubr.bf16.mxu0 0
        %2863 = vmatmul.mubr.bf16.gmra.mxu0 %v2758
        %v2864 = vpop.f32.mrf.mxu0
        %v2865 = vadd.f32 0.0, %v2864
        %v2866 = vpop.f32.mrf.mxu0
        %v2867 = vpop.f32.mrf.mxu0
        %v2868 = vadd.f32 0.0, %v2867
        %v2869 = vpop.f32.mrf.mxu0
        %2870 = vmatprep.mubr.bf16.mxu0 0
        %2871 = vmatmul.mubr.bf16.gmra.mxu0 %v2761
        %v2872 = vpop.f32.mrf.mxu0
        %v2873 = vadd.f32 0.0, %v2872
        %v2874 = vpop.f32.mrf.mxu0
        %v2875 = vpop.f32.mrf.mxu0
        %v2876 = vadd.f32 0.0, %v2875
        %v2877 = vpop.f32.mrf.mxu0
        %2878 = vmatprep.mubr.bf16.mxu0 0
        %2879 = vmatmul.mubr.bf16.gmra.mxu0 %v2764
        %v2880 = vpop.f32.mrf.mxu0
        %v2881 = vadd.f32 0.0, %v2880
        %v2882 = vpop.f32.mrf.mxu0
        %v2883 = vpop.f32.mrf.mxu0
        %v2884 = vadd.f32 0.0, %v2883
        %v2885 = vpop.f32.mrf.mxu0
        %2886 = vmatprep.mubr.bf16.mxu0 0
        %2887 = vmatmul.mubr.bf16.gmra.mxu0 %v2767
        %v2888 = vpop.f32.mrf.mxu0
        %v2889 = vadd.f32 0.0, %v2888
        %v2890 = vpop.f32.mrf.mxu0
        %v2891 = vpop.f32.mrf.mxu0
        %v2892 = vadd.f32 0.0, %v2891
        %v2893 = vpop.f32.mrf.mxu0
        %2894 = vmatprep.mubr.bf16.mxu0 0
        %2895 = vmatmul.mubr.bf16.gmra.mxu0 %v2770
        %v2896 = vpop.f32.mrf.mxu0
        %v2897 = vadd.f32 0.0, %v2896
        %v2898 = vpop.f32.mrf.mxu0
        %v2899 = vpop.f32.mrf.mxu0
        %v2900 = vadd.f32 0.0, %v2899
        %v2901 = vpop.f32.mrf.mxu0
        %2902 = vmatprep.mubr.bf16.mxu0 0
        %2903 = vmatmul.mubr.bf16.gmra.mxu0 %v2773
        %v2904 = vpop.f32.mrf.mxu0
        %v2905 = vadd.f32 0.0, %v2904
        %v2906 = vpop.f32.mrf.mxu0
        %v2907 = vpop.f32.mrf.mxu0
        %v2908 = vadd.f32 0.0, %v2907
        %v2909 = vpop.f32.mrf.mxu0
        %2910 = vmatprep.mubr.bf16.mxu0 0
        %2911 = vmatmul.mubr.bf16.gmra.mxu0 %v2776
        %v2912 = vpop.f32.mrf.mxu0
        %v2913 = vadd.f32 0.0, %v2912
        %v2914 = vpop.f32.mrf.mxu0
        %v2915 = vpop.f32.mrf.mxu0
        %v2916 = vadd.f32 0.0, %v2915
        %v2917 = vpop.f32.mrf.mxu0
        %2918 = vmatprep.mubr.bf16.mxu0 0
        %2919 = vmatmul.mubr.bf16.gmra.mxu0 %v2779
        %v2920 = vpop.f32.mrf.mxu0
        %v2921 = vadd.f32 0.0, %v2920
        %v2922 = vpop.f32.mrf.mxu0
        %v2923 = vpop.f32.mrf.mxu0
        %v2924 = vadd.f32 0.0, %v2923
        %v2925 = vpop.f32.mrf.mxu0
        %2926 = vmatprep.mubr.bf16.mxu0 0
        %2927 = vmatmul.mubr.bf16.gmra.mxu0 %v2782
        %v2928 = vpop.f32.mrf.mxu0
        %v2929 = vadd.f32 0.0, %v2928
        %v2930 = vpop.f32.mrf.mxu0
        %v2931 = vpop.f32.mrf.mxu0
        %v2932 = vadd.f32 0.0, %v2931
        %v2933 = vpop.f32.mrf.mxu0
        %2934 = vmatprep.mubr.bf16.mxu0 0
        %2935 = vmatmul.mubr.bf16.gmra.mxu0 %v2785
        %v2936 = vpop.f32.mrf.mxu0
        %v2937 = vadd.f32 0.0, %v2936
        %v2938 = vpop.f32.mrf.mxu0
        %v2939 = vpop.f32.mrf.mxu0
        %v2940 = vadd.f32 0.0, %v2939
        %v2941 = vpop.f32.mrf.mxu0
        %2942 = vmatprep.mubr.bf16.mxu0 0
        %2943 = vmatmul.mubr.bf16.gmra.mxu0 %v2788
        %v2944 = vpop.f32.mrf.mxu0
        %v2945 = vadd.f32 0.0, %v2944
        %v2946 = vpop.f32.mrf.mxu0
        %v2947 = vpop.f32.mrf.mxu0
        %v2948 = vadd.f32 0.0, %v2947
        %v2949 = vpop.f32.mrf.mxu0
        %2950 = vdwg.mxu0
        %v2951 = vadd.f32 %v2373, %v2825
        %v2952 = vadd.f32 %v2376, %v2828
        %v2953 = vadd.f32 %v2381, %v2833
        %v2954 = vadd.f32 %v2384, %v2836
        %v2955 = vadd.f32 %v2389, %v2841
        %v2956 = vadd.f32 %v2392, %v2844
        %v2957 = vadd.f32 %v2397, %v2849
        %v2958 = vadd.f32 %v2400, %v2852
        %v2959 = vadd.f32 %v2405, %v2857
        %v2960 = vadd.f32 %v2408, %v2860
        %v2961 = vadd.f32 %v2413, %v2865
        %v2962 = vadd.f32 %v2416, %v2868
        %v2963 = vadd.f32 %v2421, %v2873
        %v2964 = vadd.f32 %v2424, %v2876
        %v2965 = vadd.f32 %v2429, %v2881
        %v2966 = vadd.f32 %v2432, %v2884
        %v2967 = vadd.f32 %v2437, %v2889
        %v2968 = vadd.f32 %v2440, %v2892
        %v2969 = vadd.f32 %v2445, %v2897
        %v2970 = vadd.f32 %v2448, %v2900
        %v2971 = vadd.f32 %v2453, %v2905
        %v2972 = vadd.f32 %v2456, %v2908
        %v2973 = vadd.f32 %v2461, %v2913
        %v2974 = vadd.f32 %v2464, %v2916
        %v2975 = vadd.f32 %v2469, %v2921
        %v2976 = vadd.f32 %v2472, %v2924
        %v2977 = vadd.f32 %v2477, %v2929
        %v2978 = vadd.f32 %v2480, %v2932
        %v2979 = vadd.f32 %v2485, %v2937
        %v2980 = vadd.f32 %v2488, %v2940
        %v2981 = vadd.f32 %v2493, %v2945
        %v2982 = vadd.f32 %v2496, %v2948
        %v2983 = vld [vmem:[%s1338] sm:$0xf]
        %v2984 = vld [vmem:[%s1338 + $0x4] sm:$0xf]
        %v2985 = vld [vmem:[%s1338 + $0xc] sm:$0xf]
        %v2986 = vld [vmem:[%s1338 + $0x10] sm:$0xf]
        %v2987 = vld [vmem:[%s1338 + $0x18] sm:$0xf]
        %v2988 = vld [vmem:[%s1338 + $0x1c] sm:$0xf]
        %v2989 = vld [vmem:[%s1338 + $0x24] sm:$0xf]
        %v2990 = vld [vmem:[%s1338 + $0x28] sm:$0xf]
        %v2991 = vld [vmem:[%s1338 + $0x30] sm:$0xf]
        %v2992 = vld [vmem:[%s1338 + $0x34] sm:$0xf]
        %v2993 = vld [vmem:[%s1338 + $0x3c] sm:$0xf]
        %v2994 = vld [vmem:[%s1338 + $0x40] sm:$0xf]
        %v2995 = vld [vmem:[%s1338 + $0x48] sm:$0xf]
        %v2996 = vld [vmem:[%s1338 + $0x4c] sm:$0xf]
        %v2997 = vld [vmem:[%s1338 + $0x54] sm:$0xf]
        %v2998 = vld [vmem:[%s1338 + $0x58] sm:$0xf]
        %v2999 = vld [vmem:[%s1338 + $0x60] sm:$0xf]
        %v3000 = vld [vmem:[%s1338 + $0x64] sm:$0xf]
        %v3001 = vld [vmem:[%s1338 + $0x6c] sm:$0xf]
        %v3002 = vld [vmem:[%s1338 + $0x70] sm:$0xf]
        %v3003 = vld [vmem:[%s1338 + $0x78] sm:$0xf]
        %v3004 = vld [vmem:[%s1338 + $0x7c] sm:$0xf]
        %v3005 = vld [vmem:[%s1338 + $0x84] sm:$0xf]
        %v3006 = vld [vmem:[%s1338 + $0x88] sm:$0xf]
        %v3007 = vld [vmem:[%s1338 + $0x90] sm:$0xf]
        %v3008 = vld [vmem:[%s1338 + $0x94] sm:$0xf]
        %v3009 = vld [vmem:[%s1338 + $0x9c] sm:$0xf]
        %v3010 = vld [vmem:[%s1338 + $0xa0] sm:$0xf]
        %v3011 = vld [vmem:[%s1338 + $0xa8] sm:$0xf]
        %v3012 = vld [vmem:[%s1338 + $0xac] sm:$0xf]
        %v3013 = vld [vmem:[%s1338 + $0xb4] sm:$0xf]
        %v3014 = vld [vmem:[%s1338 + $0xb8] sm:$0xf]
        %v3015 = vld [vmem:[%s3 + $0x60] sm:$0xf]
        %v3016 = vld [vmem:[%s3 + $0x64] sm:$0xf]
        %v3017 = vld [vmem:[%s3 + $0x68] sm:$0xf]
        %v3018 = vld [vmem:[%s3 + $0x6c] sm:$0xf]
        %v3019 = vld [vmem:[%s3 + $0x70] sm:$0xf]
        %v3020 = vld [vmem:[%s3 + $0x74] sm:$0xf]
        %v3021 = vld [vmem:[%s3 + $0x78] sm:$0xf]
        %v3022 = vld [vmem:[%s3 + $0x7c] sm:$0xf]
        %v3055 = vunpack.c.l.b16 %v2983
        %v3056 = vunpack.c.l.b16 %v2984
        %v3057 = vunpack.c.l.b16 %v2985
        %v3058 = vunpack.c.l.b16 %v2986
        %v3059 = vunpack.c.l.b16 %v2987
        %v3060 = vunpack.c.l.b16 %v2988
        %v3061 = vunpack.c.l.b16 %v2989
        %v3062 = vunpack.c.l.b16 %v2990
        %v3063 = vunpack.c.l.b16 %v2991
        %v3064 = vunpack.c.l.b16 %v2992
        %v3065 = vunpack.c.l.b16 %v2993
        %v3066 = vunpack.c.l.b16 %v2994
        %v3067 = vunpack.c.l.b16 %v2995
        %v3068 = vunpack.c.l.b16 %v2996
        %v3069 = vunpack.c.l.b16 %v2997
        %v3070 = vunpack.c.l.b16 %v2998
        %v3071 = vunpack.c.l.b16 %v2999
        %v3072 = vunpack.c.l.b16 %v3000
        %v3073 = vunpack.c.l.b16 %v3001
        %v3074 = vunpack.c.l.b16 %v3002
        %v3075 = vunpack.c.l.b16 %v3003
        %v3076 = vunpack.c.l.b16 %v3004
        %v3077 = vunpack.c.l.b16 %v3005
        %v3078 = vunpack.c.l.b16 %v3006
        %v3079 = vunpack.c.l.b16 %v3007
        %v3080 = vunpack.c.l.b16 %v3008
        %v3081 = vunpack.c.l.b16 %v3009
        %v3082 = vunpack.c.l.b16 %v3010
        %v3083 = vunpack.c.l.b16 %v3011
        %v3084 = vunpack.c.l.b16 %v3012
        %v3085 = vunpack.c.l.b16 %v3013
        %v3086 = vunpack.c.l.b16 %v3014
        %v3087 = vpack.c.b16 %v3056, %v3055
        %v3088 = vpack.c.b16 %v3058, %v3057
        %v3089 = vpack.c.b16 %v3060, %v3059
        %v3090 = vpack.c.b16 %v3062, %v3061
        %v3091 = vpack.c.b16 %v3064, %v3063
        %v3092 = vpack.c.b16 %v3066, %v3065
        %v3093 = vpack.c.b16 %v3068, %v3067
        %v3094 = vpack.c.b16 %v3070, %v3069
        %v3095 = vpack.c.b16 %v3072, %v3071
        %v3096 = vpack.c.b16 %v3074, %v3073
        %v3097 = vpack.c.b16 %v3076, %v3075
        %v3098 = vpack.c.b16 %v3078, %v3077
        %v3099 = vpack.c.b16 %v3080, %v3079
        %v3100 = vpack.c.b16 %v3082, %v3081
        %v3101 = vpack.c.b16 %v3084, %v3083
        %v3102 = vpack.c.b16 %v3086, %v3085
        %v3111 = vunpack.c.l.b16 %v3015
        %v3112 = vunpack.c.l.b16 %v3016
        %v3113 = vunpack.c.l.b16 %v3017
        %v3114 = vunpack.c.l.b16 %v3018
        %v3115 = vunpack.c.l.b16 %v3019
        %v3116 = vunpack.c.l.b16 %v3020
        %v3117 = vunpack.c.l.b16 %v3021
        %v3118 = vunpack.c.l.b16 %v3022
        %v3119 = vpack.c.b16 %v3112, %v3111
        %v3120 = vpack.c.b16 %v3114, %v3113
        %v3121 = vpack.c.b16 %v3116, %v3115
        %v3122 = vpack.c.b16 %v3118, %v3117
        %v3128 = vsel %vm1976, %v3087, 0
        %v3131 = vsel %vm1976, %v3088, 0
        %v3134 = vsel %vm1976, %v3089, 0
        %v3137 = vsel %vm1976, %v3090, 0
        %v3140 = vsel %vm1976, %v3091, 0
        %v3143 = vsel %vm1976, %v3092, 0
        %v3146 = vsel %vm1976, %v3093, 0
        %v3149 = vsel %vm1976, %v3094, 0
        %v3152 = vsel %vm1976, %v3095, 0
        %v3155 = vsel %vm1976, %v3096, 0
        %v3158 = vsel %vm1976, %v3097, 0
        %v3161 = vsel %vm1976, %v3098, 0
        %v3164 = vsel %vm1976, %v3099, 0
        %v3167 = vsel %vm1976, %v3100, 0
        %v3170 = vsel %vm1976, %v3101, 0
        %v3173 = vsel %vm1976, %v3102, 0
        %3175 = vmatprep.subr.bf16.mxu0 0
        %3176 = vmatpush1.bf16.msra.mxu0 0
        %3177 = vmatprep.subr.bf16.mxu0 0
        %3178 = vmatpush1.bf16.msra.mxu0 0
        %3179 = vmatprep.subr.bf16.mxu0 0
        %3180 = vmatpush1.bf16.msra.mxu0 0
        %3181 = vmatprep.subr.bf16.mxu0 0
        %3182 = vmatpush1.bf16.msra.mxu0 0
        %3183 = vmatprep.subr.bf16.mxu0 0
        %3184 = vmatpush1.bf16.msra.mxu0 %v3122
        %3185 = vmatprep.subr.bf16.mxu0 0
        %3186 = vmatpush1.bf16.msra.mxu0 %v3121
        %3187 = vmatprep.subr.bf16.mxu0 0
        %3188 = vmatpush1.bf16.msra.mxu0 %v3120
        %3189 = vmatprep.subr.bf16.mxu0 0
        %3190 = vmatpush1.bf16.msra.mxu0 %v3119
        %3191 = vmatprep.subr.bf16.mxu0 0
        %3192 = vmatpush2.bf16.msra.mxu0 0
        %3193 = vmatprep.subr.bf16.mxu0 0
        %3194 = vmatpush2.bf16.msra.mxu0 0
        %3195 = vmatprep.subr.bf16.mxu0 0
        %3196 = vmatpush2.bf16.msra.mxu0 0
        %3197 = vmatprep.subr.bf16.mxu0 0
        %3198 = vmatpush2.bf16.msra.mxu0 0
        %3199 = vmatprep.subr.bf16.mxu0 0
        %3200 = vmatpush2.bf16.msra.mxu0 0
        %3201 = vmatprep.subr.bf16.mxu0 0
        %3202 = vmatpush2.bf16.msra.mxu0 0
        %3203 = vmatprep.subr.bf16.mxu0 0
        %3204 = vmatpush2.bf16.msra.mxu0 0
        %3205 = vmatprep.subr.bf16.mxu0 0
        %3206 = vmatpush2.bf16.msra.mxu0 0
        %3207 = vmatprep.mubr.bf16.mxu0 0
        %3208 = vmatmul.mubr.bf16.gmra.mxu0 %v3128
        %v3209 = vpop.f32.mrf.mxu0
        %v3210 = vadd.f32 0.0, %v3209
        %v3211 = vpop.f32.mrf.mxu0
        %v3212 = vpop.f32.mrf.mxu0
        %v3213 = vadd.f32 0.0, %v3212
        %v3214 = vpop.f32.mrf.mxu0
        %3215 = vmatprep.mubr.bf16.mxu0 0
        %3216 = vmatmul.mubr.bf16.gmra.mxu0 %v3131
        %v3217 = vpop.f32.mrf.mxu0
        %v3218 = vadd.f32 0.0, %v3217
        %v3219 = vpop.f32.mrf.mxu0
        %v3220 = vpop.f32.mrf.mxu0
        %v3221 = vadd.f32 0.0, %v3220
        %v3222 = vpop.f32.mrf.mxu0
        %3223 = vmatprep.mubr.bf16.mxu0 0
        %3224 = vmatmul.mubr.bf16.gmra.mxu0 %v3134
        %v3225 = vpop.f32.mrf.mxu0
        %v3226 = vadd.f32 0.0, %v3225
        %v3227 = vpop.f32.mrf.mxu0
        %v3228 = vpop.f32.mrf.mxu0
        %v3229 = vadd.f32 0.0, %v3228
        %v3230 = vpop.f32.mrf.mxu0
        %3231 = vmatprep.mubr.bf16.mxu0 0
        %3232 = vmatmul.mubr.bf16.gmra.mxu0 %v3137
        %v3233 = vpop.f32.mrf.mxu0
        %v3234 = vadd.f32 0.0, %v3233
        %v3235 = vpop.f32.mrf.mxu0
        %v3236 = vpop.f32.mrf.mxu0
        %v3237 = vadd.f32 0.0, %v3236
        %v3238 = vpop.f32.mrf.mxu0
        %3239 = vmatprep.mubr.bf16.mxu0 0
        %3240 = vmatmul.mubr.bf16.gmra.mxu0 %v3140
        %v3241 = vpop.f32.mrf.mxu0
        %v3242 = vadd.f32 0.0, %v3241
        %v3243 = vpop.f32.mrf.mxu0
        %v3244 = vpop.f32.mrf.mxu0
        %v3245 = vadd.f32 0.0, %v3244
        %v3246 = vpop.f32.mrf.mxu0
        %3247 = vmatprep.mubr.bf16.mxu0 0
        %3248 = vmatmul.mubr.bf16.gmra.mxu0 %v3143
        %v3249 = vpop.f32.mrf.mxu0
        %v3250 = vadd.f32 0.0, %v3249
        %v3251 = vpop.f32.mrf.mxu0
        %v3252 = vpop.f32.mrf.mxu0
        %v3253 = vadd.f32 0.0, %v3252
        %v3254 = vpop.f32.mrf.mxu0
        %3255 = vmatprep.mubr.bf16.mxu0 0
        %3256 = vmatmul.mubr.bf16.gmra.mxu0 %v3146
        %v3257 = vpop.f32.mrf.mxu0
        %v3258 = vadd.f32 0.0, %v3257
        %v3259 = vpop.f32.mrf.mxu0
        %v3260 = vpop.f32.mrf.mxu0
        %v3261 = vadd.f32 0.0, %v3260
        %v3262 = vpop.f32.mrf.mxu0
        %3263 = vmatprep.mubr.bf16.mxu0 0
        %3264 = vmatmul.mubr.bf16.gmra.mxu0 %v3149
        %v3265 = vpop.f32.mrf.mxu0
        %v3266 = vadd.f32 0.0, %v3265
        %v3267 = vpop.f32.mrf.mxu0
        %v3268 = vpop.f32.mrf.mxu0
        %v3269 = vadd.f32 0.0, %v3268
        %v3270 = vpop.f32.mrf.mxu0
        %3271 = vmatprep.mubr.bf16.mxu0 0
        %3272 = vmatmul.mubr.bf16.gmra.mxu0 %v3152
        %v3273 = vpop.f32.mrf.mxu0
        %v3274 = vadd.f32 0.0, %v3273
        %v3275 = vpop.f32.mrf.mxu0
        %v3276 = vpop.f32.mrf.mxu0
        %v3277 = vadd.f32 0.0, %v3276
        %v3278 = vpop.f32.mrf.mxu0
        %3279 = vmatprep.mubr.bf16.mxu0 0
        %3280 = vmatmul.mubr.bf16.gmra.mxu0 %v3155
        %v3281 = vpop.f32.mrf.mxu0
        %v3282 = vadd.f32 0.0, %v3281
        %v3283 = vpop.f32.mrf.mxu0
        %v3284 = vpop.f32.mrf.mxu0
        %v3285 = vadd.f32 0.0, %v3284
        %v3286 = vpop.f32.mrf.mxu0
        %3287 = vmatprep.mubr.bf16.mxu0 0
        %3288 = vmatmul.mubr.bf16.gmra.mxu0 %v3158
        %v3289 = vpop.f32.mrf.mxu0
        %v3290 = vadd.f32 0.0, %v3289
        %v3291 = vpop.f32.mrf.mxu0
        %v3292 = vpop.f32.mrf.mxu0
        %v3293 = vadd.f32 0.0, %v3292
        %v3294 = vpop.f32.mrf.mxu0
        %3295 = vmatprep.mubr.bf16.mxu0 0
        %3296 = vmatmul.mubr.bf16.gmra.mxu0 %v3161
        %v3297 = vpop.f32.mrf.mxu0
        %v3298 = vadd.f32 0.0, %v3297
        %v3299 = vpop.f32.mrf.mxu0
        %v3300 = vpop.f32.mrf.mxu0
        %v3301 = vadd.f32 0.0, %v3300
        %v3302 = vpop.f32.mrf.mxu0
        %3303 = vmatprep.mubr.bf16.mxu0 0
        %3304 = vmatmul.mubr.bf16.gmra.mxu0 %v3164
        %v3305 = vpop.f32.mrf.mxu0
        %v3306 = vadd.f32 0.0, %v3305
        %v3307 = vpop.f32.mrf.mxu0
        %v3308 = vpop.f32.mrf.mxu0
        %v3309 = vadd.f32 0.0, %v3308
        %v3310 = vpop.f32.mrf.mxu0
        %3311 = vmatprep.mubr.bf16.mxu0 0
        %3312 = vmatmul.mubr.bf16.gmra.mxu0 %v3167
        %v3313 = vpop.f32.mrf.mxu0
        %v3314 = vadd.f32 0.0, %v3313
        %v3315 = vpop.f32.mrf.mxu0
        %v3316 = vpop.f32.mrf.mxu0
        %v3317 = vadd.f32 0.0, %v3316
        %v3318 = vpop.f32.mrf.mxu0
        %3319 = vmatprep.mubr.bf16.mxu0 0
        %3320 = vmatmul.mubr.bf16.gmra.mxu0 %v3170
        %v3321 = vpop.f32.mrf.mxu0
        %v3322 = vadd.f32 0.0, %v3321
        %v3323 = vpop.f32.mrf.mxu0
        %v3324 = vpop.f32.mrf.mxu0
        %v3325 = vadd.f32 0.0, %v3324
        %v3326 = vpop.f32.mrf.mxu0
        %3327 = vmatprep.mubr.bf16.mxu0 0
        %3328 = vmatmul.mubr.bf16.gmra.mxu0 %v3173
        %v3329 = vpop.f32.mrf.mxu0
        %v3330 = vadd.f32 0.0, %v3329
        %v3331 = vpop.f32.mrf.mxu0
        %v3332 = vpop.f32.mrf.mxu0
        %v3333 = vadd.f32 0.0, %v3332
        %v3334 = vpop.f32.mrf.mxu0
        %3335 = vdwg.mxu0
        %v3336 = vadd.f32 %v2951, %v3210
        %v3337 = vadd.f32 %v2952, %v3213
        %v3338 = vadd.f32 %v2953, %v3218
        %v3339 = vadd.f32 %v2954, %v3221
        %v3340 = vadd.f32 %v2955, %v3226
        %v3341 = vadd.f32 %v2956, %v3229
        %v3342 = vadd.f32 %v2957, %v3234
        %v3343 = vadd.f32 %v2958, %v3237
        %v3344 = vadd.f32 %v2959, %v3242
        %v3345 = vadd.f32 %v2960, %v3245
        %v3346 = vadd.f32 %v2961, %v3250
        %v3347 = vadd.f32 %v2962, %v3253
        %v3348 = vadd.f32 %v2963, %v3258
        %v3349 = vadd.f32 %v2964, %v3261
        %v3350 = vadd.f32 %v2965, %v3266
        %v3351 = vadd.f32 %v2966, %v3269
        %v3352 = vadd.f32 %v2967, %v3274
        %v3353 = vadd.f32 %v2968, %v3277
        %v3354 = vadd.f32 %v2969, %v3282
        %v3355 = vadd.f32 %v2970, %v3285
        %v3356 = vadd.f32 %v2971, %v3290
        %v3357 = vadd.f32 %v2972, %v3293
        %v3358 = vadd.f32 %v2973, %v3298
        %v3359 = vadd.f32 %v2974, %v3301
        %v3360 = vadd.f32 %v2975, %v3306
        %v3361 = vadd.f32 %v2976, %v3309
        %v3362 = vadd.f32 %v2977, %v3314
        %v3363 = vadd.f32 %v2978, %v3317
        %v3364 = vadd.f32 %v2979, %v3322
        %v3365 = vadd.f32 %v2980, %v3325
        %v3366 = vadd.f32 %v2981, %v3330
        %v3367 = vadd.f32 %v2982, %v3333
        %v3368 = vld [vmem:[%s1338] sm:$0xf]
        %v3369 = vld [vmem:[%s1338 + $0x4] sm:$0xf]
        %v3370 = vld [vmem:[%s1338 + $0x8] sm:$0x1]
        %v3371 = vld [vmem:[%s1338 + $0xc] sm:$0xf]
        %v3372 = vld [vmem:[%s1338 + $0x10] sm:$0xf]
        %v3373 = vld [vmem:[%s1338 + $0x14] sm:$0x1]
        %v3374 = vld [vmem:[%s1338 + $0x18] sm:$0xf]
        %v3375 = vld [vmem:[%s1338 + $0x1c] sm:$0xf]
        %v3376 = vld [vmem:[%s1338 + $0x20] sm:$0x1]
        %v3377 = vld [vmem:[%s1338 + $0x24] sm:$0xf]
        %v3378 = vld [vmem:[%s1338 + $0x28] sm:$0xf]
        %v3379 = vld [vmem:[%s1338 + $0x2c] sm:$0x1]
        %v3380 = vld [vmem:[%s1338 + $0x30] sm:$0xf]
        %v3381 = vld [vmem:[%s1338 + $0x34] sm:$0xf]
        %v3382 = vld [vmem:[%s1338 + $0x38] sm:$0x1]
        %v3383 = vld [vmem:[%s1338 + $0x3c] sm:$0xf]
        %v3384 = vld [vmem:[%s1338 + $0x40] sm:$0xf]
        %v3385 = vld [vmem:[%s1338 + $0x44] sm:$0x1]
        %v3386 = vld [vmem:[%s1338 + $0x48] sm:$0xf]
        %v3387 = vld [vmem:[%s1338 + $0x4c] sm:$0xf]
        %v3388 = vld [vmem:[%s1338 + $0x50] sm:$0x1]
        %v3389 = vld [vmem:[%s1338 + $0x54] sm:$0xf]
        %v3390 = vld [vmem:[%s1338 + $0x58] sm:$0xf]
        %v3391 = vld [vmem:[%s1338 + $0x5c] sm:$0x1]
        %v3392 = vld [vmem:[%s1338 + $0x60] sm:$0xf]
        %v3393 = vld [vmem:[%s1338 + $0x64] sm:$0xf]
        %v3394 = vld [vmem:[%s1338 + $0x68] sm:$0x1]
        %v3395 = vld [vmem:[%s1338 + $0x6c] sm:$0xf]
        %v3396 = vld [vmem:[%s1338 + $0x70] sm:$0xf]
        %v3397 = vld [vmem:[%s1338 + $0x74] sm:$0x1]
        %v3398 = vld [vmem:[%s1338 + $0x78] sm:$0xf]
        %v3399 = vld [vmem:[%s1338 + $0x7c] sm:$0xf]
        %v3400 = vld [vmem:[%s1338 + $0x80] sm:$0x1]
        %v3401 = vld [vmem:[%s1338 + $0x84] sm:$0xf]
        %v3402 = vld [vmem:[%s1338 + $0x88] sm:$0xf]
        %v3403 = vld [vmem:[%s1338 + $0x8c] sm:$0x1]
        %v3404 = vld [vmem:[%s1338 + $0x90] sm:$0xf]
        %v3405 = vld [vmem:[%s1338 + $0x94] sm:$0xf]
        %v3406 = vld [vmem:[%s1338 + $0x98] sm:$0x1]
        %v3407 = vld [vmem:[%s1338 + $0x9c] sm:$0xf]
        %v3408 = vld [vmem:[%s1338 + $0xa0] sm:$0xf]
        %v3409 = vld [vmem:[%s1338 + $0xa4] sm:$0x1]
        %v3410 = vld [vmem:[%s1338 + $0xa8] sm:$0xf]
        %v3411 = vld [vmem:[%s1338 + $0xac] sm:$0xf]
        %v3412 = vld [vmem:[%s1338 + $0xb0] sm:$0x1]
        %v3413 = vld [vmem:[%s1338 + $0xb4] sm:$0xf]
        %v3414 = vld [vmem:[%s1338 + $0xb8] sm:$0xf]
        %v3415 = vld [vmem:[%s1338 + $0xbc] sm:$0x1]
        %v3417 = vshrl.u32 %v3368, 16
        %v3419 = vrot.slane %v3417, 4
        %v3420 = vshll.u32 %v3368, 16
        %v3422 = vrot.slane %v3420, 5
        %v3423 = vor.u32 %v3419, %v3422
        %v3424 = vrot.slane %v3423, 4
        %v3426 = vshll.u32 %v3369, 16
        %v3428 = vrot.slane %v3426, 5
        %v3429 = vsel %vm1511, %v3424, %v3428
        %v3430 = vshrl.u32 %v3369, 16
        %v3432 = vrot.slane %v3430, 4
        %v3433 = vor.u32 %v3432, %v3428
        %v3434 = vrot.slane %v3433, 4
        %v3436 = vshll.u32 %v3370, 16
        %v3438 = vrot.slane %v3436, 5
        %v3439 = vsel %vm1511, %v3434, %v3438
        %v3441 = vshrl.u32 %v3371, 16
        %v3443 = vrot.slane %v3441, 4
        %v3444 = vshll.u32 %v3371, 16
        %v3446 = vrot.slane %v3444, 5
        %v3447 = vor.u32 %v3443, %v3446
        %v3448 = vrot.slane %v3447, 4
        %v3450 = vshll.u32 %v3372, 16
        %v3452 = vrot.slane %v3450, 5
        %v3453 = vsel %vm1511, %v3448, %v3452
        %v3454 = vshrl.u32 %v3372, 16
        %v3456 = vrot.slane %v3454, 4
        %v3457 = vor.u32 %v3456, %v3452
        %v3458 = vrot.slane %v3457, 4
        %v3460 = vshll.u32 %v3373, 16
        %v3462 = vrot.slane %v3460, 5
        %v3463 = vsel %vm1511, %v3458, %v3462
        %v3465 = vshrl.u32 %v3374, 16
        %v3467 = vrot.slane %v3465, 4
        %v3468 = vshll.u32 %v3374, 16
        %v3470 = vrot.slane %v3468, 5
        %v3471 = vor.u32 %v3467, %v3470
        %v3472 = vrot.slane %v3471, 4
        %v3474 = vshll.u32 %v3375, 16
        %v3476 = vrot.slane %v3474, 5
        %v3477 = vsel %vm1511, %v3472, %v3476
        %v3478 = vshrl.u32 %v3375, 16
        %v3480 = vrot.slane %v3478, 4
        %v3481 = vor.u32 %v3480, %v3476
        %v3482 = vrot.slane %v3481, 4
        %v3484 = vshll.u32 %v3376, 16
        %v3486 = vrot.slane %v3484, 5
        %v3487 = vsel %vm1511, %v3482, %v3486
        %v3489 = vshrl.u32 %v3377, 16
        %v3491 = vrot.slane %v3489, 4
        %v3492 = vshll.u32 %v3377, 16
        %v3494 = vrot.slane %v3492, 5
        %v3495 = vor.u32 %v3491, %v3494
        %v3496 = vrot.slane %v3495, 4
        %v3498 = vshll.u32 %v3378, 16
        %v3500 = vrot.slane %v3498, 5
        %v3501 = vsel %vm1511, %v3496, %v3500
        %v3502 = vshrl.u32 %v3378, 16
        %v3504 = vrot.slane %v3502, 4
        %v3505 = vor.u32 %v3504, %v3500
        %v3506 = vrot.slane %v3505, 4
        %v3508 = vshll.u32 %v3379, 16
        %v3510 = vrot.slane %v3508, 5
        %v3511 = vsel %vm1511, %v3506, %v3510
        %v3513 = vshrl.u32 %v3380, 16
        %v3515 = vrot.slane %v3513, 4
        %v3516 = vshll.u32 %v3380, 16
        %v3518 = vrot.slane %v3516, 5
        %v3519 = vor.u32 %v3515, %v3518
        %v3520 = vrot.slane %v3519, 4
        %v3522 = vshll.u32 %v3381, 16
        %v3524 = vrot.slane %v3522, 5
        %v3525 = vsel %vm1511, %v3520, %v3524
        %v3526 = vshrl.u32 %v3381, 16
        %v3528 = vrot.slane %v3526, 4
        %v3529 = vor.u32 %v3528, %v3524
        %v3530 = vrot.slane %v3529, 4
        %v3532 = vshll.u32 %v3382, 16
        %v3534 = vrot.slane %v3532, 5
        %v3535 = vsel %vm1511, %v3530, %v3534
        %v3537 = vshrl.u32 %v3383, 16
        %v3539 = vrot.slane %v3537, 4
        %v3540 = vshll.u32 %v3383, 16
        %v3542 = vrot.slane %v3540, 5
        %v3543 = vor.u32 %v3539, %v3542
        %v3544 = vrot.slane %v3543, 4
        %v3546 = vshll.u32 %v3384, 16
        %v3548 = vrot.slane %v3546, 5
        %v3549 = vsel %vm1511, %v3544, %v3548
        %v3550 = vshrl.u32 %v3384, 16
        %v3552 = vrot.slane %v3550, 4
        %v3553 = vor.u32 %v3552, %v3548
        %v3554 = vrot.slane %v3553, 4
        %v3556 = vshll.u32 %v3385, 16
        %v3558 = vrot.slane %v3556, 5
        %v3559 = vsel %vm1511, %v3554, %v3558
        %v3561 = vshrl.u32 %v3386, 16
        %v3563 = vrot.slane %v3561, 4
        %v3564 = vshll.u32 %v3386, 16
        %v3566 = vrot.slane %v3564, 5
        %v3567 = vor.u32 %v3563, %v3566
        %v3568 = vrot.slane %v3567, 4
        %v3570 = vshll.u32 %v3387, 16
        %v3572 = vrot.slane %v3570, 5
        %v3573 = vsel %vm1511, %v3568, %v3572
        %v3574 = vshrl.u32 %v3387, 16
        %v3576 = vrot.slane %v3574, 4
        %v3577 = vor.u32 %v3576, %v3572
        %v3578 = vrot.slane %v3577, 4
        %v3580 = vshll.u32 %v3388, 16
        %v3582 = vrot.slane %v3580, 5
        %v3583 = vsel %vm1511, %v3578, %v3582
        %v3585 = vshrl.u32 %v3389, 16
        %v3587 = vrot.slane %v3585, 4
        %v3588 = vshll.u32 %v3389, 16
        %v3590 = vrot.slane %v3588, 5
        %v3591 = vor.u32 %v3587, %v3590
        %v3592 = vrot.slane %v3591, 4
        %v3594 = vshll.u32 %v3390, 16
        %v3596 = vrot.slane %v3594, 5
        %v3597 = vsel %vm1511, %v3592, %v3596
        %v3598 = vshrl.u32 %v3390, 16
        %v3600 = vrot.slane %v3598, 4
        %v3601 = vor.u32 %v3600, %v3596
        %v3602 = vrot.slane %v3601, 4
        %v3604 = vshll.u32 %v3391, 16
        %v3606 = vrot.slane %v3604, 5
        %v3607 = vsel %vm1511, %v3602, %v3606
        %v3609 = vshrl.u32 %v3392, 16
        %v3611 = vrot.slane %v3609, 4
        %v3612 = vshll.u32 %v3392, 16
        %v3614 = vrot.slane %v3612, 5
        %v3615 = vor.u32 %v3611, %v3614
        %v3616 = vrot.slane %v3615, 4
        %v3618 = vshll.u32 %v3393, 16
        %v3620 = vrot.slane %v3618, 5
        %v3621 = vsel %vm1511, %v3616, %v3620
        %v3622 = vshrl.u32 %v3393, 16
        %v3624 = vrot.slane %v3622, 4
        %v3625 = vor.u32 %v3624, %v3620
        %v3626 = vrot.slane %v3625, 4
        %v3628 = vshll.u32 %v3394, 16
        %v3630 = vrot.slane %v3628, 5
        %v3631 = vsel %vm1511, %v3626, %v3630
        %v3633 = vshrl.u32 %v3395, 16
        %v3635 = vrot.slane %v3633, 4
        %v3636 = vshll.u32 %v3395, 16
        %v3638 = vrot.slane %v3636, 5
        %v3639 = vor.u32 %v3635, %v3638
        %v3640 = vrot.slane %v3639, 4
        %v3642 = vshll.u32 %v3396, 16
        %v3644 = vrot.slane %v3642, 5
        %v3645 = vsel %vm1511, %v3640, %v3644
        %v3646 = vshrl.u32 %v3396, 16
        %v3648 = vrot.slane %v3646, 4
        %v3649 = vor.u32 %v3648, %v3644
        %v3650 = vrot.slane %v3649, 4
        %v3652 = vshll.u32 %v3397, 16
        %v3654 = vrot.slane %v3652, 5
        %v3655 = vsel %vm1511, %v3650, %v3654
        %v3657 = vshrl.u32 %v3398, 16
        %v3659 = vrot.slane %v3657, 4
        %v3660 = vshll.u32 %v3398, 16
        %v3662 = vrot.slane %v3660, 5
        %v3663 = vor.u32 %v3659, %v3662
        %v3664 = vrot.slane %v3663, 4
        %v3666 = vshll.u32 %v3399, 16
        %v3668 = vrot.slane %v3666, 5
        %v3669 = vsel %vm1511, %v3664, %v3668
        %v3670 = vshrl.u32 %v3399, 16
        %v3672 = vrot.slane %v3670, 4
        %v3673 = vor.u32 %v3672, %v3668
        %v3674 = vrot.slane %v3673, 4
        %v3676 = vshll.u32 %v3400, 16
        %v3678 = vrot.slane %v3676, 5
        %v3679 = vsel %vm1511, %v3674, %v3678
        %v3681 = vshrl.u32 %v3401, 16
        %v3683 = vrot.slane %v3681, 4
        %v3684 = vshll.u32 %v3401, 16
        %v3686 = vrot.slane %v3684, 5
        %v3687 = vor.u32 %v3683, %v3686
        %v3688 = vrot.slane %v3687, 4
        %v3690 = vshll.u32 %v3402, 16
        %v3692 = vrot.slane %v3690, 5
        %v3693 = vsel %vm1511, %v3688, %v3692
        %v3694 = vshrl.u32 %v3402, 16
        %v3696 = vrot.slane %v3694, 4
        %v3697 = vor.u32 %v3696, %v3692
        %v3698 = vrot.slane %v3697, 4
        %v3700 = vshll.u32 %v3403, 16
        %v3702 = vrot.slane %v3700, 5
        %v3703 = vsel %vm1511, %v3698, %v3702
        %v3705 = vshrl.u32 %v3404, 16
        %v3707 = vrot.slane %v3705, 4
        %v3708 = vshll.u32 %v3404, 16
        %v3710 = vrot.slane %v3708, 5
        %v3711 = vor.u32 %v3707, %v3710
        %v3712 = vrot.slane %v3711, 4
        %v3714 = vshll.u32 %v3405, 16
        %v3716 = vrot.slane %v3714, 5
        %v3717 = vsel %vm1511, %v3712, %v3716
        %v3718 = vshrl.u32 %v3405, 16
        %v3720 = vrot.slane %v3718, 4
        %v3721 = vor.u32 %v3720, %v3716
        %v3722 = vrot.slane %v3721, 4
        %v3724 = vshll.u32 %v3406, 16
        %v3726 = vrot.slane %v3724, 5
        %v3727 = vsel %vm1511, %v3722, %v3726
        %v3729 = vshrl.u32 %v3407, 16
        %v3731 = vrot.slane %v3729, 4
        %v3732 = vshll.u32 %v3407, 16
        %v3734 = vrot.slane %v3732, 5
        %v3735 = vor.u32 %v3731, %v3734
        %v3736 = vrot.slane %v3735, 4
        %v3738 = vshll.u32 %v3408, 16
        %v3740 = vrot.slane %v3738, 5
        %v3741 = vsel %vm1511, %v3736, %v3740
        %v3742 = vshrl.u32 %v3408, 16
        %v3744 = vrot.slane %v3742, 4
        %v3745 = vor.u32 %v3744, %v3740
        %v3746 = vrot.slane %v3745, 4
        %v3748 = vshll.u32 %v3409, 16
        %v3750 = vrot.slane %v3748, 5
        %v3751 = vsel %vm1511, %v3746, %v3750
        %v3753 = vshrl.u32 %v3410, 16
        %v3755 = vrot.slane %v3753, 4
        %v3756 = vshll.u32 %v3410, 16
        %v3758 = vrot.slane %v3756, 5
        %v3759 = vor.u32 %v3755, %v3758
        %v3760 = vrot.slane %v3759, 4
        %v3762 = vshll.u32 %v3411, 16
        %v3764 = vrot.slane %v3762, 5
        %v3765 = vsel %vm1511, %v3760, %v3764
        %v3766 = vshrl.u32 %v3411, 16
        %v3768 = vrot.slane %v3766, 4
        %v3769 = vor.u32 %v3768, %v3764
        %v3770 = vrot.slane %v3769, 4
        %v3772 = vshll.u32 %v3412, 16
        %v3774 = vrot.slane %v3772, 5
        %v3775 = vsel %vm1511, %v3770, %v3774
        %v3777 = vshrl.u32 %v3413, 16
        %v3779 = vrot.slane %v3777, 4
        %v3780 = vshll.u32 %v3413, 16
        %v3782 = vrot.slane %v3780, 5
        %v3783 = vor.u32 %v3779, %v3782
        %v3784 = vrot.slane %v3783, 4
        %v3786 = vshll.u32 %v3414, 16
        %v3788 = vrot.slane %v3786, 5
        %v3789 = vsel %vm1511, %v3784, %v3788
        %v3790 = vshrl.u32 %v3414, 16
        %v3792 = vrot.slane %v3790, 4
        %v3793 = vor.u32 %v3792, %v3788
        %v3794 = vrot.slane %v3793, 4
        %v3796 = vshll.u32 %v3415, 16
        %v3798 = vrot.slane %v3796, 5
        %v3799 = vsel %vm1511, %v3794, %v3798
        %v3800 = vld [vmem:[%s3 + $0x80] sm:$0xf]
        %v3801 = vld [vmem:[%s3 + $0x84] sm:$0xf]
        %v3802 = vld [vmem:[%s3 + $0x88] sm:$0xf]
        %v3803 = vld [vmem:[%s3 + $0x8c] sm:$0xf]
        %v3804 = vld [vmem:[%s3 + $0x90] sm:$0xf]
        %v3805 = vld [vmem:[%s3 + $0x94] sm:$0xf]
        %v3806 = vld [vmem:[%s3 + $0x98] sm:$0xf]
        %v3807 = vld [vmem:[%s3 + $0x9c] sm:$0xf]
        %v3808 = vunpack.c.l.b16 %v3429
        %v3809 = vunpack.c.l.b16 %v3439
        %v3810 = vunpack.c.l.b16 %v3453
        %v3811 = vunpack.c.l.b16 %v3463
        %v3812 = vunpack.c.l.b16 %v3477
        %v3813 = vunpack.c.l.b16 %v3487
        %v3814 = vunpack.c.l.b16 %v3501
        %v3815 = vunpack.c.l.b16 %v3511
        %v3816 = vunpack.c.l.b16 %v3525
        %v3817 = vunpack.c.l.b16 %v3535
        %v3818 = vunpack.c.l.b16 %v3549
        %v3819 = vunpack.c.l.b16 %v3559
        %v3820 = vunpack.c.l.b16 %v3573
        %v3821 = vunpack.c.l.b16 %v3583
        %v3822 = vunpack.c.l.b16 %v3597
        %v3823 = vunpack.c.l.b16 %v3607
        %v3824 = vunpack.c.l.b16 %v3621
        %v3825 = vunpack.c.l.b16 %v3631
        %v3826 = vunpack.c.l.b16 %v3645
        %v3827 = vunpack.c.l.b16 %v3655
        %v3828 = vunpack.c.l.b16 %v3669
        %v3829 = vunpack.c.l.b16 %v3679
        %v3830 = vunpack.c.l.b16 %v3693
        %v3831 = vunpack.c.l.b16 %v3703
        %v3832 = vunpack.c.l.b16 %v3717
        %v3833 = vunpack.c.l.b16 %v3727
        %v3834 = vunpack.c.l.b16 %v3741
        %v3835 = vunpack.c.l.b16 %v3751
        %v3836 = vunpack.c.l.b16 %v3765
        %v3837 = vunpack.c.l.b16 %v3775
        %v3838 = vunpack.c.l.b16 %v3789
        %v3839 = vunpack.c.l.b16 %v3799
        %v3840 = vpack.c.b16 %v3809, %v3808
        %v3841 = vpack.c.b16 %v3811, %v3810
        %v3842 = vpack.c.b16 %v3813, %v3812
        %v3843 = vpack.c.b16 %v3815, %v3814
        %v3844 = vpack.c.b16 %v3817, %v3816
        %v3845 = vpack.c.b16 %v3819, %v3818
        %v3846 = vpack.c.b16 %v3821, %v3820
        %v3847 = vpack.c.b16 %v3823, %v3822
        %v3848 = vpack.c.b16 %v3825, %v3824
        %v3849 = vpack.c.b16 %v3827, %v3826
        %v3850 = vpack.c.b16 %v3829, %v3828
        %v3851 = vpack.c.b16 %v3831, %v3830
        %v3852 = vpack.c.b16 %v3833, %v3832
        %v3853 = vpack.c.b16 %v3835, %v3834
        %v3854 = vpack.c.b16 %v3837, %v3836
        %v3855 = vpack.c.b16 %v3839, %v3838
        %v3864 = vunpack.c.l.b16 %v3800
        %v3865 = vunpack.c.l.b16 %v3801
        %v3866 = vunpack.c.l.b16 %v3802
        %v3867 = vunpack.c.l.b16 %v3803
        %v3868 = vunpack.c.l.b16 %v3804
        %v3869 = vunpack.c.l.b16 %v3805
        %v3870 = vunpack.c.l.b16 %v3806
        %v3871 = vunpack.c.l.b16 %v3807
        %v3872 = vpack.c.b16 %v3865, %v3864
        %v3873 = vpack.c.b16 %v3867, %v3866
        %v3874 = vpack.c.b16 %v3869, %v3868
        %v3875 = vpack.c.b16 %v3871, %v3870
        %v3881 = vsel %vm1976, %v3840, 0
        %v3884 = vsel %vm1976, %v3841, 0
        %v3887 = vsel %vm1976, %v3842, 0
        %v3890 = vsel %vm1976, %v3843, 0
        %v3893 = vsel %vm1976, %v3844, 0
        %v3896 = vsel %vm1976, %v3845, 0
        %v3899 = vsel %vm1976, %v3846, 0
        %v3902 = vsel %vm1976, %v3847, 0
        %v3905 = vsel %vm1976, %v3848, 0
        %v3908 = vsel %vm1976, %v3849, 0
        %v3911 = vsel %vm1976, %v3850, 0
        %v3914 = vsel %vm1976, %v3851, 0
        %v3917 = vsel %vm1976, %v3852, 0
        %v3920 = vsel %vm1976, %v3853, 0
        %v3923 = vsel %vm1976, %v3854, 0
        %v3926 = vsel %vm1976, %v3855, 0
        %3928 = vmatprep.subr.bf16.mxu0 0
        %3929 = vmatpush1.bf16.msra.mxu0 0
        %3930 = vmatprep.subr.bf16.mxu0 0
        %3931 = vmatpush1.bf16.msra.mxu0 0
        %3932 = vmatprep.subr.bf16.mxu0 0
        %3933 = vmatpush1.bf16.msra.mxu0 0
        %3934 = vmatprep.subr.bf16.mxu0 0
        %3935 = vmatpush1.bf16.msra.mxu0 0
        %3936 = vmatprep.subr.bf16.mxu0 0
        %3937 = vmatpush1.bf16.msra.mxu0 %v3875
        %3938 = vmatprep.subr.bf16.mxu0 0
        %3939 = vmatpush1.bf16.msra.mxu0 %v3874
        %3940 = vmatprep.subr.bf16.mxu0 0
        %3941 = vmatpush1.bf16.msra.mxu0 %v3873
        %3942 = vmatprep.subr.bf16.mxu0 0
        %3943 = vmatpush1.bf16.msra.mxu0 %v3872
        %3944 = vmatprep.subr.bf16.mxu0 0
        %3945 = vmatpush2.bf16.msra.mxu0 0
        %3946 = vmatprep.subr.bf16.mxu0 0
        %3947 = vmatpush2.bf16.msra.mxu0 0
        %3948 = vmatprep.subr.bf16.mxu0 0
        %3949 = vmatpush2.bf16.msra.mxu0 0
        %3950 = vmatprep.subr.bf16.mxu0 0
        %3951 = vmatpush2.bf16.msra.mxu0 0
        %3952 = vmatprep.subr.bf16.mxu0 0
        %3953 = vmatpush2.bf16.msra.mxu0 0
        %3954 = vmatprep.subr.bf16.mxu0 0
        %3955 = vmatpush2.bf16.msra.mxu0 0
        %3956 = vmatprep.subr.bf16.mxu0 0
        %3957 = vmatpush2.bf16.msra.mxu0 0
        %3958 = vmatprep.subr.bf16.mxu0 0
        %3959 = vmatpush2.bf16.msra.mxu0 0
        %3960 = vmatprep.mubr.bf16.mxu0 0
        %3961 = vmatmul.mubr.bf16.gmra.mxu0 %v3881
        %v3962 = vpop.f32.mrf.mxu0
        %v3963 = vadd.f32 0.0, %v3962
        %v3964 = vpop.f32.mrf.mxu0
        %v3965 = vpop.f32.mrf.mxu0
        %v3966 = vadd.f32 0.0, %v3965
        %v3967 = vpop.f32.mrf.mxu0
        %3968 = vmatprep.mubr.bf16.mxu0 0
        %3969 = vmatmul.mubr.bf16.gmra.mxu0 %v3884
        %v3970 = vpop.f32.mrf.mxu0
        %v3971 = vadd.f32 0.0, %v3970
        %v3972 = vpop.f32.mrf.mxu0
        %v3973 = vpop.f32.mrf.mxu0
        %v3974 = vadd.f32 0.0, %v3973
        %v3975 = vpop.f32.mrf.mxu0
        %3976 = vmatprep.mubr.bf16.mxu0 0
        %3977 = vmatmul.mubr.bf16.gmra.mxu0 %v3887
        %v3978 = vpop.f32.mrf.mxu0
        %v3979 = vadd.f32 0.0, %v3978
        %v3980 = vpop.f32.mrf.mxu0
        %v3981 = vpop.f32.mrf.mxu0
        %v3982 = vadd.f32 0.0, %v3981
        %v3983 = vpop.f32.mrf.mxu0
        %3984 = vmatprep.mubr.bf16.mxu0 0
        %3985 = vmatmul.mubr.bf16.gmra.mxu0 %v3890
        %v3986 = vpop.f32.mrf.mxu0
        %v3987 = vadd.f32 0.0, %v3986
        %v3988 = vpop.f32.mrf.mxu0
        %v3989 = vpop.f32.mrf.mxu0
        %v3990 = vadd.f32 0.0, %v3989
        %v3991 = vpop.f32.mrf.mxu0
        %3992 = vmatprep.mubr.bf16.mxu0 0
        %3993 = vmatmul.mubr.bf16.gmra.mxu0 %v3893
        %v3994 = vpop.f32.mrf.mxu0
        %v3995 = vadd.f32 0.0, %v3994
        %v3996 = vpop.f32.mrf.mxu0
        %v3997 = vpop.f32.mrf.mxu0
        %v3998 = vadd.f32 0.0, %v3997
        %v3999 = vpop.f32.mrf.mxu0
        %4000 = vmatprep.mubr.bf16.mxu0 0
        %4001 = vmatmul.mubr.bf16.gmra.mxu0 %v3896
        %v4002 = vpop.f32.mrf.mxu0
        %v4003 = vadd.f32 0.0, %v4002
        %v4004 = vpop.f32.mrf.mxu0
        %v4005 = vpop.f32.mrf.mxu0
        %v4006 = vadd.f32 0.0, %v4005
        %v4007 = vpop.f32.mrf.mxu0
        %4008 = vmatprep.mubr.bf16.mxu0 0
        %4009 = vmatmul.mubr.bf16.gmra.mxu0 %v3899
        %v4010 = vpop.f32.mrf.mxu0
        %v4011 = vadd.f32 0.0, %v4010
        %v4012 = vpop.f32.mrf.mxu0
        %v4013 = vpop.f32.mrf.mxu0
        %v4014 = vadd.f32 0.0, %v4013
        %v4015 = vpop.f32.mrf.mxu0
        %4016 = vmatprep.mubr.bf16.mxu0 0
        %4017 = vmatmul.mubr.bf16.gmra.mxu0 %v3902
        %v4018 = vpop.f32.mrf.mxu0
        %v4019 = vadd.f32 0.0, %v4018
        %v4020 = vpop.f32.mrf.mxu0
        %v4021 = vpop.f32.mrf.mxu0
        %v4022 = vadd.f32 0.0, %v4021
        %v4023 = vpop.f32.mrf.mxu0
        %4024 = vmatprep.mubr.bf16.mxu0 0
        %4025 = vmatmul.mubr.bf16.gmra.mxu0 %v3905
        %v4026 = vpop.f32.mrf.mxu0
        %v4027 = vadd.f32 0.0, %v4026
        %v4028 = vpop.f32.mrf.mxu0
        %v4029 = vpop.f32.mrf.mxu0
        %v4030 = vadd.f32 0.0, %v4029
        %v4031 = vpop.f32.mrf.mxu0
        %4032 = vmatprep.mubr.bf16.mxu0 0
        %4033 = vmatmul.mubr.bf16.gmra.mxu0 %v3908
        %v4034 = vpop.f32.mrf.mxu0
        %v4035 = vadd.f32 0.0, %v4034
        %v4036 = vpop.f32.mrf.mxu0
        %v4037 = vpop.f32.mrf.mxu0
        %v4038 = vadd.f32 0.0, %v4037
        %v4039 = vpop.f32.mrf.mxu0
        %4040 = vmatprep.mubr.bf16.mxu0 0
        %4041 = vmatmul.mubr.bf16.gmra.mxu0 %v3911
        %v4042 = vpop.f32.mrf.mxu0
        %v4043 = vadd.f32 0.0, %v4042
        %v4044 = vpop.f32.mrf.mxu0
        %v4045 = vpop.f32.mrf.mxu0
        %v4046 = vadd.f32 0.0, %v4045
        %v4047 = vpop.f32.mrf.mxu0
        %4048 = vmatprep.mubr.bf16.mxu0 0
        %4049 = vmatmul.mubr.bf16.gmra.mxu0 %v3914
        %v4050 = vpop.f32.mrf.mxu0
        %v4051 = vadd.f32 0.0, %v4050
        %v4052 = vpop.f32.mrf.mxu0
        %v4053 = vpop.f32.mrf.mxu0
        %v4054 = vadd.f32 0.0, %v4053
        %v4055 = vpop.f32.mrf.mxu0
        %4056 = vmatprep.mubr.bf16.mxu0 0
        %4057 = vmatmul.mubr.bf16.gmra.mxu0 %v3917
        %v4058 = vpop.f32.mrf.mxu0
        %v4059 = vadd.f32 0.0, %v4058
        %v4060 = vpop.f32.mrf.mxu0
        %v4061 = vpop.f32.mrf.mxu0
        %v4062 = vadd.f32 0.0, %v4061
        %v4063 = vpop.f32.mrf.mxu0
        %4064 = vmatprep.mubr.bf16.mxu0 0
        %4065 = vmatmul.mubr.bf16.gmra.mxu0 %v3920
        %v4066 = vpop.f32.mrf.mxu0
        %v4067 = vadd.f32 0.0, %v4066
        %v4068 = vpop.f32.mrf.mxu0
        %v4069 = vpop.f32.mrf.mxu0
        %v4070 = vadd.f32 0.0, %v4069
        %v4071 = vpop.f32.mrf.mxu0
        %4072 = vmatprep.mubr.bf16.mxu0 0
        %4073 = vmatmul.mubr.bf16.gmra.mxu0 %v3923
        %v4074 = vpop.f32.mrf.mxu0
        %v4075 = vadd.f32 0.0, %v4074
        %v4076 = vpop.f32.mrf.mxu0
        %v4077 = vpop.f32.mrf.mxu0
        %v4078 = vadd.f32 0.0, %v4077
        %v4079 = vpop.f32.mrf.mxu0
        %4080 = vmatprep.mubr.bf16.mxu0 0
        %4081 = vmatmul.mubr.bf16.gmra.mxu0 %v3926
        %v4082 = vpop.f32.mrf.mxu0
        %v4083 = vadd.f32 0.0, %v4082
        %v4084 = vpop.f32.mrf.mxu0
        %v4085 = vpop.f32.mrf.mxu0
        %v4086 = vadd.f32 0.0, %v4085
        %v4087 = vpop.f32.mrf.mxu0
        %4088 = vdwg.mxu0
        %v4089 = vadd.f32 %v3336, %v3963
        %v4090 = vadd.f32 %v3337, %v3966
        %v4091 = vadd.f32 %v3338, %v3971
        %v4092 = vadd.f32 %v3339, %v3974
        %v4093 = vadd.f32 %v3340, %v3979
        %v4094 = vadd.f32 %v3341, %v3982
        %v4095 = vadd.f32 %v3342, %v3987
        %v4096 = vadd.f32 %v3343, %v3990
        %v4097 = vadd.f32 %v3344, %v3995
        %v4098 = vadd.f32 %v3345, %v3998
        %v4099 = vadd.f32 %v3346, %v4003
        %v4100 = vadd.f32 %v3347, %v4006
        %v4101 = vadd.f32 %v3348, %v4011
        %v4102 = vadd.f32 %v3349, %v4014
        %v4103 = vadd.f32 %v3350, %v4019
        %v4104 = vadd.f32 %v3351, %v4022
        %v4105 = vadd.f32 %v3352, %v4027
        %v4106 = vadd.f32 %v3353, %v4030
        %v4107 = vadd.f32 %v3354, %v4035
        %v4108 = vadd.f32 %v3355, %v4038
        %v4109 = vadd.f32 %v3356, %v4043
        %v4110 = vadd.f32 %v3357, %v4046
        %v4111 = vadd.f32 %v3358, %v4051
        %v4112 = vadd.f32 %v3359, %v4054
        %v4113 = vadd.f32 %v3360, %v4059
        %v4114 = vadd.f32 %v3361, %v4062
        %v4115 = vadd.f32 %v3362, %v4067
        %v4116 = vadd.f32 %v3363, %v4070
        %v4117 = vadd.f32 %v3364, %v4075
        %v4118 = vadd.f32 %v3365, %v4078
        %v4119 = vadd.f32 %v3366, %v4083
        %v4120 = vadd.f32 %v3367, %v4086
        %v4121 = vld [vmem:[%s1338] sm:$0xe]
        %v4122 = vld [vmem:[%s1338 + $0xc] sm:$0xe]
        %v4123 = vld [vmem:[%s1338 + $0x18] sm:$0xe]
        %v4124 = vld [vmem:[%s1338 + $0x24] sm:$0xe]
        %v4125 = vld [vmem:[%s1338 + $0x30] sm:$0xe]
        %v4126 = vld [vmem:[%s1338 + $0x3c] sm:$0xe]
        %v4127 = vld [vmem:[%s1338 + $0x48] sm:$0xe]
        %v4128 = vld [vmem:[%s1338 + $0x54] sm:$0xe]
        %v4129 = vld [vmem:[%s1338 + $0x60] sm:$0xe]
        %v4130 = vld [vmem:[%s1338 + $0x6c] sm:$0xe]
        %v4131 = vld [vmem:[%s1338 + $0x78] sm:$0xe]
        %v4132 = vld [vmem:[%s1338 + $0x84] sm:$0xe]
        %v4133 = vld [vmem:[%s1338 + $0x90] sm:$0xe]
        %v4134 = vld [vmem:[%s1338 + $0x9c] sm:$0xe]
        %v4135 = vld [vmem:[%s1338 + $0xa8] sm:$0xe]
        %v4136 = vld [vmem:[%s1338 + $0xb4] sm:$0xe]
        %v4185 = vrot.slane %v4121, 5
        %v4186 = vrot.slane %v4185, 4
        %v4187 = vrot.slane %v3369, 5
        %v4188 = vsel %vm2549, %v4186, %v4187
        %v4189 = vrot.slane %v4187, 4
        %v4190 = vrot.slane %v3370, 5
        %v4191 = vsel %vm2549, %v4189, %v4190
        %v4192 = vrot.slane %v4122, 5
        %v4193 = vrot.slane %v4192, 4
        %v4194 = vrot.slane %v3372, 5
        %v4195 = vsel %vm2549, %v4193, %v4194
        %v4196 = vrot.slane %v4194, 4
        %v4197 = vrot.slane %v3373, 5
        %v4198 = vsel %vm2549, %v4196, %v4197
        %v4199 = vrot.slane %v4123, 5
        %v4200 = vrot.slane %v4199, 4
        %v4201 = vrot.slane %v3375, 5
        %v4202 = vsel %vm2549, %v4200, %v4201
        %v4203 = vrot.slane %v4201, 4
        %v4204 = vrot.slane %v3376, 5
        %v4205 = vsel %vm2549, %v4203, %v4204
        %v4206 = vrot.slane %v4124, 5
        %v4207 = vrot.slane %v4206, 4
        %v4208 = vrot.slane %v3378, 5
        %v4209 = vsel %vm2549, %v4207, %v4208
        %v4210 = vrot.slane %v4208, 4
        %v4211 = vrot.slane %v3379, 5
        %v4212 = vsel %vm2549, %v4210, %v4211
        %v4213 = vrot.slane %v4125, 5
        %v4214 = vrot.slane %v4213, 4
        %v4215 = vrot.slane %v3381, 5
        %v4216 = vsel %vm2549, %v4214, %v4215
        %v4217 = vrot.slane %v4215, 4
        %v4218 = vrot.slane %v3382, 5
        %v4219 = vsel %vm2549, %v4217, %v4218
        %v4220 = vrot.slane %v4126, 5
        %v4221 = vrot.slane %v4220, 4
        %v4222 = vrot.slane %v3384, 5
        %v4223 = vsel %vm2549, %v4221, %v4222
        %v4224 = vrot.slane %v4222, 4
        %v4225 = vrot.slane %v3385, 5
        %v4226 = vsel %vm2549, %v4224, %v4225
        %v4227 = vrot.slane %v4127, 5
        %v4228 = vrot.slane %v4227, 4
        %v4229 = vrot.slane %v3387, 5
        %v4230 = vsel %vm2549, %v4228, %v4229
        %v4231 = vrot.slane %v4229, 4
        %v4232 = vrot.slane %v3388, 5
        %v4233 = vsel %vm2549, %v4231, %v4232
        %v4234 = vrot.slane %v4128, 5
        %v4235 = vrot.slane %v4234, 4
        %v4236 = vrot.slane %v3390, 5
        %v4237 = vsel %vm2549, %v4235, %v4236
        %v4238 = vrot.slane %v4236, 4
        %v4239 = vrot.slane %v3391, 5
        %v4240 = vsel %vm2549, %v4238, %v4239
        %v4241 = vrot.slane %v4129, 5
        %v4242 = vrot.slane %v4241, 4
        %v4243 = vrot.slane %v3393, 5
        %v4244 = vsel %vm2549, %v4242, %v4243
        %v4245 = vrot.slane %v4243, 4
        %v4246 = vrot.slane %v3394, 5
        %v4247 = vsel %vm2549, %v4245, %v4246
        %v4248 = vrot.slane %v4130, 5
        %v4249 = vrot.slane %v4248, 4
        %v4250 = vrot.slane %v3396, 5
        %v4251 = vsel %vm2549, %v4249, %v4250
        %v4252 = vrot.slane %v4250, 4
        %v4253 = vrot.slane %v3397, 5
        %v4254 = vsel %vm2549, %v4252, %v4253
        %v4255 = vrot.slane %v4131, 5
        %v4256 = vrot.slane %v4255, 4
        %v4257 = vrot.slane %v3399, 5
        %v4258 = vsel %vm2549, %v4256, %v4257
        %v4259 = vrot.slane %v4257, 4
        %v4260 = vrot.slane %v3400, 5
        %v4261 = vsel %vm2549, %v4259, %v4260
        %v4262 = vrot.slane %v4132, 5
        %v4263 = vrot.slane %v4262, 4
        %v4264 = vrot.slane %v3402, 5
        %v4265 = vsel %vm2549, %v4263, %v4264
        %v4266 = vrot.slane %v4264, 4
        %v4267 = vrot.slane %v3403, 5
        %v4268 = vsel %vm2549, %v4266, %v4267
        %v4269 = vrot.slane %v4133, 5
        %v4270 = vrot.slane %v4269, 4
        %v4271 = vrot.slane %v3405, 5
        %v4272 = vsel %vm2549, %v4270, %v4271
        %v4273 = vrot.slane %v4271, 4
        %v4274 = vrot.slane %v3406, 5
        %v4275 = vsel %vm2549, %v4273, %v4274
        %v4276 = vrot.slane %v4134, 5
        %v4277 = vrot.slane %v4276, 4
        %v4278 = vrot.slane %v3408, 5
        %v4279 = vsel %vm2549, %v4277, %v4278
        %v4280 = vrot.slane %v4278, 4
        %v4281 = vrot.slane %v3409, 5
        %v4282 = vsel %vm2549, %v4280, %v4281
        %v4283 = vrot.slane %v4135, 5
        %v4284 = vrot.slane %v4283, 4
        %v4285 = vrot.slane %v3411, 5
        %v4286 = vsel %vm2549, %v4284, %v4285
        %v4287 = vrot.slane %v4285, 4
        %v4288 = vrot.slane %v3412, 5
        %v4289 = vsel %vm2549, %v4287, %v4288
        %v4290 = vrot.slane %v4136, 5
        %v4291 = vrot.slane %v4290, 4
        %v4292 = vrot.slane %v3414, 5
        %v4293 = vsel %vm2549, %v4291, %v4292
        %v4294 = vrot.slane %v4292, 4
        %v4295 = vrot.slane %v3415, 5
        %v4296 = vsel %vm2549, %v4294, %v4295
        %v4297 = vld [vmem:[%s3 + $0xa0] sm:$0xf]
        %v4298 = vld [vmem:[%s3 + $0xa4] sm:$0xf]
        %v4299 = vld [vmem:[%s3 + $0xa8] sm:$0xf]
        %v4300 = vld [vmem:[%s3 + $0xac] sm:$0xf]
        %v4301 = vld [vmem:[%s3 + $0xb0] sm:$0xf]
        %v4302 = vld [vmem:[%s3 + $0xb4] sm:$0xf]
        %v4303 = vld [vmem:[%s3 + $0xb8] sm:$0xf]
        %v4304 = vld [vmem:[%s3 + $0xbc] sm:$0xf]
        %v4305 = vunpack.c.l.b16 %v4188
        %v4306 = vunpack.c.l.b16 %v4191
        %v4307 = vunpack.c.l.b16 %v4195
        %v4308 = vunpack.c.l.b16 %v4198
        %v4309 = vunpack.c.l.b16 %v4202
        %v4310 = vunpack.c.l.b16 %v4205
        %v4311 = vunpack.c.l.b16 %v4209
        %v4312 = vunpack.c.l.b16 %v4212
        %v4313 = vunpack.c.l.b16 %v4216
        %v4314 = vunpack.c.l.b16 %v4219
        %v4315 = vunpack.c.l.b16 %v4223
        %v4316 = vunpack.c.l.b16 %v4226
        %v4317 = vunpack.c.l.b16 %v4230
        %v4318 = vunpack.c.l.b16 %v4233
        %v4319 = vunpack.c.l.b16 %v4237
        %v4320 = vunpack.c.l.b16 %v4240
        %v4321 = vunpack.c.l.b16 %v4244
        %v4322 = vunpack.c.l.b16 %v4247
        %v4323 = vunpack.c.l.b16 %v4251
        %v4324 = vunpack.c.l.b16 %v4254
        %v4325 = vunpack.c.l.b16 %v4258
        %v4326 = vunpack.c.l.b16 %v4261
        %v4327 = vunpack.c.l.b16 %v4265
        %v4328 = vunpack.c.l.b16 %v4268
        %v4329 = vunpack.c.l.b16 %v4272
        %v4330 = vunpack.c.l.b16 %v4275
        %v4331 = vunpack.c.l.b16 %v4279
        %v4332 = vunpack.c.l.b16 %v4282
        %v4333 = vunpack.c.l.b16 %v4286
        %v4334 = vunpack.c.l.b16 %v4289
        %v4335 = vunpack.c.l.b16 %v4293
        %v4336 = vunpack.c.l.b16 %v4296
        %v4337 = vpack.c.b16 %v4306, %v4305
        %v4338 = vpack.c.b16 %v4308, %v4307
        %v4339 = vpack.c.b16 %v4310, %v4309
        %v4340 = vpack.c.b16 %v4312, %v4311
        %v4341 = vpack.c.b16 %v4314, %v4313
        %v4342 = vpack.c.b16 %v4316, %v4315
        %v4343 = vpack.c.b16 %v4318, %v4317
        %v4344 = vpack.c.b16 %v4320, %v4319
        %v4345 = vpack.c.b16 %v4322, %v4321
        %v4346 = vpack.c.b16 %v4324, %v4323
        %v4347 = vpack.c.b16 %v4326, %v4325
        %v4348 = vpack.c.b16 %v4328, %v4327
        %v4349 = vpack.c.b16 %v4330, %v4329
        %v4350 = vpack.c.b16 %v4332, %v4331
        %v4351 = vpack.c.b16 %v4334, %v4333
        %v4352 = vpack.c.b16 %v4336, %v4335
        %v4361 = vunpack.c.l.b16 %v4297
        %v4362 = vunpack.c.l.b16 %v4298
        %v4363 = vunpack.c.l.b16 %v4299
        %v4364 = vunpack.c.l.b16 %v4300
        %v4365 = vunpack.c.l.b16 %v4301
        %v4366 = vunpack.c.l.b16 %v4302
        %v4367 = vunpack.c.l.b16 %v4303
        %v4368 = vunpack.c.l.b16 %v4304
        %v4369 = vpack.c.b16 %v4362, %v4361
        %v4370 = vpack.c.b16 %v4364, %v4363
        %v4371 = vpack.c.b16 %v4366, %v4365
        %v4372 = vpack.c.b16 %v4368, %v4367
        %v4378 = vsel %vm1976, %v4337, 0
        %v4381 = vsel %vm1976, %v4338, 0
        %v4384 = vsel %vm1976, %v4339, 0
        %v4387 = vsel %vm1976, %v4340, 0
        %v4390 = vsel %vm1976, %v4341, 0
        %v4393 = vsel %vm1976, %v4342, 0
        %v4396 = vsel %vm1976, %v4343, 0
        %v4399 = vsel %vm1976, %v4344, 0
        %v4402 = vsel %vm1976, %v4345, 0
        %v4405 = vsel %vm1976, %v4346, 0
        %v4408 = vsel %vm1976, %v4347, 0
        %v4411 = vsel %vm1976, %v4348, 0
        %v4414 = vsel %vm1976, %v4349, 0
        %v4417 = vsel %vm1976, %v4350, 0
        %v4420 = vsel %vm1976, %v4351, 0
        %v4423 = vsel %vm1976, %v4352, 0
        %4425 = vmatprep.subr.bf16.mxu0 0
        %4426 = vmatpush1.bf16.msra.mxu0 0
        %4427 = vmatprep.subr.bf16.mxu0 0
        %4428 = vmatpush1.bf16.msra.mxu0 0
        %4429 = vmatprep.subr.bf16.mxu0 0
        %4430 = vmatpush1.bf16.msra.mxu0 0
        %4431 = vmatprep.subr.bf16.mxu0 0
        %4432 = vmatpush1.bf16.msra.mxu0 0
        %4433 = vmatprep.subr.bf16.mxu0 0
        %4434 = vmatpush1.bf16.msra.mxu0 %v4372
        %4435 = vmatprep.subr.bf16.mxu0 0
        %4436 = vmatpush1.bf16.msra.mxu0 %v4371
        %4437 = vmatprep.subr.bf16.mxu0 0
        %4438 = vmatpush1.bf16.msra.mxu0 %v4370
        %4439 = vmatprep.subr.bf16.mxu0 0
        %4440 = vmatpush1.bf16.msra.mxu0 %v4369
        %4441 = vmatprep.subr.bf16.mxu0 0
        %4442 = vmatpush2.bf16.msra.mxu0 0
        %4443 = vmatprep.subr.bf16.mxu0 0
        %4444 = vmatpush2.bf16.msra.mxu0 0
        %4445 = vmatprep.subr.bf16.mxu0 0
        %4446 = vmatpush2.bf16.msra.mxu0 0
        %4447 = vmatprep.subr.bf16.mxu0 0
        %4448 = vmatpush2.bf16.msra.mxu0 0
        %4449 = vmatprep.subr.bf16.mxu0 0
        %4450 = vmatpush2.bf16.msra.mxu0 0
        %4451 = vmatprep.subr.bf16.mxu0 0
        %4452 = vmatpush2.bf16.msra.mxu0 0
        %4453 = vmatprep.subr.bf16.mxu0 0
        %4454 = vmatpush2.bf16.msra.mxu0 0
        %4455 = vmatprep.subr.bf16.mxu0 0
        %4456 = vmatpush2.bf16.msra.mxu0 0
        %4457 = vmatprep.mubr.bf16.mxu0 0
        %4458 = vmatmul.mubr.bf16.gmra.mxu0 %v4378
        %v4459 = vpop.f32.mrf.mxu0
        %v4460 = vadd.f32 0.0, %v4459
        %v4461 = vpop.f32.mrf.mxu0
        %v4462 = vpop.f32.mrf.mxu0
        %v4463 = vadd.f32 0.0, %v4462
        %v4464 = vpop.f32.mrf.mxu0
        %4465 = vmatprep.mubr.bf16.mxu0 0
        %4466 = vmatmul.mubr.bf16.gmra.mxu0 %v4381
        %v4467 = vpop.f32.mrf.mxu0
        %v4468 = vadd.f32 0.0, %v4467
        %v4469 = vpop.f32.mrf.mxu0
        %v4470 = vpop.f32.mrf.mxu0
        %v4471 = vadd.f32 0.0, %v4470
        %v4472 = vpop.f32.mrf.mxu0
        %4473 = vmatprep.mubr.bf16.mxu0 0
        %4474 = vmatmul.mubr.bf16.gmra.mxu0 %v4384
        %v4475 = vpop.f32.mrf.mxu0
        %v4476 = vadd.f32 0.0, %v4475
        %v4477 = vpop.f32.mrf.mxu0
        %v4478 = vpop.f32.mrf.mxu0
        %v4479 = vadd.f32 0.0, %v4478
        %v4480 = vpop.f32.mrf.mxu0
        %4481 = vmatprep.mubr.bf16.mxu0 0
        %4482 = vmatmul.mubr.bf16.gmra.mxu0 %v4387
        %v4483 = vpop.f32.mrf.mxu0
        %v4484 = vadd.f32 0.0, %v4483
        %v4485 = vpop.f32.mrf.mxu0
        %v4486 = vpop.f32.mrf.mxu0
        %v4487 = vadd.f32 0.0, %v4486
        %v4488 = vpop.f32.mrf.mxu0
        %4489 = vmatprep.mubr.bf16.mxu0 0
        %4490 = vmatmul.mubr.bf16.gmra.mxu0 %v4390
        %v4491 = vpop.f32.mrf.mxu0
        %v4492 = vadd.f32 0.0, %v4491
        %v4493 = vpop.f32.mrf.mxu0
        %v4494 = vpop.f32.mrf.mxu0
        %v4495 = vadd.f32 0.0, %v4494
        %v4496 = vpop.f32.mrf.mxu0
        %4497 = vmatprep.mubr.bf16.mxu0 0
        %4498 = vmatmul.mubr.bf16.gmra.mxu0 %v4393
        %v4499 = vpop.f32.mrf.mxu0
        %v4500 = vadd.f32 0.0, %v4499
        %v4501 = vpop.f32.mrf.mxu0
        %v4502 = vpop.f32.mrf.mxu0
        %v4503 = vadd.f32 0.0, %v4502
        %v4504 = vpop.f32.mrf.mxu0
        %4505 = vmatprep.mubr.bf16.mxu0 0
        %4506 = vmatmul.mubr.bf16.gmra.mxu0 %v4396
        %v4507 = vpop.f32.mrf.mxu0
        %v4508 = vadd.f32 0.0, %v4507
        %v4509 = vpop.f32.mrf.mxu0
        %v4510 = vpop.f32.mrf.mxu0
        %v4511 = vadd.f32 0.0, %v4510
        %v4512 = vpop.f32.mrf.mxu0
        %4513 = vmatprep.mubr.bf16.mxu0 0
        %4514 = vmatmul.mubr.bf16.gmra.mxu0 %v4399
        %v4515 = vpop.f32.mrf.mxu0
        %v4516 = vadd.f32 0.0, %v4515
        %v4517 = vpop.f32.mrf.mxu0
        %v4518 = vpop.f32.mrf.mxu0
        %v4519 = vadd.f32 0.0, %v4518
        %v4520 = vpop.f32.mrf.mxu0
        %4521 = vmatprep.mubr.bf16.mxu0 0
        %4522 = vmatmul.mubr.bf16.gmra.mxu0 %v4402
        %v4523 = vpop.f32.mrf.mxu0
        %v4524 = vadd.f32 0.0, %v4523
        %v4525 = vpop.f32.mrf.mxu0
        %v4526 = vpop.f32.mrf.mxu0
        %v4527 = vadd.f32 0.0, %v4526
        %v4528 = vpop.f32.mrf.mxu0
        %4529 = vmatprep.mubr.bf16.mxu0 0
        %4530 = vmatmul.mubr.bf16.gmra.mxu0 %v4405
        %v4531 = vpop.f32.mrf.mxu0
        %v4532 = vadd.f32 0.0, %v4531
        %v4533 = vpop.f32.mrf.mxu0
        %v4534 = vpop.f32.mrf.mxu0
        %v4535 = vadd.f32 0.0, %v4534
        %v4536 = vpop.f32.mrf.mxu0
        %4537 = vmatprep.mubr.bf16.mxu0 0
        %4538 = vmatmul.mubr.bf16.gmra.mxu0 %v4408
        %v4539 = vpop.f32.mrf.mxu0
        %v4540 = vadd.f32 0.0, %v4539
        %v4541 = vpop.f32.mrf.mxu0
        %v4542 = vpop.f32.mrf.mxu0
        %v4543 = vadd.f32 0.0, %v4542
        %v4544 = vpop.f32.mrf.mxu0
        %4545 = vmatprep.mubr.bf16.mxu0 0
        %4546 = vmatmul.mubr.bf16.gmra.mxu0 %v4411
        %v4547 = vpop.f32.mrf.mxu0
        %v4548 = vadd.f32 0.0, %v4547
        %v4549 = vpop.f32.mrf.mxu0
        %v4550 = vpop.f32.mrf.mxu0
        %v4551 = vadd.f32 0.0, %v4550
        %v4552 = vpop.f32.mrf.mxu0
        %4553 = vmatprep.mubr.bf16.mxu0 0
        %4554 = vmatmul.mubr.bf16.gmra.mxu0 %v4414
        %v4555 = vpop.f32.mrf.mxu0
        %v4556 = vadd.f32 0.0, %v4555
        %v4557 = vpop.f32.mrf.mxu0
        %v4558 = vpop.f32.mrf.mxu0
        %v4559 = vadd.f32 0.0, %v4558
        %v4560 = vpop.f32.mrf.mxu0
        %4561 = vmatprep.mubr.bf16.mxu0 0
        %4562 = vmatmul.mubr.bf16.gmra.mxu0 %v4417
        %v4563 = vpop.f32.mrf.mxu0
        %v4564 = vadd.f32 0.0, %v4563
        %v4565 = vpop.f32.mrf.mxu0
        %v4566 = vpop.f32.mrf.mxu0
        %v4567 = vadd.f32 0.0, %v4566
        %v4568 = vpop.f32.mrf.mxu0
        %4569 = vmatprep.mubr.bf16.mxu0 0
        %4570 = vmatmul.mubr.bf16.gmra.mxu0 %v4420
        %v4571 = vpop.f32.mrf.mxu0
        %v4572 = vadd.f32 0.0, %v4571
        %v4573 = vpop.f32.mrf.mxu0
        %v4574 = vpop.f32.mrf.mxu0
        %v4575 = vadd.f32 0.0, %v4574
        %v4576 = vpop.f32.mrf.mxu0
        %4577 = vmatprep.mubr.bf16.mxu0 0
        %4578 = vmatmul.mubr.bf16.gmra.mxu0 %v4423
        %v4579 = vpop.f32.mrf.mxu0
        %v4580 = vadd.f32 0.0, %v4579
        %v4581 = vpop.f32.mrf.mxu0
        %v4582 = vpop.f32.mrf.mxu0
        %v4583 = vadd.f32 0.0, %v4582
        %v4584 = vpop.f32.mrf.mxu0
        %4585 = vdwg.mxu0
        %v4586 = vadd.f32 %v4089, %v4460
        %v4587 = vadd.f32 %v4090, %v4463
        %v4588 = vadd.f32 %v4091, %v4468
        %v4589 = vadd.f32 %v4092, %v4471
        %v4590 = vadd.f32 %v4093, %v4476
        %v4591 = vadd.f32 %v4094, %v4479
        %v4592 = vadd.f32 %v4095, %v4484
        %v4593 = vadd.f32 %v4096, %v4487
        %v4594 = vadd.f32 %v4097, %v4492
        %v4595 = vadd.f32 %v4098, %v4495
        %v4596 = vadd.f32 %v4099, %v4500
        %v4597 = vadd.f32 %v4100, %v4503
        %v4598 = vadd.f32 %v4101, %v4508
        %v4599 = vadd.f32 %v4102, %v4511
        %v4600 = vadd.f32 %v4103, %v4516
        %v4601 = vadd.f32 %v4104, %v4519
        %v4602 = vadd.f32 %v4105, %v4524
        %v4603 = vadd.f32 %v4106, %v4527
        %v4604 = vadd.f32 %v4107, %v4532
        %v4605 = vadd.f32 %v4108, %v4535
        %v4606 = vadd.f32 %v4109, %v4540
        %v4607 = vadd.f32 %v4110, %v4543
        %v4608 = vadd.f32 %v4111, %v4548
        %v4609 = vadd.f32 %v4112, %v4551
        %v4610 = vadd.f32 %v4113, %v4556
        %v4611 = vadd.f32 %v4114, %v4559
        %v4612 = vadd.f32 %v4115, %v4564
        %v4613 = vadd.f32 %v4116, %v4567
        %v4614 = vadd.f32 %v4117, %v4572
        %v4615 = vadd.f32 %v4118, %v4575
        %v4616 = vadd.f32 %v4119, %v4580
        %v4617 = vadd.f32 %v4120, %v4583
        %s4618 = scalar_lea.vmem [#allocation2], 24
        %v4619 = vld [vmem:[%s4618] sm:$0xf]
        %v4620 = vld [vmem:[%s4618 + $0x4] sm:$0xf]
        %v4621 = vld [vmem:[%s4618 + $0xc] sm:$0xf]
        %v4622 = vld [vmem:[%s4618 + $0x10] sm:$0xf]
        %v4623 = vld [vmem:[%s4618 + $0x18] sm:$0xf]
        %v4624 = vld [vmem:[%s4618 + $0x1c] sm:$0xf]
        %v4625 = vld [vmem:[%s4618 + $0x24] sm:$0xf]
        %v4626 = vld [vmem:[%s4618 + $0x28] sm:$0xf]
        %v4627 = vld [vmem:[%s4618 + $0x30] sm:$0xf]
        %v4628 = vld [vmem:[%s4618 + $0x34] sm:$0xf]
        %v4629 = vld [vmem:[%s4618 + $0x3c] sm:$0xf]
        %v4630 = vld [vmem:[%s4618 + $0x40] sm:$0xf]
        %v4631 = vld [vmem:[%s4618 + $0x48] sm:$0xf]
        %v4632 = vld [vmem:[%s4618 + $0x4c] sm:$0xf]
        %v4633 = vld [vmem:[%s4618 + $0x54] sm:$0xf]
        %v4634 = vld [vmem:[%s4618 + $0x58] sm:$0xf]
        %v4635 = vld [vmem:[%s4618 + $0x60] sm:$0xf]
        %v4636 = vld [vmem:[%s4618 + $0x64] sm:$0xf]
        %v4637 = vld [vmem:[%s4618 + $0x6c] sm:$0xf]
        %v4638 = vld [vmem:[%s4618 + $0x70] sm:$0xf]
        %v4639 = vld [vmem:[%s4618 + $0x78] sm:$0xf]
        %v4640 = vld [vmem:[%s4618 + $0x7c] sm:$0xf]
        %v4641 = vld [vmem:[%s4618 + $0x84] sm:$0xf]
        %v4642 = vld [vmem:[%s4618 + $0x88] sm:$0xf]
        %v4643 = vld [vmem:[%s4618 + $0x90] sm:$0xf]
        %v4644 = vld [vmem:[%s4618 + $0x94] sm:$0xf]
        %v4645 = vld [vmem:[%s4618 + $0x9c] sm:$0xf]
        %v4646 = vld [vmem:[%s4618 + $0xa0] sm:$0xf]
        %v4647 = vld [vmem:[%s4618 + $0xa8] sm:$0xf]
        %v4648 = vld [vmem:[%s4618 + $0xac] sm:$0xf]
        %v4649 = vld [vmem:[%s4618 + $0xb4] sm:$0xf]
        %v4650 = vld [vmem:[%s4618 + $0xb8] sm:$0xf]
        %v4651 = vld [vmem:[%s3 + $0xc0] sm:$0xf]
        %v4652 = vld [vmem:[%s3 + $0xc4] sm:$0xf]
        %v4653 = vld [vmem:[%s3 + $0xc8] sm:$0xf]
        %v4654 = vld [vmem:[%s3 + $0xcc] sm:$0xf]
        %v4655 = vld [vmem:[%s3 + $0xd0] sm:$0xf]
        %v4656 = vld [vmem:[%s3 + $0xd4] sm:$0xf]
        %v4657 = vld [vmem:[%s3 + $0xd8] sm:$0xf]
        %v4658 = vld [vmem:[%s3 + $0xdc] sm:$0xf]
        %v4691 = vunpack.c.l.b16 %v4619
        %v4692 = vunpack.c.l.b16 %v4620
        %v4693 = vunpack.c.l.b16 %v4621
        %v4694 = vunpack.c.l.b16 %v4622
        %v4695 = vunpack.c.l.b16 %v4623
        %v4696 = vunpack.c.l.b16 %v4624
        %v4697 = vunpack.c.l.b16 %v4625
        %v4698 = vunpack.c.l.b16 %v4626
        %v4699 = vunpack.c.l.b16 %v4627
        %v4700 = vunpack.c.l.b16 %v4628
        %v4701 = vunpack.c.l.b16 %v4629
        %v4702 = vunpack.c.l.b16 %v4630
        %v4703 = vunpack.c.l.b16 %v4631
        %v4704 = vunpack.c.l.b16 %v4632
        %v4705 = vunpack.c.l.b16 %v4633
        %v4706 = vunpack.c.l.b16 %v4634
        %v4707 = vunpack.c.l.b16 %v4635
        %v4708 = vunpack.c.l.b16 %v4636
        %v4709 = vunpack.c.l.b16 %v4637
        %v4710 = vunpack.c.l.b16 %v4638
        %v4711 = vunpack.c.l.b16 %v4639
        %v4712 = vunpack.c.l.b16 %v4640
        %v4713 = vunpack.c.l.b16 %v4641
        %v4714 = vunpack.c.l.b16 %v4642
        %v4715 = vunpack.c.l.b16 %v4643
        %v4716 = vunpack.c.l.b16 %v4644
        %v4717 = vunpack.c.l.b16 %v4645
        %v4718 = vunpack.c.l.b16 %v4646
        %v4719 = vunpack.c.l.b16 %v4647
        %v4720 = vunpack.c.l.b16 %v4648
        %v4721 = vunpack.c.l.b16 %v4649
        %v4722 = vunpack.c.l.b16 %v4650
        %v4723 = vpack.c.b16 %v4692, %v4691
        %v4724 = vpack.c.b16 %v4694, %v4693
        %v4725 = vpack.c.b16 %v4696, %v4695
        %v4726 = vpack.c.b16 %v4698, %v4697
        %v4727 = vpack.c.b16 %v4700, %v4699
        %v4728 = vpack.c.b16 %v4702, %v4701
        %v4729 = vpack.c.b16 %v4704, %v4703
        %v4730 = vpack.c.b16 %v4706, %v4705
        %v4731 = vpack.c.b16 %v4708, %v4707
        %v4732 = vpack.c.b16 %v4710, %v4709
        %v4733 = vpack.c.b16 %v4712, %v4711
        %v4734 = vpack.c.b16 %v4714, %v4713
        %v4735 = vpack.c.b16 %v4716, %v4715
        %v4736 = vpack.c.b16 %v4718, %v4717
        %v4737 = vpack.c.b16 %v4720, %v4719
        %v4738 = vpack.c.b16 %v4722, %v4721
        %v4747 = vunpack.c.l.b16 %v4651
        %v4748 = vunpack.c.l.b16 %v4652
        %v4749 = vunpack.c.l.b16 %v4653
        %v4750 = vunpack.c.l.b16 %v4654
        %v4751 = vunpack.c.l.b16 %v4655
        %v4752 = vunpack.c.l.b16 %v4656
        %v4753 = vunpack.c.l.b16 %v4657
        %v4754 = vunpack.c.l.b16 %v4658
        %v4755 = vpack.c.b16 %v4748, %v4747
        %v4756 = vpack.c.b16 %v4750, %v4749
        %v4757 = vpack.c.b16 %v4752, %v4751
        %v4758 = vpack.c.b16 %v4754, %v4753
        %v4764 = vsel %vm1976, %v4723, 0
        %v4767 = vsel %vm1976, %v4724, 0
        %v4770 = vsel %vm1976, %v4725, 0
        %v4773 = vsel %vm1976, %v4726, 0
        %v4776 = vsel %vm1976, %v4727, 0
        %v4779 = vsel %vm1976, %v4728, 0
        %v4782 = vsel %vm1976, %v4729, 0
        %v4785 = vsel %vm1976, %v4730, 0
        %v4788 = vsel %vm1976, %v4731, 0
        %v4791 = vsel %vm1976, %v4732, 0
        %v4794 = vsel %vm1976, %v4733, 0
        %v4797 = vsel %vm1976, %v4734, 0
        %v4800 = vsel %vm1976, %v4735, 0
        %v4803 = vsel %vm1976, %v4736, 0
        %v4806 = vsel %vm1976, %v4737, 0
        %v4809 = vsel %vm1976, %v4738, 0
        %4811 = vmatprep.subr.bf16.mxu0 0
        %4812 = vmatpush1.bf16.msra.mxu0 0
        %4813 = vmatprep.subr.bf16.mxu0 0
        %4814 = vmatpush1.bf16.msra.mxu0 0
        %4815 = vmatprep.subr.bf16.mxu0 0
        %4816 = vmatpush1.bf16.msra.mxu0 0
        %4817 = vmatprep.subr.bf16.mxu0 0
        %4818 = vmatpush1.bf16.msra.mxu0 0
        %4819 = vmatprep.subr.bf16.mxu0 0
        %4820 = vmatpush1.bf16.msra.mxu0 %v4758
        %4821 = vmatprep.subr.bf16.mxu0 0
        %4822 = vmatpush1.bf16.msra.mxu0 %v4757
        %4823 = vmatprep.subr.bf16.mxu0 0
        %4824 = vmatpush1.bf16.msra.mxu0 %v4756
        %4825 = vmatprep.subr.bf16.mxu0 0
        %4826 = vmatpush1.bf16.msra.mxu0 %v4755
        %4827 = vmatprep.subr.bf16.mxu0 0
        %4828 = vmatpush2.bf16.msra.mxu0 0
        %4829 = vmatprep.subr.bf16.mxu0 0
        %4830 = vmatpush2.bf16.msra.mxu0 0
        %4831 = vmatprep.subr.bf16.mxu0 0
        %4832 = vmatpush2.bf16.msra.mxu0 0
        %4833 = vmatprep.subr.bf16.mxu0 0
        %4834 = vmatpush2.bf16.msra.mxu0 0
        %4835 = vmatprep.subr.bf16.mxu0 0
        %4836 = vmatpush2.bf16.msra.mxu0 0
        %4837 = vmatprep.subr.bf16.mxu0 0
        %4838 = vmatpush2.bf16.msra.mxu0 0
        %4839 = vmatprep.subr.bf16.mxu0 0
        %4840 = vmatpush2.bf16.msra.mxu0 0
        %4841 = vmatprep.subr.bf16.mxu0 0
        %4842 = vmatpush2.bf16.msra.mxu0 0
        %4843 = vmatprep.mubr.bf16.mxu0 0
        %4844 = vmatmul.mubr.bf16.gmra.mxu0 %v4764
        %v4845 = vpop.f32.mrf.mxu0
        %v4846 = vadd.f32 0.0, %v4845
        %v4847 = vpop.f32.mrf.mxu0
        %v4848 = vpop.f32.mrf.mxu0
        %v4849 = vadd.f32 0.0, %v4848
        %v4850 = vpop.f32.mrf.mxu0
        %4851 = vmatprep.mubr.bf16.mxu0 0
        %4852 = vmatmul.mubr.bf16.gmra.mxu0 %v4767
        %v4853 = vpop.f32.mrf.mxu0
        %v4854 = vadd.f32 0.0, %v4853
        %v4855 = vpop.f32.mrf.mxu0
        %v4856 = vpop.f32.mrf.mxu0
        %v4857 = vadd.f32 0.0, %v4856
        %v4858 = vpop.f32.mrf.mxu0
        %4859 = vmatprep.mubr.bf16.mxu0 0
        %4860 = vmatmul.mubr.bf16.gmra.mxu0 %v4770
        %v4861 = vpop.f32.mrf.mxu0
        %v4862 = vadd.f32 0.0, %v4861
        %v4863 = vpop.f32.mrf.mxu0
        %v4864 = vpop.f32.mrf.mxu0
        %v4865 = vadd.f32 0.0, %v4864
        %v4866 = vpop.f32.mrf.mxu0
        %4867 = vmatprep.mubr.bf16.mxu0 0
        %4868 = vmatmul.mubr.bf16.gmra.mxu0 %v4773
        %v4869 = vpop.f32.mrf.mxu0
        %v4870 = vadd.f32 0.0, %v4869
        %v4871 = vpop.f32.mrf.mxu0
        %v4872 = vpop.f32.mrf.mxu0
        %v4873 = vadd.f32 0.0, %v4872
        %v4874 = vpop.f32.mrf.mxu0
        %4875 = vmatprep.mubr.bf16.mxu0 0
        %4876 = vmatmul.mubr.bf16.gmra.mxu0 %v4776
        %v4877 = vpop.f32.mrf.mxu0
        %v4878 = vadd.f32 0.0, %v4877
        %v4879 = vpop.f32.mrf.mxu0
        %v4880 = vpop.f32.mrf.mxu0
        %v4881 = vadd.f32 0.0, %v4880
        %v4882 = vpop.f32.mrf.mxu0
        %4883 = vmatprep.mubr.bf16.mxu0 0
        %4884 = vmatmul.mubr.bf16.gmra.mxu0 %v4779
        %v4885 = vpop.f32.mrf.mxu0
        %v4886 = vadd.f32 0.0, %v4885
        %v4887 = vpop.f32.mrf.mxu0
        %v4888 = vpop.f32.mrf.mxu0
        %v4889 = vadd.f32 0.0, %v4888
        %v4890 = vpop.f32.mrf.mxu0
        %4891 = vmatprep.mubr.bf16.mxu0 0
        %4892 = vmatmul.mubr.bf16.gmra.mxu0 %v4782
        %v4893 = vpop.f32.mrf.mxu0
        %v4894 = vadd.f32 0.0, %v4893
        %v4895 = vpop.f32.mrf.mxu0
        %v4896 = vpop.f32.mrf.mxu0
        %v4897 = vadd.f32 0.0, %v4896
        %v4898 = vpop.f32.mrf.mxu0
        %4899 = vmatprep.mubr.bf16.mxu0 0
        %4900 = vmatmul.mubr.bf16.gmra.mxu0 %v4785
        %v4901 = vpop.f32.mrf.mxu0
        %v4902 = vadd.f32 0.0, %v4901
        %v4903 = vpop.f32.mrf.mxu0
        %v4904 = vpop.f32.mrf.mxu0
        %v4905 = vadd.f32 0.0, %v4904
        %v4906 = vpop.f32.mrf.mxu0
        %4907 = vmatprep.mubr.bf16.mxu0 0
        %4908 = vmatmul.mubr.bf16.gmra.mxu0 %v4788
        %v4909 = vpop.f32.mrf.mxu0
        %v4910 = vadd.f32 0.0, %v4909
        %v4911 = vpop.f32.mrf.mxu0
        %v4912 = vpop.f32.mrf.mxu0
        %v4913 = vadd.f32 0.0, %v4912
        %v4914 = vpop.f32.mrf.mxu0
        %4915 = vmatprep.mubr.bf16.mxu0 0
        %4916 = vmatmul.mubr.bf16.gmra.mxu0 %v4791
        %v4917 = vpop.f32.mrf.mxu0
        %v4918 = vadd.f32 0.0, %v4917
        %v4919 = vpop.f32.mrf.mxu0
        %v4920 = vpop.f32.mrf.mxu0
        %v4921 = vadd.f32 0.0, %v4920
        %v4922 = vpop.f32.mrf.mxu0
        %4923 = vmatprep.mubr.bf16.mxu0 0
        %4924 = vmatmul.mubr.bf16.gmra.mxu0 %v4794
        %v4925 = vpop.f32.mrf.mxu0
        %v4926 = vadd.f32 0.0, %v4925
        %v4927 = vpop.f32.mrf.mxu0
        %v4928 = vpop.f32.mrf.mxu0
        %v4929 = vadd.f32 0.0, %v4928
        %v4930 = vpop.f32.mrf.mxu0
        %4931 = vmatprep.mubr.bf16.mxu0 0
        %4932 = vmatmul.mubr.bf16.gmra.mxu0 %v4797
        %v4933 = vpop.f32.mrf.mxu0
        %v4934 = vadd.f32 0.0, %v4933
        %v4935 = vpop.f32.mrf.mxu0
        %v4936 = vpop.f32.mrf.mxu0
        %v4937 = vadd.f32 0.0, %v4936
        %v4938 = vpop.f32.mrf.mxu0
        %4939 = vmatprep.mubr.bf16.mxu0 0
        %4940 = vmatmul.mubr.bf16.gmra.mxu0 %v4800
        %v4941 = vpop.f32.mrf.mxu0
        %v4942 = vadd.f32 0.0, %v4941
        %v4943 = vpop.f32.mrf.mxu0
        %v4944 = vpop.f32.mrf.mxu0
        %v4945 = vadd.f32 0.0, %v4944
        %v4946 = vpop.f32.mrf.mxu0
        %4947 = vmatprep.mubr.bf16.mxu0 0
        %4948 = vmatmul.mubr.bf16.gmra.mxu0 %v4803
        %v4949 = vpop.f32.mrf.mxu0
        %v4950 = vadd.f32 0.0, %v4949
        %v4951 = vpop.f32.mrf.mxu0
        %v4952 = vpop.f32.mrf.mxu0
        %v4953 = vadd.f32 0.0, %v4952
        %v4954 = vpop.f32.mrf.mxu0
        %4955 = vmatprep.mubr.bf16.mxu0 0
        %4956 = vmatmul.mubr.bf16.gmra.mxu0 %v4806
        %v4957 = vpop.f32.mrf.mxu0
        %v4958 = vadd.f32 0.0, %v4957
        %v4959 = vpop.f32.mrf.mxu0
        %v4960 = vpop.f32.mrf.mxu0
        %v4961 = vadd.f32 0.0, %v4960
        %v4962 = vpop.f32.mrf.mxu0
        %4963 = vmatprep.mubr.bf16.mxu0 0
        %4964 = vmatmul.mubr.bf16.gmra.mxu0 %v4809
        %v4965 = vpop.f32.mrf.mxu0
        %v4966 = vadd.f32 0.0, %v4965
        %v4967 = vpop.f32.mrf.mxu0
        %v4968 = vpop.f32.mrf.mxu0
        %v4969 = vadd.f32 0.0, %v4968
        %v4970 = vpop.f32.mrf.mxu0
        %4971 = vdwg.mxu0
        %v4972 = vadd.f32 %v4586, %v4846
        %v4973 = vadd.f32 %v4587, %v4849
        %v4974 = vadd.f32 %v4588, %v4854
        %v4975 = vadd.f32 %v4589, %v4857
        %v4976 = vadd.f32 %v4590, %v4862
        %v4977 = vadd.f32 %v4591, %v4865
        %v4978 = vadd.f32 %v4592, %v4870
        %v4979 = vadd.f32 %v4593, %v4873
        %v4980 = vadd.f32 %v4594, %v4878
        %v4981 = vadd.f32 %v4595, %v4881
        %v4982 = vadd.f32 %v4596, %v4886
        %v4983 = vadd.f32 %v4597, %v4889
        %v4984 = vadd.f32 %v4598, %v4894
        %v4985 = vadd.f32 %v4599, %v4897
        %v4986 = vadd.f32 %v4600, %v4902
        %v4987 = vadd.f32 %v4601, %v4905
        %v4988 = vadd.f32 %v4602, %v4910
        %v4989 = vadd.f32 %v4603, %v4913
        %v4990 = vadd.f32 %v4604, %v4918
        %v4991 = vadd.f32 %v4605, %v4921
        %v4992 = vadd.f32 %v4606, %v4926
        %v4993 = vadd.f32 %v4607, %v4929
        %v4994 = vadd.f32 %v4608, %v4934
        %v4995 = vadd.f32 %v4609, %v4937
        %v4996 = vadd.f32 %v4610, %v4942
        %v4997 = vadd.f32 %v4611, %v4945
        %v4998 = vadd.f32 %v4612, %v4950
        %v4999 = vadd.f32 %v4613, %v4953
        %v5000 = vadd.f32 %v4614, %v4958
        %v5001 = vadd.f32 %v4615, %v4961
        %v5002 = vadd.f32 %v4616, %v4966
        %v5003 = vadd.f32 %v4617, %v4969
        %v5004 = vld [vmem:[%s4618] sm:$0xf]
        %v5005 = vld [vmem:[%s4618 + $0x4] sm:$0xf]
        %v5006 = vld [vmem:[%s4618 + $0x8] sm:$0x1]
        %v5007 = vld [vmem:[%s4618 + $0xc] sm:$0xf]
        %v5008 = vld [vmem:[%s4618 + $0x10] sm:$0xf]
        %v5009 = vld [vmem:[%s4618 + $0x14] sm:$0x1]
        %v5010 = vld [vmem:[%s4618 + $0x18] sm:$0xf]
        %v5011 = vld [vmem:[%s4618 + $0x1c] sm:$0xf]
        %v5012 = vld [vmem:[%s4618 + $0x20] sm:$0x1]
        %v5013 = vld [vmem:[%s4618 + $0x24] sm:$0xf]
        %v5014 = vld [vmem:[%s4618 + $0x28] sm:$0xf]
        %v5015 = vld [vmem:[%s4618 + $0x2c] sm:$0x1]
        %v5016 = vld [vmem:[%s4618 + $0x30] sm:$0xf]
        %v5017 = vld [vmem:[%s4618 + $0x34] sm:$0xf]
        %v5018 = vld [vmem:[%s4618 + $0x38] sm:$0x1]
        %v5019 = vld [vmem:[%s4618 + $0x3c] sm:$0xf]
        %v5020 = vld [vmem:[%s4618 + $0x40] sm:$0xf]
        %v5021 = vld [vmem:[%s4618 + $0x44] sm:$0x1]
        %v5022 = vld [vmem:[%s4618 + $0x48] sm:$0xf]
        %v5023 = vld [vmem:[%s4618 + $0x4c] sm:$0xf]
        %v5024 = vld [vmem:[%s4618 + $0x50] sm:$0x1]
        %v5025 = vld [vmem:[%s4618 + $0x54] sm:$0xf]
        %v5026 = vld [vmem:[%s4618 + $0x58] sm:$0xf]
        %v5027 = vld [vmem:[%s4618 + $0x5c] sm:$0x1]
        %v5028 = vld [vmem:[%s4618 + $0x60] sm:$0xf]
        %v5029 = vld [vmem:[%s4618 + $0x64] sm:$0xf]
        %v5030 = vld [vmem:[%s4618 + $0x68] sm:$0x1]
        %v5031 = vld [vmem:[%s4618 + $0x6c] sm:$0xf]
        %v5032 = vld [vmem:[%s4618 + $0x70] sm:$0xf]
        %v5033 = vld [vmem:[%s4618 + $0x74] sm:$0x1]
        %v5034 = vld [vmem:[%s4618 + $0x78] sm:$0xf]
        %v5035 = vld [vmem:[%s4618 + $0x7c] sm:$0xf]
        %v5036 = vld [vmem:[%s4618 + $0x80] sm:$0x1]
        %v5037 = vld [vmem:[%s4618 + $0x84] sm:$0xf]
        %v5038 = vld [vmem:[%s4618 + $0x88] sm:$0xf]
        %v5039 = vld [vmem:[%s4618 + $0x8c] sm:$0x1]
        %v5040 = vld [vmem:[%s4618 + $0x90] sm:$0xf]
        %v5041 = vld [vmem:[%s4618 + $0x94] sm:$0xf]
        %v5042 = vld [vmem:[%s4618 + $0x98] sm:$0x1]
        %v5043 = vld [vmem:[%s4618 + $0x9c] sm:$0xf]
        %v5044 = vld [vmem:[%s4618 + $0xa0] sm:$0xf]
        %v5045 = vld [vmem:[%s4618 + $0xa4] sm:$0x1]
        %v5046 = vld [vmem:[%s4618 + $0xa8] sm:$0xf]
        %v5047 = vld [vmem:[%s4618 + $0xac] sm:$0xf]
        %v5048 = vld [vmem:[%s4618 + $0xb0] sm:$0x1]
        %v5049 = vld [vmem:[%s4618 + $0xb4] sm:$0xf]
        %v5050 = vld [vmem:[%s4618 + $0xb8] sm:$0xf]
        %v5051 = vld [vmem:[%s4618 + $0xbc] sm:$0x1]
        %v5053 = vshrl.u32 %v5004, 16
        %v5055 = vrot.slane %v5053, 4
        %v5056 = vshll.u32 %v5004, 16
        %v5058 = vrot.slane %v5056, 5
        %v5059 = vor.u32 %v5055, %v5058
        %v5060 = vrot.slane %v5059, 4
        %v5062 = vshll.u32 %v5005, 16
        %v5064 = vrot.slane %v5062, 5
        %v5065 = vsel %vm1511, %v5060, %v5064
        %v5066 = vshrl.u32 %v5005, 16
        %v5068 = vrot.slane %v5066, 4
        %v5069 = vor.u32 %v5068, %v5064
        %v5070 = vrot.slane %v5069, 4
        %v5072 = vshll.u32 %v5006, 16
        %v5074 = vrot.slane %v5072, 5
        %v5075 = vsel %vm1511, %v5070, %v5074
        %v5077 = vshrl.u32 %v5007, 16
        %v5079 = vrot.slane %v5077, 4
        %v5080 = vshll.u32 %v5007, 16
        %v5082 = vrot.slane %v5080, 5
        %v5083 = vor.u32 %v5079, %v5082
        %v5084 = vrot.slane %v5083, 4
        %v5086 = vshll.u32 %v5008, 16
        %v5088 = vrot.slane %v5086, 5
        %v5089 = vsel %vm1511, %v5084, %v5088
        %v5090 = vshrl.u32 %v5008, 16
        %v5092 = vrot.slane %v5090, 4
        %v5093 = vor.u32 %v5092, %v5088
        %v5094 = vrot.slane %v5093, 4
        %v5096 = vshll.u32 %v5009, 16
        %v5098 = vrot.slane %v5096, 5
        %v5099 = vsel %vm1511, %v5094, %v5098
        %v5101 = vshrl.u32 %v5010, 16
        %v5103 = vrot.slane %v5101, 4
        %v5104 = vshll.u32 %v5010, 16
        %v5106 = vrot.slane %v5104, 5
        %v5107 = vor.u32 %v5103, %v5106
        %v5108 = vrot.slane %v5107, 4
        %v5110 = vshll.u32 %v5011, 16
        %v5112 = vrot.slane %v5110, 5
        %v5113 = vsel %vm1511, %v5108, %v5112
        %v5114 = vshrl.u32 %v5011, 16
        %v5116 = vrot.slane %v5114, 4
        %v5117 = vor.u32 %v5116, %v5112
        %v5118 = vrot.slane %v5117, 4
        %v5120 = vshll.u32 %v5012, 16
        %v5122 = vrot.slane %v5120, 5
        %v5123 = vsel %vm1511, %v5118, %v5122
        %v5125 = vshrl.u32 %v5013, 16
        %v5127 = vrot.slane %v5125, 4
        %v5128 = vshll.u32 %v5013, 16
        %v5130 = vrot.slane %v5128, 5
        %v5131 = vor.u32 %v5127, %v5130
        %v5132 = vrot.slane %v5131, 4
        %v5134 = vshll.u32 %v5014, 16
        %v5136 = vrot.slane %v5134, 5
        %v5137 = vsel %vm1511, %v5132, %v5136
        %v5138 = vshrl.u32 %v5014, 16
        %v5140 = vrot.slane %v5138, 4
        %v5141 = vor.u32 %v5140, %v5136
        %v5142 = vrot.slane %v5141, 4
        %v5144 = vshll.u32 %v5015, 16
        %v5146 = vrot.slane %v5144, 5
        %v5147 = vsel %vm1511, %v5142, %v5146
        %v5149 = vshrl.u32 %v5016, 16
        %v5151 = vrot.slane %v5149, 4
        %v5152 = vshll.u32 %v5016, 16
        %v5154 = vrot.slane %v5152, 5
        %v5155 = vor.u32 %v5151, %v5154
        %v5156 = vrot.slane %v5155, 4
        %v5158 = vshll.u32 %v5017, 16
        %v5160 = vrot.slane %v5158, 5
        %v5161 = vsel %vm1511, %v5156, %v5160
        %v5162 = vshrl.u32 %v5017, 16
        %v5164 = vrot.slane %v5162, 4
        %v5165 = vor.u32 %v5164, %v5160
        %v5166 = vrot.slane %v5165, 4
        %v5168 = vshll.u32 %v5018, 16
        %v5170 = vrot.slane %v5168, 5
        %v5171 = vsel %vm1511, %v5166, %v5170
        %v5173 = vshrl.u32 %v5019, 16
        %v5175 = vrot.slane %v5173, 4
        %v5176 = vshll.u32 %v5019, 16
        %v5178 = vrot.slane %v5176, 5
        %v5179 = vor.u32 %v5175, %v5178
        %v5180 = vrot.slane %v5179, 4
        %v5182 = vshll.u32 %v5020, 16
        %v5184 = vrot.slane %v5182, 5
        %v5185 = vsel %vm1511, %v5180, %v5184
        %v5186 = vshrl.u32 %v5020, 16
        %v5188 = vrot.slane %v5186, 4
        %v5189 = vor.u32 %v5188, %v5184
        %v5190 = vrot.slane %v5189, 4
        %v5192 = vshll.u32 %v5021, 16
        %v5194 = vrot.slane %v5192, 5
        %v5195 = vsel %vm1511, %v5190, %v5194
        %v5197 = vshrl.u32 %v5022, 16
        %v5199 = vrot.slane %v5197, 4
        %v5200 = vshll.u32 %v5022, 16
        %v5202 = vrot.slane %v5200, 5
        %v5203 = vor.u32 %v5199, %v5202
        %v5204 = vrot.slane %v5203, 4
        %v5206 = vshll.u32 %v5023, 16
        %v5208 = vrot.slane %v5206, 5
        %v5209 = vsel %vm1511, %v5204, %v5208
        %v5210 = vshrl.u32 %v5023, 16
        %v5212 = vrot.slane %v5210, 4
        %v5213 = vor.u32 %v5212, %v5208
        %v5214 = vrot.slane %v5213, 4
        %v5216 = vshll.u32 %v5024, 16
        %v5218 = vrot.slane %v5216, 5
        %v5219 = vsel %vm1511, %v5214, %v5218
        %v5221 = vshrl.u32 %v5025, 16
        %v5223 = vrot.slane %v5221, 4
        %v5224 = vshll.u32 %v5025, 16
        %v5226 = vrot.slane %v5224, 5
        %v5227 = vor.u32 %v5223, %v5226
        %v5228 = vrot.slane %v5227, 4
        %v5230 = vshll.u32 %v5026, 16
        %v5232 = vrot.slane %v5230, 5
        %v5233 = vsel %vm1511, %v5228, %v5232
        %v5234 = vshrl.u32 %v5026, 16
        %v5236 = vrot.slane %v5234, 4
        %v5237 = vor.u32 %v5236, %v5232
        %v5238 = vrot.slane %v5237, 4
        %v5240 = vshll.u32 %v5027, 16
        %v5242 = vrot.slane %v5240, 5
        %v5243 = vsel %vm1511, %v5238, %v5242
        %v5245 = vshrl.u32 %v5028, 16
        %v5247 = vrot.slane %v5245, 4
        %v5248 = vshll.u32 %v5028, 16
        %v5250 = vrot.slane %v5248, 5
        %v5251 = vor.u32 %v5247, %v5250
        %v5252 = vrot.slane %v5251, 4
        %v5254 = vshll.u32 %v5029, 16
        %v5256 = vrot.slane %v5254, 5
        %v5257 = vsel %vm1511, %v5252, %v5256
        %v5258 = vshrl.u32 %v5029, 16
        %v5260 = vrot.slane %v5258, 4
        %v5261 = vor.u32 %v5260, %v5256
        %v5262 = vrot.slane %v5261, 4
        %v5264 = vshll.u32 %v5030, 16
        %v5266 = vrot.slane %v5264, 5
        %v5267 = vsel %vm1511, %v5262, %v5266
        %v5269 = vshrl.u32 %v5031, 16
        %v5271 = vrot.slane %v5269, 4
        %v5272 = vshll.u32 %v5031, 16
        %v5274 = vrot.slane %v5272, 5
        %v5275 = vor.u32 %v5271, %v5274
        %v5276 = vrot.slane %v5275, 4
        %v5278 = vshll.u32 %v5032, 16
        %v5280 = vrot.slane %v5278, 5
        %v5281 = vsel %vm1511, %v5276, %v5280
        %v5282 = vshrl.u32 %v5032, 16
        %v5284 = vrot.slane %v5282, 4
        %v5285 = vor.u32 %v5284, %v5280
        %v5286 = vrot.slane %v5285, 4
        %v5288 = vshll.u32 %v5033, 16
        %v5290 = vrot.slane %v5288, 5
        %v5291 = vsel %vm1511, %v5286, %v5290
        %v5293 = vshrl.u32 %v5034, 16
        %v5295 = vrot.slane %v5293, 4
        %v5296 = vshll.u32 %v5034, 16
        %v5298 = vrot.slane %v5296, 5
        %v5299 = vor.u32 %v5295, %v5298
        %v5300 = vrot.slane %v5299, 4
        %v5302 = vshll.u32 %v5035, 16
        %v5304 = vrot.slane %v5302, 5
        %v5305 = vsel %vm1511, %v5300, %v5304
        %v5306 = vshrl.u32 %v5035, 16
        %v5308 = vrot.slane %v5306, 4
        %v5309 = vor.u32 %v5308, %v5304
        %v5310 = vrot.slane %v5309, 4
        %v5312 = vshll.u32 %v5036, 16
        %v5314 = vrot.slane %v5312, 5
        %v5315 = vsel %vm1511, %v5310, %v5314
        %v5317 = vshrl.u32 %v5037, 16
        %v5319 = vrot.slane %v5317, 4
        %v5320 = vshll.u32 %v5037, 16
        %v5322 = vrot.slane %v5320, 5
        %v5323 = vor.u32 %v5319, %v5322
        %v5324 = vrot.slane %v5323, 4
        %v5326 = vshll.u32 %v5038, 16
        %v5328 = vrot.slane %v5326, 5
        %v5329 = vsel %vm1511, %v5324, %v5328
        %v5330 = vshrl.u32 %v5038, 16
        %v5332 = vrot.slane %v5330, 4
        %v5333 = vor.u32 %v5332, %v5328
        %v5334 = vrot.slane %v5333, 4
        %v5336 = vshll.u32 %v5039, 16
        %v5338 = vrot.slane %v5336, 5
        %v5339 = vsel %vm1511, %v5334, %v5338
        %v5341 = vshrl.u32 %v5040, 16
        %v5343 = vrot.slane %v5341, 4
        %v5344 = vshll.u32 %v5040, 16
        %v5346 = vrot.slane %v5344, 5
        %v5347 = vor.u32 %v5343, %v5346
        %v5348 = vrot.slane %v5347, 4
        %v5350 = vshll.u32 %v5041, 16
        %v5352 = vrot.slane %v5350, 5
        %v5353 = vsel %vm1511, %v5348, %v5352
        %v5354 = vshrl.u32 %v5041, 16
        %v5356 = vrot.slane %v5354, 4
        %v5357 = vor.u32 %v5356, %v5352
        %v5358 = vrot.slane %v5357, 4
        %v5360 = vshll.u32 %v5042, 16
        %v5362 = vrot.slane %v5360, 5
        %v5363 = vsel %vm1511, %v5358, %v5362
        %v5365 = vshrl.u32 %v5043, 16
        %v5367 = vrot.slane %v5365, 4
        %v5368 = vshll.u32 %v5043, 16
        %v5370 = vrot.slane %v5368, 5
        %v5371 = vor.u32 %v5367, %v5370
        %v5372 = vrot.slane %v5371, 4
        %v5374 = vshll.u32 %v5044, 16
        %v5376 = vrot.slane %v5374, 5
        %v5377 = vsel %vm1511, %v5372, %v5376
        %v5378 = vshrl.u32 %v5044, 16
        %v5380 = vrot.slane %v5378, 4
        %v5381 = vor.u32 %v5380, %v5376
        %v5382 = vrot.slane %v5381, 4
        %v5384 = vshll.u32 %v5045, 16
        %v5386 = vrot.slane %v5384, 5
        %v5387 = vsel %vm1511, %v5382, %v5386
        %v5389 = vshrl.u32 %v5046, 16
        %v5391 = vrot.slane %v5389, 4
        %v5392 = vshll.u32 %v5046, 16
        %v5394 = vrot.slane %v5392, 5
        %v5395 = vor.u32 %v5391, %v5394
        %v5396 = vrot.slane %v5395, 4
        %v5398 = vshll.u32 %v5047, 16
        %v5400 = vrot.slane %v5398, 5
        %v5401 = vsel %vm1511, %v5396, %v5400
        %v5402 = vshrl.u32 %v5047, 16
        %v5404 = vrot.slane %v5402, 4
        %v5405 = vor.u32 %v5404, %v5400
        %v5406 = vrot.slane %v5405, 4
        %v5408 = vshll.u32 %v5048, 16
        %v5410 = vrot.slane %v5408, 5
        %v5411 = vsel %vm1511, %v5406, %v5410
        %v5413 = vshrl.u32 %v5049, 16
        %v5415 = vrot.slane %v5413, 4
        %v5416 = vshll.u32 %v5049, 16
        %v5418 = vrot.slane %v5416, 5
        %v5419 = vor.u32 %v5415, %v5418
        %v5420 = vrot.slane %v5419, 4
        %v5422 = vshll.u32 %v5050, 16
        %v5424 = vrot.slane %v5422, 5
        %v5425 = vsel %vm1511, %v5420, %v5424
        %v5426 = vshrl.u32 %v5050, 16
        %v5428 = vrot.slane %v5426, 4
        %v5429 = vor.u32 %v5428, %v5424
        %v5430 = vrot.slane %v5429, 4
        %v5432 = vshll.u32 %v5051, 16
        %v5434 = vrot.slane %v5432, 5
        %v5435 = vsel %vm1511, %v5430, %v5434
        %v5436 = vld [vmem:[%s3 + $0xe0] sm:$0xf]
        %v5437 = vld [vmem:[%s3 + $0xe4] sm:$0xf]
        %v5438 = vld [vmem:[%s3 + $0xe8] sm:$0xf]
        %v5439 = vld [vmem:[%s3 + $0xec] sm:$0xf]
        %v5440 = vld [vmem:[%s3 + $0xf0] sm:$0xf]
        %v5441 = vld [vmem:[%s3 + $0xf4] sm:$0xf]
        %v5442 = vld [vmem:[%s3 + $0xf8] sm:$0xf]
        %v5443 = vld [vmem:[%s3 + $0xfc] sm:$0xf]
        %v5444 = vunpack.c.l.b16 %v5065
        %v5445 = vunpack.c.l.b16 %v5075
        %v5446 = vunpack.c.l.b16 %v5089
        %v5447 = vunpack.c.l.b16 %v5099
        %v5448 = vunpack.c.l.b16 %v5113
        %v5449 = vunpack.c.l.b16 %v5123
        %v5450 = vunpack.c.l.b16 %v5137
        %v5451 = vunpack.c.l.b16 %v5147
        %v5452 = vunpack.c.l.b16 %v5161
        %v5453 = vunpack.c.l.b16 %v5171
        %v5454 = vunpack.c.l.b16 %v5185
        %v5455 = vunpack.c.l.b16 %v5195
        %v5456 = vunpack.c.l.b16 %v5209
        %v5457 = vunpack.c.l.b16 %v5219
        %v5458 = vunpack.c.l.b16 %v5233
        %v5459 = vunpack.c.l.b16 %v5243
        %v5460 = vunpack.c.l.b16 %v5257
        %v5461 = vunpack.c.l.b16 %v5267
        %v5462 = vunpack.c.l.b16 %v5281
        %v5463 = vunpack.c.l.b16 %v5291
        %v5464 = vunpack.c.l.b16 %v5305
        %v5465 = vunpack.c.l.b16 %v5315
        %v5466 = vunpack.c.l.b16 %v5329
        %v5467 = vunpack.c.l.b16 %v5339
        %v5468 = vunpack.c.l.b16 %v5353
        %v5469 = vunpack.c.l.b16 %v5363
        %v5470 = vunpack.c.l.b16 %v5377
        %v5471 = vunpack.c.l.b16 %v5387
        %v5472 = vunpack.c.l.b16 %v5401
        %v5473 = vunpack.c.l.b16 %v5411
        %v5474 = vunpack.c.l.b16 %v5425
        %v5475 = vunpack.c.l.b16 %v5435
        %v5476 = vpack.c.b16 %v5445, %v5444
        %v5477 = vpack.c.b16 %v5447, %v5446
        %v5478 = vpack.c.b16 %v5449, %v5448
        %v5479 = vpack.c.b16 %v5451, %v5450
        %v5480 = vpack.c.b16 %v5453, %v5452
        %v5481 = vpack.c.b16 %v5455, %v5454
        %v5482 = vpack.c.b16 %v5457, %v5456
        %v5483 = vpack.c.b16 %v5459, %v5458
        %v5484 = vpack.c.b16 %v5461, %v5460
        %v5485 = vpack.c.b16 %v5463, %v5462
        %v5486 = vpack.c.b16 %v5465, %v5464
        %v5487 = vpack.c.b16 %v5467, %v5466
        %v5488 = vpack.c.b16 %v5469, %v5468
        %v5489 = vpack.c.b16 %v5471, %v5470
        %v5490 = vpack.c.b16 %v5473, %v5472
        %v5491 = vpack.c.b16 %v5475, %v5474
        %v5500 = vunpack.c.l.b16 %v5436
        %v5501 = vunpack.c.l.b16 %v5437
        %v5502 = vunpack.c.l.b16 %v5438
        %v5503 = vunpack.c.l.b16 %v5439
        %v5504 = vunpack.c.l.b16 %v5440
        %v5505 = vunpack.c.l.b16 %v5441
        %v5506 = vunpack.c.l.b16 %v5442
        %v5507 = vunpack.c.l.b16 %v5443
        %v5508 = vpack.c.b16 %v5501, %v5500
        %v5509 = vpack.c.b16 %v5503, %v5502
        %v5510 = vpack.c.b16 %v5505, %v5504
        %v5511 = vpack.c.b16 %v5507, %v5506
        %v5517 = vsel %vm1976, %v5476, 0
        %v5520 = vsel %vm1976, %v5477, 0
        %v5523 = vsel %vm1976, %v5478, 0
        %v5526 = vsel %vm1976, %v5479, 0
        %v5529 = vsel %vm1976, %v5480, 0
        %v5532 = vsel %vm1976, %v5481, 0
        %v5535 = vsel %vm1976, %v5482, 0
        %v5538 = vsel %vm1976, %v5483, 0
        %v5541 = vsel %vm1976, %v5484, 0
        %v5544 = vsel %vm1976, %v5485, 0
        %v5547 = vsel %vm1976, %v5486, 0
        %v5550 = vsel %vm1976, %v5487, 0
        %v5553 = vsel %vm1976, %v5488, 0
        %v5556 = vsel %vm1976, %v5489, 0
        %v5559 = vsel %vm1976, %v5490, 0
        %v5562 = vsel %vm1976, %v5491, 0
        %5564 = vmatprep.subr.bf16.mxu0 0
        %5565 = vmatpush1.bf16.msra.mxu0 0
        %5566 = vmatprep.subr.bf16.mxu0 0
        %5567 = vmatpush1.bf16.msra.mxu0 0
        %5568 = vmatprep.subr.bf16.mxu0 0
        %5569 = vmatpush1.bf16.msra.mxu0 0
        %5570 = vmatprep.subr.bf16.mxu0 0
        %5571 = vmatpush1.bf16.msra.mxu0 0
        %5572 = vmatprep.subr.bf16.mxu0 0
        %5573 = vmatpush1.bf16.msra.mxu0 %v5511
        %5574 = vmatprep.subr.bf16.mxu0 0
        %5575 = vmatpush1.bf16.msra.mxu0 %v5510
        %5576 = vmatprep.subr.bf16.mxu0 0
        %5577 = vmatpush1.bf16.msra.mxu0 %v5509
        %5578 = vmatprep.subr.bf16.mxu0 0
        %5579 = vmatpush1.bf16.msra.mxu0 %v5508
        %5580 = vmatprep.subr.bf16.mxu0 0
        %5581 = vmatpush2.bf16.msra.mxu0 0
        %5582 = vmatprep.subr.bf16.mxu0 0
        %5583 = vmatpush2.bf16.msra.mxu0 0
        %5584 = vmatprep.subr.bf16.mxu0 0
        %5585 = vmatpush2.bf16.msra.mxu0 0
        %5586 = vmatprep.subr.bf16.mxu0 0
        %5587 = vmatpush2.bf16.msra.mxu0 0
        %5588 = vmatprep.subr.bf16.mxu0 0
        %5589 = vmatpush2.bf16.msra.mxu0 0
        %5590 = vmatprep.subr.bf16.mxu0 0
        %5591 = vmatpush2.bf16.msra.mxu0 0
        %5592 = vmatprep.subr.bf16.mxu0 0
        %5593 = vmatpush2.bf16.msra.mxu0 0
        %5594 = vmatprep.subr.bf16.mxu0 0
        %5595 = vmatpush2.bf16.msra.mxu0 0
        %5596 = vmatprep.mubr.bf16.mxu0 0
        %5597 = vmatmul.mubr.bf16.gmra.mxu0 %v5517
        %v5598 = vpop.f32.mrf.mxu0
        %v5599 = vadd.f32 0.0, %v5598
        %v5600 = vpop.f32.mrf.mxu0
        %v5601 = vpop.f32.mrf.mxu0
        %v5602 = vadd.f32 0.0, %v5601
        %v5603 = vpop.f32.mrf.mxu0
        %5604 = vmatprep.mubr.bf16.mxu0 0
        %5605 = vmatmul.mubr.bf16.gmra.mxu0 %v5520
        %v5606 = vpop.f32.mrf.mxu0
        %v5607 = vadd.f32 0.0, %v5606
        %v5608 = vpop.f32.mrf.mxu0
        %v5609 = vpop.f32.mrf.mxu0
        %v5610 = vadd.f32 0.0, %v5609
        %v5611 = vpop.f32.mrf.mxu0
        %5612 = vmatprep.mubr.bf16.mxu0 0
        %5613 = vmatmul.mubr.bf16.gmra.mxu0 %v5523
        %v5614 = vpop.f32.mrf.mxu0
        %v5615 = vadd.f32 0.0, %v5614
        %v5616 = vpop.f32.mrf.mxu0
        %v5617 = vpop.f32.mrf.mxu0
        %v5618 = vadd.f32 0.0, %v5617
        %v5619 = vpop.f32.mrf.mxu0
        %5620 = vmatprep.mubr.bf16.mxu0 0
        %5621 = vmatmul.mubr.bf16.gmra.mxu0 %v5526
        %v5622 = vpop.f32.mrf.mxu0
        %v5623 = vadd.f32 0.0, %v5622
        %v5624 = vpop.f32.mrf.mxu0
        %v5625 = vpop.f32.mrf.mxu0
        %v5626 = vadd.f32 0.0, %v5625
        %v5627 = vpop.f32.mrf.mxu0
        %5628 = vmatprep.mubr.bf16.mxu0 0
        %5629 = vmatmul.mubr.bf16.gmra.mxu0 %v5529
        %v5630 = vpop.f32.mrf.mxu0
        %v5631 = vadd.f32 0.0, %v5630
        %v5632 = vpop.f32.mrf.mxu0
        %v5633 = vpop.f32.mrf.mxu0
        %v5634 = vadd.f32 0.0, %v5633
        %v5635 = vpop.f32.mrf.mxu0
        %5636 = vmatprep.mubr.bf16.mxu0 0
        %5637 = vmatmul.mubr.bf16.gmra.mxu0 %v5532
        %v5638 = vpop.f32.mrf.mxu0
        %v5639 = vadd.f32 0.0, %v5638
        %v5640 = vpop.f32.mrf.mxu0
        %v5641 = vpop.f32.mrf.mxu0
        %v5642 = vadd.f32 0.0, %v5641
        %v5643 = vpop.f32.mrf.mxu0
        %5644 = vmatprep.mubr.bf16.mxu0 0
        %5645 = vmatmul.mubr.bf16.gmra.mxu0 %v5535
        %v5646 = vpop.f32.mrf.mxu0
        %v5647 = vadd.f32 0.0, %v5646
        %v5648 = vpop.f32.mrf.mxu0
        %v5649 = vpop.f32.mrf.mxu0
        %v5650 = vadd.f32 0.0, %v5649
        %v5651 = vpop.f32.mrf.mxu0
        %5652 = vmatprep.mubr.bf16.mxu0 0
        %5653 = vmatmul.mubr.bf16.gmra.mxu0 %v5538
        %v5654 = vpop.f32.mrf.mxu0
        %v5655 = vadd.f32 0.0, %v5654
        %v5656 = vpop.f32.mrf.mxu0
        %v5657 = vpop.f32.mrf.mxu0
        %v5658 = vadd.f32 0.0, %v5657
        %v5659 = vpop.f32.mrf.mxu0
        %5660 = vmatprep.mubr.bf16.mxu0 0
        %5661 = vmatmul.mubr.bf16.gmra.mxu0 %v5541
        %v5662 = vpop.f32.mrf.mxu0
        %v5663 = vadd.f32 0.0, %v5662
        %v5664 = vpop.f32.mrf.mxu0
        %v5665 = vpop.f32.mrf.mxu0
        %v5666 = vadd.f32 0.0, %v5665
        %v5667 = vpop.f32.mrf.mxu0
        %5668 = vmatprep.mubr.bf16.mxu0 0
        %5669 = vmatmul.mubr.bf16.gmra.mxu0 %v5544
        %v5670 = vpop.f32.mrf.mxu0
        %v5671 = vadd.f32 0.0, %v5670
        %v5672 = vpop.f32.mrf.mxu0
        %v5673 = vpop.f32.mrf.mxu0
        %v5674 = vadd.f32 0.0, %v5673
        %v5675 = vpop.f32.mrf.mxu0
        %5676 = vmatprep.mubr.bf16.mxu0 0
        %5677 = vmatmul.mubr.bf16.gmra.mxu0 %v5547
        %v5678 = vpop.f32.mrf.mxu0
        %v5679 = vadd.f32 0.0, %v5678
        %v5680 = vpop.f32.mrf.mxu0
        %v5681 = vpop.f32.mrf.mxu0
        %v5682 = vadd.f32 0.0, %v5681
        %v5683 = vpop.f32.mrf.mxu0
        %5684 = vmatprep.mubr.bf16.mxu0 0
        %5685 = vmatmul.mubr.bf16.gmra.mxu0 %v5550
        %v5686 = vpop.f32.mrf.mxu0
        %v5687 = vadd.f32 0.0, %v5686
        %v5688 = vpop.f32.mrf.mxu0
        %v5689 = vpop.f32.mrf.mxu0
        %v5690 = vadd.f32 0.0, %v5689
        %v5691 = vpop.f32.mrf.mxu0
        %5692 = vmatprep.mubr.bf16.mxu0 0
        %5693 = vmatmul.mubr.bf16.gmra.mxu0 %v5553
        %v5694 = vpop.f32.mrf.mxu0
        %v5695 = vadd.f32 0.0, %v5694
        %v5696 = vpop.f32.mrf.mxu0
        %v5697 = vpop.f32.mrf.mxu0
        %v5698 = vadd.f32 0.0, %v5697
        %v5699 = vpop.f32.mrf.mxu0
        %5700 = vmatprep.mubr.bf16.mxu0 0
        %5701 = vmatmul.mubr.bf16.gmra.mxu0 %v5556
        %v5702 = vpop.f32.mrf.mxu0
        %v5703 = vadd.f32 0.0, %v5702
        %v5704 = vpop.f32.mrf.mxu0
        %v5705 = vpop.f32.mrf.mxu0
        %v5706 = vadd.f32 0.0, %v5705
        %v5707 = vpop.f32.mrf.mxu0
        %5708 = vmatprep.mubr.bf16.mxu0 0
        %5709 = vmatmul.mubr.bf16.gmra.mxu0 %v5559
        %v5710 = vpop.f32.mrf.mxu0
        %v5711 = vadd.f32 0.0, %v5710
        %v5712 = vpop.f32.mrf.mxu0
        %v5713 = vpop.f32.mrf.mxu0
        %v5714 = vadd.f32 0.0, %v5713
        %v5715 = vpop.f32.mrf.mxu0
        %5716 = vmatprep.mubr.bf16.mxu0 0
        %5717 = vmatmul.mubr.bf16.gmra.mxu0 %v5562
        %v5718 = vpop.f32.mrf.mxu0
        %v5719 = vadd.f32 0.0, %v5718
        %v5720 = vpop.f32.mrf.mxu0
        %v5721 = vpop.f32.mrf.mxu0
        %v5722 = vadd.f32 0.0, %v5721
        %v5723 = vpop.f32.mrf.mxu0
        %5724 = vdwg.mxu0
        %v5725 = vadd.f32 %v4972, %v5599
        %v5726 = vadd.f32 %v4973, %v5602
        %v5727 = vadd.f32 %v4974, %v5607
        %v5728 = vadd.f32 %v4975, %v5610
        %v5729 = vadd.f32 %v4976, %v5615
        %v5730 = vadd.f32 %v4977, %v5618
        %v5731 = vadd.f32 %v4978, %v5623
        %v5732 = vadd.f32 %v4979, %v5626
        %v5733 = vadd.f32 %v4980, %v5631
        %v5734 = vadd.f32 %v4981, %v5634
        %v5735 = vadd.f32 %v4982, %v5639
        %v5736 = vadd.f32 %v4983, %v5642
        %v5737 = vadd.f32 %v4984, %v5647
        %v5738 = vadd.f32 %v4985, %v5650
        %v5739 = vadd.f32 %v4986, %v5655
        %v5740 = vadd.f32 %v4987, %v5658
        %v5741 = vadd.f32 %v4988, %v5663
        %v5742 = vadd.f32 %v4989, %v5666
        %v5743 = vadd.f32 %v4990, %v5671
        %v5744 = vadd.f32 %v4991, %v5674
        %v5745 = vadd.f32 %v4992, %v5679
        %v5746 = vadd.f32 %v4993, %v5682
        %v5747 = vadd.f32 %v4994, %v5687
        %v5748 = vadd.f32 %v4995, %v5690
        %v5749 = vadd.f32 %v4996, %v5695
        %v5750 = vadd.f32 %v4997, %v5698
        %v5751 = vadd.f32 %v4998, %v5703
        %v5752 = vadd.f32 %v4999, %v5706
        %v5753 = vadd.f32 %v5000, %v5711
        %v5754 = vadd.f32 %v5001, %v5714
        %v5755 = vadd.f32 %v5002, %v5719
        %v5756 = vadd.f32 %v5003, %v5722
        %v5757 = vld [vmem:[%s4618] sm:$0xe]
        %v5758 = vld [vmem:[%s4618 + $0xc] sm:$0xe]
        %v5759 = vld [vmem:[%s4618 + $0x18] sm:$0xe]
        %v5760 = vld [vmem:[%s4618 + $0x24] sm:$0xe]
        %v5761 = vld [vmem:[%s4618 + $0x30] sm:$0xe]
        %v5762 = vld [vmem:[%s4618 + $0x3c] sm:$0xe]
        %v5763 = vld [vmem:[%s4618 + $0x48] sm:$0xe]
        %v5764 = vld [vmem:[%s4618 + $0x54] sm:$0xe]
        %v5765 = vld [vmem:[%s4618 + $0x60] sm:$0xe]
        %v5766 = vld [vmem:[%s4618 + $0x6c] sm:$0xe]
        %v5767 = vld [vmem:[%s4618 + $0x78] sm:$0xe]
        %v5768 = vld [vmem:[%s4618 + $0x84] sm:$0xe]
        %v5769 = vld [vmem:[%s4618 + $0x90] sm:$0xe]
        %v5770 = vld [vmem:[%s4618 + $0x9c] sm:$0xe]
        %v5771 = vld [vmem:[%s4618 + $0xa8] sm:$0xe]
        %v5772 = vld [vmem:[%s4618 + $0xb4] sm:$0xe]
        %v5821 = vrot.slane %v5757, 5
        %v5822 = vrot.slane %v5821, 4
        %v5823 = vrot.slane %v5005, 5
        %v5824 = vsel %vm2549, %v5822, %v5823
        %v5825 = vrot.slane %v5823, 4
        %v5826 = vrot.slane %v5006, 5
        %v5827 = vsel %vm2549, %v5825, %v5826
        %v5828 = vrot.slane %v5758, 5
        %v5829 = vrot.slane %v5828, 4
        %v5830 = vrot.slane %v5008, 5
        %v5831 = vsel %vm2549, %v5829, %v5830
        %v5832 = vrot.slane %v5830, 4
        %v5833 = vrot.slane %v5009, 5
        %v5834 = vsel %vm2549, %v5832, %v5833
        %v5835 = vrot.slane %v5759, 5
        %v5836 = vrot.slane %v5835, 4
        %v5837 = vrot.slane %v5011, 5
        %v5838 = vsel %vm2549, %v5836, %v5837
        %v5839 = vrot.slane %v5837, 4
        %v5840 = vrot.slane %v5012, 5
        %v5841 = vsel %vm2549, %v5839, %v5840
        %v5842 = vrot.slane %v5760, 5
        %v5843 = vrot.slane %v5842, 4
        %v5844 = vrot.slane %v5014, 5
        %v5845 = vsel %vm2549, %v5843, %v5844
        %v5846 = vrot.slane %v5844, 4
        %v5847 = vrot.slane %v5015, 5
        %v5848 = vsel %vm2549, %v5846, %v5847
        %v5849 = vrot.slane %v5761, 5
        %v5850 = vrot.slane %v5849, 4
        %v5851 = vrot.slane %v5017, 5
        %v5852 = vsel %vm2549, %v5850, %v5851
        %v5853 = vrot.slane %v5851, 4
        %v5854 = vrot.slane %v5018, 5
        %v5855 = vsel %vm2549, %v5853, %v5854
        %v5856 = vrot.slane %v5762, 5
        %v5857 = vrot.slane %v5856, 4
        %v5858 = vrot.slane %v5020, 5
        %v5859 = vsel %vm2549, %v5857, %v5858
        %v5860 = vrot.slane %v5858, 4
        %v5861 = vrot.slane %v5021, 5
        %v5862 = vsel %vm2549, %v5860, %v5861
        %v5863 = vrot.slane %v5763, 5
        %v5864 = vrot.slane %v5863, 4
        %v5865 = vrot.slane %v5023, 5
        %v5866 = vsel %vm2549, %v5864, %v5865
        %v5867 = vrot.slane %v5865, 4
        %v5868 = vrot.slane %v5024, 5
        %v5869 = vsel %vm2549, %v5867, %v5868
        %v5870 = vrot.slane %v5764, 5
        %v5871 = vrot.slane %v5870, 4
        %v5872 = vrot.slane %v5026, 5
        %v5873 = vsel %vm2549, %v5871, %v5872
        %v5874 = vrot.slane %v5872, 4
        %v5875 = vrot.slane %v5027, 5
        %v5876 = vsel %vm2549, %v5874, %v5875
        %v5877 = vrot.slane %v5765, 5
        %v5878 = vrot.slane %v5877, 4
        %v5879 = vrot.slane %v5029, 5
        %v5880 = vsel %vm2549, %v5878, %v5879
        %v5881 = vrot.slane %v5879, 4
        %v5882 = vrot.slane %v5030, 5
        %v5883 = vsel %vm2549, %v5881, %v5882
        %v5884 = vrot.slane %v5766, 5
        %v5885 = vrot.slane %v5884, 4
        %v5886 = vrot.slane %v5032, 5
        %v5887 = vsel %vm2549, %v5885, %v5886
        %v5888 = vrot.slane %v5886, 4
        %v5889 = vrot.slane %v5033, 5
        %v5890 = vsel %vm2549, %v5888, %v5889
        %v5891 = vrot.slane %v5767, 5
        %v5892 = vrot.slane %v5891, 4
        %v5893 = vrot.slane %v5035, 5
        %v5894 = vsel %vm2549, %v5892, %v5893
        %v5895 = vrot.slane %v5893, 4
        %v5896 = vrot.slane %v5036, 5
        %v5897 = vsel %vm2549, %v5895, %v5896
        %v5898 = vrot.slane %v5768, 5
        %v5899 = vrot.slane %v5898, 4
        %v5900 = vrot.slane %v5038, 5
        %v5901 = vsel %vm2549, %v5899, %v5900
        %v5902 = vrot.slane %v5900, 4
        %v5903 = vrot.slane %v5039, 5
        %v5904 = vsel %vm2549, %v5902, %v5903
        %v5905 = vrot.slane %v5769, 5
        %v5906 = vrot.slane %v5905, 4
        %v5907 = vrot.slane %v5041, 5
        %v5908 = vsel %vm2549, %v5906, %v5907
        %v5909 = vrot.slane %v5907, 4
        %v5910 = vrot.slane %v5042, 5
        %v5911 = vsel %vm2549, %v5909, %v5910
        %v5912 = vrot.slane %v5770, 5
        %v5913 = vrot.slane %v5912, 4
        %v5914 = vrot.slane %v5044, 5
        %v5915 = vsel %vm2549, %v5913, %v5914
        %v5916 = vrot.slane %v5914, 4
        %v5917 = vrot.slane %v5045, 5
        %v5918 = vsel %vm2549, %v5916, %v5917
        %v5919 = vrot.slane %v5771, 5
        %v5920 = vrot.slane %v5919, 4
        %v5921 = vrot.slane %v5047, 5
        %v5922 = vsel %vm2549, %v5920, %v5921
        %v5923 = vrot.slane %v5921, 4
        %v5924 = vrot.slane %v5048, 5
        %v5925 = vsel %vm2549, %v5923, %v5924
        %v5926 = vrot.slane %v5772, 5
        %v5927 = vrot.slane %v5926, 4
        %v5928 = vrot.slane %v5050, 5
        %v5929 = vsel %vm2549, %v5927, %v5928
        %v5930 = vrot.slane %v5928, 4
        %v5931 = vrot.slane %v5051, 5
        %v5932 = vsel %vm2549, %v5930, %v5931
        %v5933 = vld [vmem:[%s3 + $0x100] sm:$0xf]
        %v5934 = vld [vmem:[%s3 + $0x104] sm:$0xf]
        %v5935 = vld [vmem:[%s3 + $0x108] sm:$0xf]
        %v5936 = vld [vmem:[%s3 + $0x10c] sm:$0xf]
        %v5937 = vld [vmem:[%s3 + $0x110] sm:$0xf]
        %v5938 = vld [vmem:[%s3 + $0x114] sm:$0xf]
        %v5939 = vld [vmem:[%s3 + $0x118] sm:$0xf]
        %v5940 = vld [vmem:[%s3 + $0x11c] sm:$0xf]
        %v5941 = vunpack.c.l.b16 %v5824
        %v5942 = vunpack.c.l.b16 %v5827
        %v5943 = vunpack.c.l.b16 %v5831
        %v5944 = vunpack.c.l.b16 %v5834
        %v5945 = vunpack.c.l.b16 %v5838
        %v5946 = vunpack.c.l.b16 %v5841
        %v5947 = vunpack.c.l.b16 %v5845
        %v5948 = vunpack.c.l.b16 %v5848
        %v5949 = vunpack.c.l.b16 %v5852
        %v5950 = vunpack.c.l.b16 %v5855
        %v5951 = vunpack.c.l.b16 %v5859
        %v5952 = vunpack.c.l.b16 %v5862
        %v5953 = vunpack.c.l.b16 %v5866
        %v5954 = vunpack.c.l.b16 %v5869
        %v5955 = vunpack.c.l.b16 %v5873
        %v5956 = vunpack.c.l.b16 %v5876
        %v5957 = vunpack.c.l.b16 %v5880
        %v5958 = vunpack.c.l.b16 %v5883
        %v5959 = vunpack.c.l.b16 %v5887
        %v5960 = vunpack.c.l.b16 %v5890
        %v5961 = vunpack.c.l.b16 %v5894
        %v5962 = vunpack.c.l.b16 %v5897
        %v5963 = vunpack.c.l.b16 %v5901
        %v5964 = vunpack.c.l.b16 %v5904
        %v5965 = vunpack.c.l.b16 %v5908
        %v5966 = vunpack.c.l.b16 %v5911
        %v5967 = vunpack.c.l.b16 %v5915
        %v5968 = vunpack.c.l.b16 %v5918
        %v5969 = vunpack.c.l.b16 %v5922
        %v5970 = vunpack.c.l.b16 %v5925
        %v5971 = vunpack.c.l.b16 %v5929
        %v5972 = vunpack.c.l.b16 %v5932
        %v5973 = vpack.c.b16 %v5942, %v5941
        %v5974 = vpack.c.b16 %v5944, %v5943
        %v5975 = vpack.c.b16 %v5946, %v5945
        %v5976 = vpack.c.b16 %v5948, %v5947
        %v5977 = vpack.c.b16 %v5950, %v5949
        %v5978 = vpack.c.b16 %v5952, %v5951
        %v5979 = vpack.c.b16 %v5954, %v5953
        %v5980 = vpack.c.b16 %v5956, %v5955
        %v5981 = vpack.c.b16 %v5958, %v5957
        %v5982 = vpack.c.b16 %v5960, %v5959
        %v5983 = vpack.c.b16 %v5962, %v5961
        %v5984 = vpack.c.b16 %v5964, %v5963
        %v5985 = vpack.c.b16 %v5966, %v5965
        %v5986 = vpack.c.b16 %v5968, %v5967
        %v5987 = vpack.c.b16 %v5970, %v5969
        %v5988 = vpack.c.b16 %v5972, %v5971
        %v5997 = vunpack.c.l.b16 %v5933
        %v5998 = vunpack.c.l.b16 %v5934
        %v5999 = vunpack.c.l.b16 %v5935
        %v6000 = vunpack.c.l.b16 %v5936
        %v6001 = vunpack.c.l.b16 %v5937
        %v6002 = vunpack.c.l.b16 %v5938
        %v6003 = vunpack.c.l.b16 %v5939
        %v6004 = vunpack.c.l.b16 %v5940
        %v6005 = vpack.c.b16 %v5998, %v5997
        %v6006 = vpack.c.b16 %v6000, %v5999
        %v6007 = vpack.c.b16 %v6002, %v6001
        %v6008 = vpack.c.b16 %v6004, %v6003
        %v6014 = vsel %vm1976, %v5973, 0
        %v6017 = vsel %vm1976, %v5974, 0
        %v6020 = vsel %vm1976, %v5975, 0
        %v6023 = vsel %vm1976, %v5976, 0
        %v6026 = vsel %vm1976, %v5977, 0
        %v6029 = vsel %vm1976, %v5978, 0
        %v6032 = vsel %vm1976, %v5979, 0
        %v6035 = vsel %vm1976, %v5980, 0
        %v6038 = vsel %vm1976, %v5981, 0
        %v6041 = vsel %vm1976, %v5982, 0
        %v6044 = vsel %vm1976, %v5983, 0
        %v6047 = vsel %vm1976, %v5984, 0
        %v6050 = vsel %vm1976, %v5985, 0
        %v6053 = vsel %vm1976, %v5986, 0
        %v6056 = vsel %vm1976, %v5987, 0
        %v6059 = vsel %vm1976, %v5988, 0
        %6061 = vmatprep.subr.bf16.mxu0 0
        %6062 = vmatpush1.bf16.msra.mxu0 0
        %6063 = vmatprep.subr.bf16.mxu0 0
        %6064 = vmatpush1.bf16.msra.mxu0 0
        %6065 = vmatprep.subr.bf16.mxu0 0
        %6066 = vmatpush1.bf16.msra.mxu0 0
        %6067 = vmatprep.subr.bf16.mxu0 0
        %6068 = vmatpush1.bf16.msra.mxu0 0
        %6069 = vmatprep.subr.bf16.mxu0 0
        %6070 = vmatpush1.bf16.msra.mxu0 %v6008
        %6071 = vmatprep.subr.bf16.mxu0 0
        %6072 = vmatpush1.bf16.msra.mxu0 %v6007
        %6073 = vmatprep.subr.bf16.mxu0 0
        %6074 = vmatpush1.bf16.msra.mxu0 %v6006
        %6075 = vmatprep.subr.bf16.mxu0 0
        %6076 = vmatpush1.bf16.msra.mxu0 %v6005
        %6077 = vmatprep.subr.bf16.mxu0 0
        %6078 = vmatpush2.bf16.msra.mxu0 0
        %6079 = vmatprep.subr.bf16.mxu0 0
        %6080 = vmatpush2.bf16.msra.mxu0 0
        %6081 = vmatprep.subr.bf16.mxu0 0
        %6082 = vmatpush2.bf16.msra.mxu0 0
        %6083 = vmatprep.subr.bf16.mxu0 0
        %6084 = vmatpush2.bf16.msra.mxu0 0
        %6085 = vmatprep.subr.bf16.mxu0 0
        %6086 = vmatpush2.bf16.msra.mxu0 0
        %6087 = vmatprep.subr.bf16.mxu0 0
        %6088 = vmatpush2.bf16.msra.mxu0 0
        %6089 = vmatprep.subr.bf16.mxu0 0
        %6090 = vmatpush2.bf16.msra.mxu0 0
        %6091 = vmatprep.subr.bf16.mxu0 0
        %6092 = vmatpush2.bf16.msra.mxu0 0
        %6093 = vmatprep.mubr.bf16.mxu0 0
        %6094 = vmatmul.mubr.bf16.gmra.mxu0 %v6014
        %v6095 = vpop.f32.mrf.mxu0
        %v6096 = vadd.f32 0.0, %v6095
        %v6097 = vpop.f32.mrf.mxu0
        %v6098 = vpop.f32.mrf.mxu0
        %v6099 = vadd.f32 0.0, %v6098
        %v6100 = vpop.f32.mrf.mxu0
        %6101 = vmatprep.mubr.bf16.mxu0 0
        %6102 = vmatmul.mubr.bf16.gmra.mxu0 %v6017
        %v6103 = vpop.f32.mrf.mxu0
        %v6104 = vadd.f32 0.0, %v6103
        %v6105 = vpop.f32.mrf.mxu0
        %v6106 = vpop.f32.mrf.mxu0
        %v6107 = vadd.f32 0.0, %v6106
        %v6108 = vpop.f32.mrf.mxu0
        %6109 = vmatprep.mubr.bf16.mxu0 0
        %6110 = vmatmul.mubr.bf16.gmra.mxu0 %v6020
        %v6111 = vpop.f32.mrf.mxu0
        %v6112 = vadd.f32 0.0, %v6111
        %v6113 = vpop.f32.mrf.mxu0
        %v6114 = vpop.f32.mrf.mxu0
        %v6115 = vadd.f32 0.0, %v6114
        %v6116 = vpop.f32.mrf.mxu0
        %6117 = vmatprep.mubr.bf16.mxu0 0
        %6118 = vmatmul.mubr.bf16.gmra.mxu0 %v6023
        %v6119 = vpop.f32.mrf.mxu0
        %v6120 = vadd.f32 0.0, %v6119
        %v6121 = vpop.f32.mrf.mxu0
        %v6122 = vpop.f32.mrf.mxu0
        %v6123 = vadd.f32 0.0, %v6122
        %v6124 = vpop.f32.mrf.mxu0
        %6125 = vmatprep.mubr.bf16.mxu0 0
        %6126 = vmatmul.mubr.bf16.gmra.mxu0 %v6026
        %v6127 = vpop.f32.mrf.mxu0
        %v6128 = vadd.f32 0.0, %v6127
        %v6129 = vpop.f32.mrf.mxu0
        %v6130 = vpop.f32.mrf.mxu0
        %v6131 = vadd.f32 0.0, %v6130
        %v6132 = vpop.f32.mrf.mxu0
        %6133 = vmatprep.mubr.bf16.mxu0 0
        %6134 = vmatmul.mubr.bf16.gmra.mxu0 %v6029
        %v6135 = vpop.f32.mrf.mxu0
        %v6136 = vadd.f32 0.0, %v6135
        %v6137 = vpop.f32.mrf.mxu0
        %v6138 = vpop.f32.mrf.mxu0
        %v6139 = vadd.f32 0.0, %v6138
        %v6140 = vpop.f32.mrf.mxu0
        %6141 = vmatprep.mubr.bf16.mxu0 0
        %6142 = vmatmul.mubr.bf16.gmra.mxu0 %v6032
        %v6143 = vpop.f32.mrf.mxu0
        %v6144 = vadd.f32 0.0, %v6143
        %v6145 = vpop.f32.mrf.mxu0
        %v6146 = vpop.f32.mrf.mxu0
        %v6147 = vadd.f32 0.0, %v6146
        %v6148 = vpop.f32.mrf.mxu0
        %6149 = vmatprep.mubr.bf16.mxu0 0
        %6150 = vmatmul.mubr.bf16.gmra.mxu0 %v6035
        %v6151 = vpop.f32.mrf.mxu0
        %v6152 = vadd.f32 0.0, %v6151
        %v6153 = vpop.f32.mrf.mxu0
        %v6154 = vpop.f32.mrf.mxu0
        %v6155 = vadd.f32 0.0, %v6154
        %v6156 = vpop.f32.mrf.mxu0
        %6157 = vmatprep.mubr.bf16.mxu0 0
        %6158 = vmatmul.mubr.bf16.gmra.mxu0 %v6038
        %v6159 = vpop.f32.mrf.mxu0
        %v6160 = vadd.f32 0.0, %v6159
        %v6161 = vpop.f32.mrf.mxu0
        %v6162 = vpop.f32.mrf.mxu0
        %v6163 = vadd.f32 0.0, %v6162
        %v6164 = vpop.f32.mrf.mxu0
        %6165 = vmatprep.mubr.bf16.mxu0 0
        %6166 = vmatmul.mubr.bf16.gmra.mxu0 %v6041
        %v6167 = vpop.f32.mrf.mxu0
        %v6168 = vadd.f32 0.0, %v6167
        %v6169 = vpop.f32.mrf.mxu0
        %v6170 = vpop.f32.mrf.mxu0
        %v6171 = vadd.f32 0.0, %v6170
        %v6172 = vpop.f32.mrf.mxu0
        %6173 = vmatprep.mubr.bf16.mxu0 0
        %6174 = vmatmul.mubr.bf16.gmra.mxu0 %v6044
        %v6175 = vpop.f32.mrf.mxu0
        %v6176 = vadd.f32 0.0, %v6175
        %v6177 = vpop.f32.mrf.mxu0
        %v6178 = vpop.f32.mrf.mxu0
        %v6179 = vadd.f32 0.0, %v6178
        %v6180 = vpop.f32.mrf.mxu0
        %6181 = vmatprep.mubr.bf16.mxu0 0
        %6182 = vmatmul.mubr.bf16.gmra.mxu0 %v6047
        %v6183 = vpop.f32.mrf.mxu0
        %v6184 = vadd.f32 0.0, %v6183
        %v6185 = vpop.f32.mrf.mxu0
        %v6186 = vpop.f32.mrf.mxu0
        %v6187 = vadd.f32 0.0, %v6186
        %v6188 = vpop.f32.mrf.mxu0
        %6189 = vmatprep.mubr.bf16.mxu0 0
        %6190 = vmatmul.mubr.bf16.gmra.mxu0 %v6050
        %v6191 = vpop.f32.mrf.mxu0
        %v6192 = vadd.f32 0.0, %v6191
        %v6193 = vpop.f32.mrf.mxu0
        %v6194 = vpop.f32.mrf.mxu0
        %v6195 = vadd.f32 0.0, %v6194
        %v6196 = vpop.f32.mrf.mxu0
        %6197 = vmatprep.mubr.bf16.mxu0 0
        %6198 = vmatmul.mubr.bf16.gmra.mxu0 %v6053
        %v6199 = vpop.f32.mrf.mxu0
        %v6200 = vadd.f32 0.0, %v6199
        %v6201 = vpop.f32.mrf.mxu0
        %v6202 = vpop.f32.mrf.mxu0
        %v6203 = vadd.f32 0.0, %v6202
        %v6204 = vpop.f32.mrf.mxu0
        %6205 = vmatprep.mubr.bf16.mxu0 0
        %6206 = vmatmul.mubr.bf16.gmra.mxu0 %v6056
        %v6207 = vpop.f32.mrf.mxu0
        %v6208 = vadd.f32 0.0, %v6207
        %v6209 = vpop.f32.mrf.mxu0
        %v6210 = vpop.f32.mrf.mxu0
        %v6211 = vadd.f32 0.0, %v6210
        %v6212 = vpop.f32.mrf.mxu0
        %6213 = vmatprep.mubr.bf16.mxu0 0
        %6214 = vmatmul.mubr.bf16.gmra.mxu0 %v6059
        %v6215 = vpop.f32.mrf.mxu0
        %v6216 = vadd.f32 0.0, %v6215
        %v6217 = vpop.f32.mrf.mxu0
        %v6218 = vpop.f32.mrf.mxu0
        %v6219 = vadd.f32 0.0, %v6218
        %v6220 = vpop.f32.mrf.mxu0
        %6221 = vdwg.mxu0
        %v6222 = vadd.f32 %v5725, %v6096
        %v6223 = vadd.f32 %v5726, %v6099
        %v6224 = vadd.f32 %v5727, %v6104
        %v6225 = vadd.f32 %v5728, %v6107
        %v6226 = vadd.f32 %v5729, %v6112
        %v6227 = vadd.f32 %v5730, %v6115
        %v6228 = vadd.f32 %v5731, %v6120
        %v6229 = vadd.f32 %v5732, %v6123
        %v6230 = vadd.f32 %v5733, %v6128
        %v6231 = vadd.f32 %v5734, %v6131
        %v6232 = vadd.f32 %v5735, %v6136
        %v6233 = vadd.f32 %v5736, %v6139
        %v6234 = vadd.f32 %v5737, %v6144
        %v6235 = vadd.f32 %v5738, %v6147
        %v6236 = vadd.f32 %v5739, %v6152
        %v6237 = vadd.f32 %v5740, %v6155
        %v6238 = vadd.f32 %v5741, %v6160
        %v6239 = vadd.f32 %v5742, %v6163
        %v6240 = vadd.f32 %v5743, %v6168
        %v6241 = vadd.f32 %v5744, %v6171
        %v6242 = vadd.f32 %v5745, %v6176
        %v6243 = vadd.f32 %v5746, %v6179
        %v6244 = vadd.f32 %v5747, %v6184
        %v6245 = vadd.f32 %v5748, %v6187
        %v6246 = vadd.f32 %v5749, %v6192
        %v6247 = vadd.f32 %v5750, %v6195
        %v6248 = vadd.f32 %v5751, %v6200
        %v6249 = vadd.f32 %v5752, %v6203
        %v6250 = vadd.f32 %v5753, %v6208
        %v6251 = vadd.f32 %v5754, %v6211
        %v6252 = vadd.f32 %v5755, %v6216
        %v6253 = vadd.f32 %v5756, %v6219
        %v6254 = vld [vmem:[%s4] sm:$0x1]
        %v6256 = vlaneseq
        %v6257 = vshrl.u32 %v6256, 7
        %v6258 = vsub.s32 0, %v6257
        %v6259 = vrot.slane %v6254, %v6258
        %v6261 = vadd.f32 %v6222, %v6259
        %v6262 = vadd.f32 %v6223, %v6259
        %v6263 = vadd.f32 %v6224, %v6259
        %v6264 = vadd.f32 %v6225, %v6259
        %v6265 = vadd.f32 %v6226, %v6259
        %v6266 = vadd.f32 %v6227, %v6259
        %v6267 = vadd.f32 %v6228, %v6259
        %v6268 = vadd.f32 %v6229, %v6259
        %v6269 = vadd.f32 %v6230, %v6259
        %v6270 = vadd.f32 %v6231, %v6259
        %v6271 = vadd.f32 %v6232, %v6259
        %v6272 = vadd.f32 %v6233, %v6259
        %v6273 = vadd.f32 %v6234, %v6259
        %v6274 = vadd.f32 %v6235, %v6259
        %v6275 = vadd.f32 %v6236, %v6259
        %v6276 = vadd.f32 %v6237, %v6259
        %v6277 = vadd.f32 %v6238, %v6259
        %v6278 = vadd.f32 %v6239, %v6259
        %v6279 = vadd.f32 %v6240, %v6259
        %v6280 = vadd.f32 %v6241, %v6259
        %v6281 = vadd.f32 %v6242, %v6259
        %v6282 = vadd.f32 %v6243, %v6259
        %v6283 = vadd.f32 %v6244, %v6259
        %v6284 = vadd.f32 %v6245, %v6259
        %v6285 = vadd.f32 %v6246, %v6259
        %v6286 = vadd.f32 %v6247, %v6259
        %v6287 = vadd.f32 %v6248, %v6259
        %v6288 = vadd.f32 %v6249, %v6259
        %v6289 = vadd.f32 %v6250, %v6259
        %v6290 = vadd.f32 %v6251, %v6259
        %v6291 = vadd.f32 %v6252, %v6259
        %v6292 = vadd.f32 %v6253, %v6259
        %v6293 = vmax.f32 %v6261, 0.0
        %v6294 = vmax.f32 %v6262, 0.0
        %v6295 = vmax.f32 %v6263, 0.0
        %v6296 = vmax.f32 %v6264, 0.0
        %v6297 = vmax.f32 %v6265, 0.0
        %v6298 = vmax.f32 %v6266, 0.0
        %v6299 = vmax.f32 %v6267, 0.0
        %v6300 = vmax.f32 %v6268, 0.0
        %v6301 = vmax.f32 %v6269, 0.0
        %v6302 = vmax.f32 %v6270, 0.0
        %v6303 = vmax.f32 %v6271, 0.0
        %v6304 = vmax.f32 %v6272, 0.0
        %v6305 = vmax.f32 %v6273, 0.0
        %v6306 = vmax.f32 %v6274, 0.0
        %v6307 = vmax.f32 %v6275, 0.0
        %v6308 = vmax.f32 %v6276, 0.0
        %v6309 = vmax.f32 %v6277, 0.0
        %v6310 = vmax.f32 %v6278, 0.0
        %v6311 = vmax.f32 %v6279, 0.0
        %v6312 = vmax.f32 %v6280, 0.0
        %v6313 = vmax.f32 %v6281, 0.0
        %v6314 = vmax.f32 %v6282, 0.0
        %v6315 = vmax.f32 %v6283, 0.0
        %v6316 = vmax.f32 %v6284, 0.0
        %v6317 = vmax.f32 %v6285, 0.0
        %v6318 = vmax.f32 %v6286, 0.0
        %v6319 = vmax.f32 %v6287, 0.0
        %v6320 = vmax.f32 %v6288, 0.0
        %v6321 = vmax.f32 %v6289, 0.0
        %v6322 = vmax.f32 %v6290, 0.0
        %v6323 = vmax.f32 %v6291, 0.0
        %v6324 = vmax.f32 %v6292, 0.0
        %v6325 = vpack.c.bf16 %v6294, %v6293
        %v6326 = vpack.c.bf16 %v6296, %v6295
        %v6327 = vpack.c.bf16 %v6298, %v6297
        %v6328 = vpack.c.bf16 %v6300, %v6299
        %v6329 = vpack.c.bf16 %v6302, %v6301
        %v6330 = vpack.c.bf16 %v6304, %v6303
        %v6331 = vpack.c.bf16 %v6306, %v6305
        %v6332 = vpack.c.bf16 %v6308, %v6307
        %v6333 = vpack.c.bf16 %v6310, %v6309
        %v6334 = vpack.c.bf16 %v6312, %v6311
        %v6335 = vpack.c.bf16 %v6314, %v6313
        %v6336 = vpack.c.bf16 %v6316, %v6315
        %v6337 = vpack.c.bf16 %v6318, %v6317
        %v6338 = vpack.c.bf16 %v6320, %v6319
        %v6339 = vpack.c.bf16 %v6322, %v6321
        %v6340 = vpack.c.bf16 %v6324, %v6323
        %v6341 = vld [vmem:[%s5] sm:$0xff]
        %v6342 = vld [vmem:[%s5 + $0x8] sm:$0xff]
        %v6343 = vld [vmem:[%s5 + $0x10] sm:$0xff]
        %v6344 = vld [vmem:[%s5 + $0x18] sm:$0xff]
        %v6345 = vld [vmem:[%s5 + $0x20] sm:$0xff]
        %v6346 = vld [vmem:[%s5 + $0x28] sm:$0xff]
        %v6347 = vld [vmem:[%s5 + $0x30] sm:$0xff]
        %v6348 = vld [vmem:[%s5 + $0x38] sm:$0xff]
        %v6349 = vld [vmem:[%s6] sm:$0x3]
        %v6351 = vlaneseq
        %v6352 = vshrl.u32 %v6351, 7
        %v6353 = vsub.s32 0, %v6352
        %v6354 = vrot.slane %v6349, %v6353
        %v6355 = vlaneseq
        %v6356 = vshrl.u32 %v6355, 7
        %v6357 = vsub.s32 1, %v6356
        %v6358 = vrot.slane %v6349, %v6357
        %v6369 = vunpack.c.l.b16 %v6341
        %v6370 = vunpack.c.h.b16 %v6341
        %v6371 = vunpack.c.l.b16 %v6342
        %v6372 = vunpack.c.h.b16 %v6342
        %v6373 = vunpack.c.l.b16 %v6343
        %v6374 = vunpack.c.h.b16 %v6343
        %v6375 = vunpack.c.l.b16 %v6344
        %v6376 = vunpack.c.h.b16 %v6344
        %v6377 = vunpack.c.l.b16 %v6345
        %v6378 = vunpack.c.h.b16 %v6345
        %v6379 = vunpack.c.l.b16 %v6346
        %v6380 = vunpack.c.h.b16 %v6346
        %v6381 = vunpack.c.l.b16 %v6347
        %v6382 = vunpack.c.h.b16 %v6347
        %v6383 = vunpack.c.l.b16 %v6348
        %v6384 = vunpack.c.h.b16 %v6348
        %v6385 = vpack.c.b16 %v6371, %v6369
        %v6386 = vpack.c.b16 %v6372, %v6370
        %v6387 = vpack.c.b16 %v6375, %v6373
        %v6388 = vpack.c.b16 %v6376, %v6374
        %v6389 = vpack.c.b16 %v6379, %v6377
        %v6390 = vpack.c.b16 %v6380, %v6378
        %v6391 = vpack.c.b16 %v6383, %v6381
        %v6392 = vpack.c.b16 %v6384, %v6382
        %v6402 = vsel %vm1976, %v6325, 0
        %v6405 = vsel %vm1976, %v6326, 0
        %v6408 = vsel %vm1976, %v6327, 0
        %v6411 = vsel %vm1976, %v6328, 0
        %v6414 = vsel %vm1976, %v6329, 0
        %v6417 = vsel %vm1976, %v6330, 0
        %v6420 = vsel %vm1976, %v6331, 0
        %v6423 = vsel %vm1976, %v6332, 0
        %v6426 = vsel %vm1976, %v6333, 0
        %v6429 = vsel %vm1976, %v6334, 0
        %v6432 = vsel %vm1976, %v6335, 0
        %v6435 = vsel %vm1976, %v6336, 0
        %v6438 = vsel %vm1976, %v6337, 0
        %v6441 = vsel %vm1976, %v6338, 0
        %v6444 = vsel %vm1976, %v6339, 0
        %v6447 = vsel %vm1976, %v6340, 0
        %6449 = vmatprep.subr.bf16.mxu0 0
        %6450 = vmatpush1.bf16.msra.mxu0 0
        %6451 = vmatprep.subr.bf16.mxu0 0
        %6452 = vmatpush1.bf16.msra.mxu0 0
        %6453 = vmatprep.subr.bf16.mxu0 0
        %6454 = vmatpush1.bf16.msra.mxu0 0
        %6455 = vmatprep.subr.bf16.mxu0 0
        %6456 = vmatpush1.bf16.msra.mxu0 0
        %6457 = vmatprep.subr.bf16.mxu0 %v6392
        %6458 = vmatpush1.bf16.msra.mxu0 %v6391
        %6459 = vmatprep.subr.bf16.mxu0 %v6390
        %6460 = vmatpush1.bf16.msra.mxu0 %v6389
        %6461 = vmatprep.subr.bf16.mxu0 %v6388
        %6462 = vmatpush1.bf16.msra.mxu0 %v6387
        %6463 = vmatprep.subr.bf16.mxu0 %v6386
        %6464 = vmatpush1.bf16.msra.mxu0 %v6385
        %6465 = vmatprep.subr.bf16.mxu0 0
        %6466 = vmatpush2.bf16.msra.mxu0 0
        %6467 = vmatprep.subr.bf16.mxu0 0
        %6468 = vmatpush2.bf16.msra.mxu0 0
        %6469 = vmatprep.subr.bf16.mxu0 0
        %6470 = vmatpush2.bf16.msra.mxu0 0
        %6471 = vmatprep.subr.bf16.mxu0 0
        %6472 = vmatpush2.bf16.msra.mxu0 0
        %6473 = vmatprep.subr.bf16.mxu0 0
        %6474 = vmatpush2.bf16.msra.mxu0 0
        %6475 = vmatprep.subr.bf16.mxu0 0
        %6476 = vmatpush2.bf16.msra.mxu0 0
        %6477 = vmatprep.subr.bf16.mxu0 0
        %6478 = vmatpush2.bf16.msra.mxu0 0
        %6479 = vmatprep.subr.bf16.mxu0 0
        %6480 = vmatpush2.bf16.msra.mxu0 0
        %6481 = vmatprep.mubr.bf16.mxu0 0
        %6482 = vmatmul.mubr.bf16.gmra.mxu0 %v6402
        %v6483 = vpop.f32.mrf.mxu0
        %v6484 = vadd.f32 %v6354, %v6483
        %v6485 = vpop.f32.mrf.mxu0
        %v6486 = vadd.f32 %v6358, %v6485
        %v6487 = vpop.f32.mrf.mxu0
        %v6488 = vadd.f32 %v6354, %v6487
        %v6489 = vpop.f32.mrf.mxu0
        %v6490 = vadd.f32 %v6358, %v6489
        %6491 = vmatprep.mubr.bf16.mxu0 0
        %6492 = vmatmul.mubr.bf16.gmra.mxu0 %v6405
        %v6493 = vpop.f32.mrf.mxu0
        %v6494 = vadd.f32 %v6354, %v6493
        %v6495 = vpop.f32.mrf.mxu0
        %v6496 = vadd.f32 %v6358, %v6495
        %v6497 = vpop.f32.mrf.mxu0
        %v6498 = vadd.f32 %v6354, %v6497
        %v6499 = vpop.f32.mrf.mxu0
        %v6500 = vadd.f32 %v6358, %v6499
        %6501 = vmatprep.mubr.bf16.mxu0 0
        %6502 = vmatmul.mubr.bf16.gmra.mxu0 %v6408
        %v6503 = vpop.f32.mrf.mxu0
        %v6504 = vadd.f32 %v6354, %v6503
        %v6505 = vpop.f32.mrf.mxu0
        %v6506 = vadd.f32 %v6358, %v6505
        %v6507 = vpop.f32.mrf.mxu0
        %v6508 = vadd.f32 %v6354, %v6507
        %v6509 = vpop.f32.mrf.mxu0
        %v6510 = vadd.f32 %v6358, %v6509
        %6511 = vmatprep.mubr.bf16.mxu0 0
        %6512 = vmatmul.mubr.bf16.gmra.mxu0 %v6411
        %v6513 = vpop.f32.mrf.mxu0
        %v6514 = vadd.f32 %v6354, %v6513
        %v6515 = vpop.f32.mrf.mxu0
        %v6516 = vadd.f32 %v6358, %v6515
        %v6517 = vpop.f32.mrf.mxu0
        %v6518 = vadd.f32 %v6354, %v6517
        %v6519 = vpop.f32.mrf.mxu0
        %v6520 = vadd.f32 %v6358, %v6519
        %6521 = vmatprep.mubr.bf16.mxu0 0
        %6522 = vmatmul.mubr.bf16.gmra.mxu0 %v6414
        %v6523 = vpop.f32.mrf.mxu0
        %v6524 = vadd.f32 %v6354, %v6523
        %v6525 = vpop.f32.mrf.mxu0
        %v6526 = vadd.f32 %v6358, %v6525
        %v6527 = vpop.f32.mrf.mxu0
        %v6528 = vadd.f32 %v6354, %v6527
        %v6529 = vpop.f32.mrf.mxu0
        %v6530 = vadd.f32 %v6358, %v6529
        %6531 = vmatprep.mubr.bf16.mxu0 0
        %6532 = vmatmul.mubr.bf16.gmra.mxu0 %v6417
        %v6533 = vpop.f32.mrf.mxu0
        %v6534 = vadd.f32 %v6354, %v6533
        %v6535 = vpop.f32.mrf.mxu0
        %v6536 = vadd.f32 %v6358, %v6535
        %v6537 = vpop.f32.mrf.mxu0
        %v6538 = vadd.f32 %v6354, %v6537
        %v6539 = vpop.f32.mrf.mxu0
        %v6540 = vadd.f32 %v6358, %v6539
        %6541 = vmatprep.mubr.bf16.mxu0 0
        %6542 = vmatmul.mubr.bf16.gmra.mxu0 %v6420
        %v6543 = vpop.f32.mrf.mxu0
        %v6544 = vadd.f32 %v6354, %v6543
        %v6545 = vpop.f32.mrf.mxu0
        %v6546 = vadd.f32 %v6358, %v6545
        %v6547 = vpop.f32.mrf.mxu0
        %v6548 = vadd.f32 %v6354, %v6547
        %v6549 = vpop.f32.mrf.mxu0
        %v6550 = vadd.f32 %v6358, %v6549
        %6551 = vmatprep.mubr.bf16.mxu0 0
        %6552 = vmatmul.mubr.bf16.gmra.mxu0 %v6423
        %v6553 = vpop.f32.mrf.mxu0
        %v6554 = vadd.f32 %v6354, %v6553
        %v6555 = vpop.f32.mrf.mxu0
        %v6556 = vadd.f32 %v6358, %v6555
        %v6557 = vpop.f32.mrf.mxu0
        %v6558 = vadd.f32 %v6354, %v6557
        %v6559 = vpop.f32.mrf.mxu0
        %v6560 = vadd.f32 %v6358, %v6559
        %6561 = vmatprep.mubr.bf16.mxu0 0
        %6562 = vmatmul.mubr.bf16.gmra.mxu0 %v6426
        %v6563 = vpop.f32.mrf.mxu0
        %v6564 = vadd.f32 %v6354, %v6563
        %v6565 = vpop.f32.mrf.mxu0
        %v6566 = vadd.f32 %v6358, %v6565
        %v6567 = vpop.f32.mrf.mxu0
        %v6568 = vadd.f32 %v6354, %v6567
        %v6569 = vpop.f32.mrf.mxu0
        %v6570 = vadd.f32 %v6358, %v6569
        %6571 = vmatprep.mubr.bf16.mxu0 0
        %6572 = vmatmul.mubr.bf16.gmra.mxu0 %v6429
        %v6573 = vpop.f32.mrf.mxu0
        %v6574 = vadd.f32 %v6354, %v6573
        %v6575 = vpop.f32.mrf.mxu0
        %v6576 = vadd.f32 %v6358, %v6575
        %v6577 = vpop.f32.mrf.mxu0
        %v6578 = vadd.f32 %v6354, %v6577
        %v6579 = vpop.f32.mrf.mxu0
        %v6580 = vadd.f32 %v6358, %v6579
        %6581 = vmatprep.mubr.bf16.mxu0 0
        %6582 = vmatmul.mubr.bf16.gmra.mxu0 %v6432
        %v6583 = vpop.f32.mrf.mxu0
        %v6584 = vadd.f32 %v6354, %v6583
        %v6585 = vpop.f32.mrf.mxu0
        %v6586 = vadd.f32 %v6358, %v6585
        %v6587 = vpop.f32.mrf.mxu0
        %v6588 = vadd.f32 %v6354, %v6587
        %v6589 = vpop.f32.mrf.mxu0
        %v6590 = vadd.f32 %v6358, %v6589
        %6591 = vmatprep.mubr.bf16.mxu0 0
        %6592 = vmatmul.mubr.bf16.gmra.mxu0 %v6435
        %v6593 = vpop.f32.mrf.mxu0
        %v6594 = vadd.f32 %v6354, %v6593
        %v6595 = vpop.f32.mrf.mxu0
        %v6596 = vadd.f32 %v6358, %v6595
        %v6597 = vpop.f32.mrf.mxu0
        %v6598 = vadd.f32 %v6354, %v6597
        %v6599 = vpop.f32.mrf.mxu0
        %v6600 = vadd.f32 %v6358, %v6599
        %6601 = vmatprep.mubr.bf16.mxu0 0
        %6602 = vmatmul.mubr.bf16.gmra.mxu0 %v6438
        %v6603 = vpop.f32.mrf.mxu0
        %v6604 = vadd.f32 %v6354, %v6603
        %v6605 = vpop.f32.mrf.mxu0
        %v6606 = vadd.f32 %v6358, %v6605
        %v6607 = vpop.f32.mrf.mxu0
        %v6608 = vadd.f32 %v6354, %v6607
        %v6609 = vpop.f32.mrf.mxu0
        %v6610 = vadd.f32 %v6358, %v6609
        %6611 = vmatprep.mubr.bf16.mxu0 0
        %6612 = vmatmul.mubr.bf16.gmra.mxu0 %v6441
        %v6613 = vpop.f32.mrf.mxu0
        %v6614 = vadd.f32 %v6354, %v6613
        %v6615 = vpop.f32.mrf.mxu0
        %v6616 = vadd.f32 %v6358, %v6615
        %v6617 = vpop.f32.mrf.mxu0
        %v6618 = vadd.f32 %v6354, %v6617
        %v6619 = vpop.f32.mrf.mxu0
        %v6620 = vadd.f32 %v6358, %v6619
        %6621 = vmatprep.mubr.bf16.mxu0 0
        %6622 = vmatmul.mubr.bf16.gmra.mxu0 %v6444
        %v6623 = vpop.f32.mrf.mxu0
        %v6624 = vadd.f32 %v6354, %v6623
        %v6625 = vpop.f32.mrf.mxu0
        %v6626 = vadd.f32 %v6358, %v6625
        %v6627 = vpop.f32.mrf.mxu0
        %v6628 = vadd.f32 %v6354, %v6627
        %v6629 = vpop.f32.mrf.mxu0
        %v6630 = vadd.f32 %v6358, %v6629
        %6631 = vmatprep.mubr.bf16.mxu0 0
        %6632 = vmatmul.mubr.bf16.gmra.mxu0 %v6447
        %v6633 = vpop.f32.mrf.mxu0
        %v6634 = vadd.f32 %v6354, %v6633
        %v6635 = vpop.f32.mrf.mxu0
        %v6636 = vadd.f32 %v6358, %v6635
        %v6637 = vpop.f32.mrf.mxu0
        %v6638 = vadd.f32 %v6354, %v6637
        %v6639 = vpop.f32.mrf.mxu0
        %v6640 = vadd.f32 %v6358, %v6639
        %6641 = vdwg.mxu0
        %v6642 = vunpack.c.l.bf16 %v278
        %v6643 = vunpack.c.h.bf16 %v278
        %v6644 = vunpack.c.l.bf16 %v279
        %v6645 = vunpack.c.h.bf16 %v279
        %v6646 = vunpack.c.l.bf16 %v280
        %v6647 = vunpack.c.h.bf16 %v280
        %v6648 = vunpack.c.l.bf16 %v281
        %v6649 = vunpack.c.h.bf16 %v281
        %v6650 = vunpack.c.l.bf16 %v282
        %v6651 = vunpack.c.h.bf16 %v282
        %v6652 = vunpack.c.l.bf16 %v283
        %v6653 = vunpack.c.h.bf16 %v283
        %v6654 = vunpack.c.l.bf16 %v284
        %v6655 = vunpack.c.h.bf16 %v284
        %v6656 = vunpack.c.l.bf16 %v285
        %v6657 = vunpack.c.h.bf16 %v285
        %v6658 = vunpack.c.l.bf16 %v286
        %v6659 = vunpack.c.h.bf16 %v286
        %v6660 = vunpack.c.l.bf16 %v287
        %v6661 = vunpack.c.h.bf16 %v287
        %v6662 = vunpack.c.l.bf16 %v288
        %v6663 = vunpack.c.h.bf16 %v288
        %v6664 = vunpack.c.l.bf16 %v289
        %v6665 = vunpack.c.h.bf16 %v289
        %v6666 = vunpack.c.l.bf16 %v290
        %v6667 = vunpack.c.h.bf16 %v290
        %v6668 = vunpack.c.l.bf16 %v291
        %v6669 = vunpack.c.h.bf16 %v291
        %v6670 = vunpack.c.l.bf16 %v292
        %v6671 = vunpack.c.h.bf16 %v292
        %v6672 = vunpack.c.l.bf16 %v293
        %v6673 = vunpack.c.h.bf16 %v293
        %v6674 = vunpack.c.l.bf16 %v294
        %v6675 = vunpack.c.h.bf16 %v294
        %v6676 = vunpack.c.l.bf16 %v295
        %v6677 = vunpack.c.h.bf16 %v295
        %v6678 = vunpack.c.l.bf16 %v296
        %v6679 = vunpack.c.h.bf16 %v296
        %v6680 = vunpack.c.l.bf16 %v297
        %v6681 = vunpack.c.h.bf16 %v297
        %v6682 = vunpack.c.l.bf16 %v298
        %v6683 = vunpack.c.h.bf16 %v298
        %v6684 = vunpack.c.l.bf16 %v299
        %v6685 = vunpack.c.h.bf16 %v299
        %v6686 = vunpack.c.l.bf16 %v300
        %v6687 = vunpack.c.h.bf16 %v300
        %v6688 = vunpack.c.l.bf16 %v301
        %v6689 = vunpack.c.h.bf16 %v301
        %v6690 = vunpack.c.l.bf16 %v302
        %v6691 = vunpack.c.h.bf16 %v302
        %v6692 = vunpack.c.l.bf16 %v303
        %v6693 = vunpack.c.h.bf16 %v303
        %v6694 = vunpack.c.l.bf16 %v304
        %v6695 = vunpack.c.h.bf16 %v304
        %v6696 = vunpack.c.l.bf16 %v305
        %v6697 = vunpack.c.h.bf16 %v305
        %v6698 = vunpack.c.l.bf16 %v306
        %v6699 = vunpack.c.h.bf16 %v306
        %v6700 = vunpack.c.l.bf16 %v307
        %v6701 = vunpack.c.h.bf16 %v307
        %v6702 = vunpack.c.l.bf16 %v308
        %v6703 = vunpack.c.h.bf16 %v308
        %v6704 = vunpack.c.l.bf16 %v309
        %v6705 = vunpack.c.h.bf16 %v309
        %v6706 = vadd.f32 %v6484, %v6642
        %v6707 = vadd.f32 %v6486, %v6643
        %v6708 = vadd.f32 %v6488, %v6644
        %v6709 = vadd.f32 %v6490, %v6645
        %v6710 = vadd.f32 %v6494, %v6646
        %v6711 = vadd.f32 %v6496, %v6647
        %v6712 = vadd.f32 %v6498, %v6648
        %v6713 = vadd.f32 %v6500, %v6649
        %v6714 = vadd.f32 %v6504, %v6650
        %v6715 = vadd.f32 %v6506, %v6651
        %v6716 = vadd.f32 %v6508, %v6652
        %v6717 = vadd.f32 %v6510, %v6653
        %v6718 = vadd.f32 %v6514, %v6654
        %v6719 = vadd.f32 %v6516, %v6655
        %v6720 = vadd.f32 %v6518, %v6656
        %v6721 = vadd.f32 %v6520, %v6657
        %v6722 = vadd.f32 %v6524, %v6658
        %v6723 = vadd.f32 %v6526, %v6659
        %v6724 = vadd.f32 %v6528, %v6660
        %v6725 = vadd.f32 %v6530, %v6661
        %v6726 = vadd.f32 %v6534, %v6662
        %v6727 = vadd.f32 %v6536, %v6663
        %v6728 = vadd.f32 %v6538, %v6664
        %v6729 = vadd.f32 %v6540, %v6665
        %v6730 = vadd.f32 %v6544, %v6666
        %v6731 = vadd.f32 %v6546, %v6667
        %v6732 = vadd.f32 %v6548, %v6668
        %v6733 = vadd.f32 %v6550, %v6669
        %v6734 = vadd.f32 %v6554, %v6670
        %v6735 = vadd.f32 %v6556, %v6671
        %v6736 = vadd.f32 %v6558, %v6672
        %v6737 = vadd.f32 %v6560, %v6673
        %v6738 = vadd.f32 %v6564, %v6674
        %v6739 = vadd.f32 %v6566, %v6675
        %v6740 = vadd.f32 %v6568, %v6676
        %v6741 = vadd.f32 %v6570, %v6677
        %v6742 = vadd.f32 %v6574, %v6678
        %v6743 = vadd.f32 %v6576, %v6679
        %v6744 = vadd.f32 %v6578, %v6680
        %v6745 = vadd.f32 %v6580, %v6681
        %v6746 = vadd.f32 %v6584, %v6682
        %v6747 = vadd.f32 %v6586, %v6683
        %v6748 = vadd.f32 %v6588, %v6684
        %v6749 = vadd.f32 %v6590, %v6685
        %v6750 = vadd.f32 %v6594, %v6686
        %v6751 = vadd.f32 %v6596, %v6687
        %v6752 = vadd.f32 %v6598, %v6688
        %v6753 = vadd.f32 %v6600, %v6689
        %v6754 = vadd.f32 %v6604, %v6690
        %v6755 = vadd.f32 %v6606, %v6691
        %v6756 = vadd.f32 %v6608, %v6692
        %v6757 = vadd.f32 %v6610, %v6693
        %v6758 = vadd.f32 %v6614, %v6694
        %v6759 = vadd.f32 %v6616, %v6695
        %v6760 = vadd.f32 %v6618, %v6696
        %v6761 = vadd.f32 %v6620, %v6697
        %v6762 = vadd.f32 %v6624, %v6698
        %v6763 = vadd.f32 %v6626, %v6699
        %v6764 = vadd.f32 %v6628, %v6700
        %v6765 = vadd.f32 %v6630, %v6701
        %v6766 = vadd.f32 %v6634, %v6702
        %v6767 = vadd.f32 %v6636, %v6703
        %v6768 = vadd.f32 %v6638, %v6704
        %v6769 = vadd.f32 %v6640, %v6705
        %v6770 = vmax.f32 %v6706, 0.0
        %v6771 = vmax.f32 %v6707, 0.0
        %v6772 = vmax.f32 %v6708, 0.0
        %v6773 = vmax.f32 %v6709, 0.0
        %v6774 = vmax.f32 %v6710, 0.0
        %v6775 = vmax.f32 %v6711, 0.0
        %v6776 = vmax.f32 %v6712, 0.0
        %v6777 = vmax.f32 %v6713, 0.0
        %v6778 = vmax.f32 %v6714, 0.0
        %v6779 = vmax.f32 %v6715, 0.0
        %v6780 = vmax.f32 %v6716, 0.0
        %v6781 = vmax.f32 %v6717, 0.0
        %v6782 = vmax.f32 %v6718, 0.0
        %v6783 = vmax.f32 %v6719, 0.0
        %v6784 = vmax.f32 %v6720, 0.0
        %v6785 = vmax.f32 %v6721, 0.0
        %v6786 = vmax.f32 %v6722, 0.0
        %v6787 = vmax.f32 %v6723, 0.0
        %v6788 = vmax.f32 %v6724, 0.0
        %v6789 = vmax.f32 %v6725, 0.0
        %v6790 = vmax.f32 %v6726, 0.0
        %v6791 = vmax.f32 %v6727, 0.0
        %v6792 = vmax.f32 %v6728, 0.0
        %v6793 = vmax.f32 %v6729, 0.0
        %v6794 = vmax.f32 %v6730, 0.0
        %v6795 = vmax.f32 %v6731, 0.0
        %v6796 = vmax.f32 %v6732, 0.0
        %v6797 = vmax.f32 %v6733, 0.0
        %v6798 = vmax.f32 %v6734, 0.0
        %v6799 = vmax.f32 %v6735, 0.0
        %v6800 = vmax.f32 %v6736, 0.0
        %v6801 = vmax.f32 %v6737, 0.0
        %v6802 = vmax.f32 %v6738, 0.0
        %v6803 = vmax.f32 %v6739, 0.0
        %v6804 = vmax.f32 %v6740, 0.0
        %v6805 = vmax.f32 %v6741, 0.0
        %v6806 = vmax.f32 %v6742, 0.0
        %v6807 = vmax.f32 %v6743, 0.0
        %v6808 = vmax.f32 %v6744, 0.0
        %v6809 = vmax.f32 %v6745, 0.0
        %v6810 = vmax.f32 %v6746, 0.0
        %v6811 = vmax.f32 %v6747, 0.0
        %v6812 = vmax.f32 %v6748, 0.0
        %v6813 = vmax.f32 %v6749, 0.0
        %v6814 = vmax.f32 %v6750, 0.0
        %v6815 = vmax.f32 %v6751, 0.0
        %v6816 = vmax.f32 %v6752, 0.0
        %v6817 = vmax.f32 %v6753, 0.0
        %v6818 = vmax.f32 %v6754, 0.0
        %v6819 = vmax.f32 %v6755, 0.0
        %v6820 = vmax.f32 %v6756, 0.0
        %v6821 = vmax.f32 %v6757, 0.0
        %v6822 = vmax.f32 %v6758, 0.0
        %v6823 = vmax.f32 %v6759, 0.0
        %v6824 = vmax.f32 %v6760, 0.0
        %v6825 = vmax.f32 %v6761, 0.0
        %v6826 = vmax.f32 %v6762, 0.0
        %v6827 = vmax.f32 %v6763, 0.0
        %v6828 = vmax.f32 %v6764, 0.0
        %v6829 = vmax.f32 %v6765, 0.0
        %v6830 = vmax.f32 %v6766, 0.0
        %v6831 = vmax.f32 %v6767, 0.0
        %v6832 = vmax.f32 %v6768, 0.0
        %v6833 = vmax.f32 %v6769, 0.0
        %v6834 = vpack.c.bf16 %v6772, %v6770
        %v6835 = vpack.c.bf16 %v6773, %v6771
        %v6836 = vpack.c.bf16 %v6776, %v6774
        %v6837 = vpack.c.bf16 %v6777, %v6775
        %v6838 = vpack.c.bf16 %v6780, %v6778
        %v6839 = vpack.c.bf16 %v6781, %v6779
        %v6840 = vpack.c.bf16 %v6784, %v6782
        %v6841 = vpack.c.bf16 %v6785, %v6783
        %v6842 = vpack.c.bf16 %v6788, %v6786
        %v6843 = vpack.c.bf16 %v6789, %v6787
        %v6844 = vpack.c.bf16 %v6792, %v6790
        %v6845 = vpack.c.bf16 %v6793, %v6791
        %v6846 = vpack.c.bf16 %v6796, %v6794
        %v6847 = vpack.c.bf16 %v6797, %v6795
        %v6848 = vpack.c.bf16 %v6800, %v6798
        %v6849 = vpack.c.bf16 %v6801, %v6799
        %v6850 = vpack.c.bf16 %v6804, %v6802
        %v6851 = vpack.c.bf16 %v6805, %v6803
        %v6852 = vpack.c.bf16 %v6808, %v6806
        %v6853 = vpack.c.bf16 %v6809, %v6807
        %v6854 = vpack.c.bf16 %v6812, %v6810
        %v6855 = vpack.c.bf16 %v6813, %v6811
        %v6856 = vpack.c.bf16 %v6816, %v6814
        %v6857 = vpack.c.bf16 %v6817, %v6815
        %v6858 = vpack.c.bf16 %v6820, %v6818
        %v6859 = vpack.c.bf16 %v6821, %v6819
        %v6860 = vpack.c.bf16 %v6824, %v6822
        %v6861 = vpack.c.bf16 %v6825, %v6823
        %v6862 = vpack.c.bf16 %v6828, %v6826
        %v6863 = vpack.c.bf16 %v6829, %v6827
        %v6864 = vpack.c.bf16 %v6832, %v6830
        %v6865 = vpack.c.bf16 %v6833, %v6831
        %v6898 = vunpack.c.l.b16 %v6834
        %v6899 = vunpack.c.l.b16 %v6835
        %v6900 = vunpack.c.h.b16 %v6834
        %v6901 = vunpack.c.h.b16 %v6835
        %v6902 = vunpack.c.l.b16 %v6836
        %v6903 = vunpack.c.l.b16 %v6837
        %v6904 = vunpack.c.h.b16 %v6836
        %v6905 = vunpack.c.h.b16 %v6837
        %v6906 = vunpack.c.l.b16 %v6838
        %v6907 = vunpack.c.l.b16 %v6839
        %v6908 = vunpack.c.h.b16 %v6838
        %v6909 = vunpack.c.h.b16 %v6839
        %v6910 = vunpack.c.l.b16 %v6840
        %v6911 = vunpack.c.l.b16 %v6841
        %v6912 = vunpack.c.h.b16 %v6840
        %v6913 = vunpack.c.h.b16 %v6841
        %v6914 = vunpack.c.l.b16 %v6842
        %v6915 = vunpack.c.l.b16 %v6843
        %v6916 = vunpack.c.h.b16 %v6842
        %v6917 = vunpack.c.h.b16 %v6843
        %v6918 = vunpack.c.l.b16 %v6844
        %v6919 = vunpack.c.l.b16 %v6845
        %v6920 = vunpack.c.h.b16 %v6844
        %v6921 = vunpack.c.h.b16 %v6845
        %v6922 = vunpack.c.l.b16 %v6846
        %v6923 = vunpack.c.l.b16 %v6847
        %v6924 = vunpack.c.h.b16 %v6846
        %v6925 = vunpack.c.h.b16 %v6847
        %v6926 = vunpack.c.l.b16 %v6848
        %v6927 = vunpack.c.l.b16 %v6849
        %v6928 = vunpack.c.h.b16 %v6848
        %v6929 = vunpack.c.h.b16 %v6849
        %v6930 = vunpack.c.l.b16 %v6850
        %v6931 = vunpack.c.l.b16 %v6851
        %v6932 = vunpack.c.h.b16 %v6850
        %v6933 = vunpack.c.h.b16 %v6851
        %v6934 = vunpack.c.l.b16 %v6852
        %v6935 = vunpack.c.l.b16 %v6853
        %v6936 = vunpack.c.h.b16 %v6852
        %v6937 = vunpack.c.h.b16 %v6853
        %v6938 = vunpack.c.l.b16 %v6854
        %v6939 = vunpack.c.l.b16 %v6855
        %v6940 = vunpack.c.h.b16 %v6854
        %v6941 = vunpack.c.h.b16 %v6855
        %v6942 = vunpack.c.l.b16 %v6856
        %v6943 = vunpack.c.l.b16 %v6857
        %v6944 = vunpack.c.h.b16 %v6856
        %v6945 = vunpack.c.h.b16 %v6857
        %v6946 = vunpack.c.l.b16 %v6858
        %v6947 = vunpack.c.l.b16 %v6859
        %v6948 = vunpack.c.h.b16 %v6858
        %v6949 = vunpack.c.h.b16 %v6859
        %v6950 = vunpack.c.l.b16 %v6860
        %v6951 = vunpack.c.l.b16 %v6861
        %v6952 = vunpack.c.h.b16 %v6860
        %v6953 = vunpack.c.h.b16 %v6861
        %v6954 = vunpack.c.l.b16 %v6862
        %v6955 = vunpack.c.l.b16 %v6863
        %v6956 = vunpack.c.h.b16 %v6862
        %v6957 = vunpack.c.h.b16 %v6863
        %v6958 = vunpack.c.l.b16 %v6864
        %v6959 = vunpack.c.l.b16 %v6865
        %v6960 = vunpack.c.h.b16 %v6864
        %v6961 = vunpack.c.h.b16 %v6865
        %v6962 = vpack.c.b16 %v6899, %v6898
        %v6963 = vpack.c.b16 %v6901, %v6900
        %v6964 = vpack.c.b16 %v6903, %v6902
        %v6965 = vpack.c.b16 %v6905, %v6904
        %v6966 = vpack.c.b16 %v6907, %v6906
        %v6967 = vpack.c.b16 %v6909, %v6908
        %v6968 = vpack.c.b16 %v6911, %v6910
        %v6969 = vpack.c.b16 %v6913, %v6912
        %v6970 = vpack.c.b16 %v6915, %v6914
        %v6971 = vpack.c.b16 %v6917, %v6916
        %v6972 = vpack.c.b16 %v6919, %v6918
        %v6973 = vpack.c.b16 %v6921, %v6920
        %v6974 = vpack.c.b16 %v6923, %v6922
        %v6975 = vpack.c.b16 %v6925, %v6924
        %v6976 = vpack.c.b16 %v6927, %v6926
        %v6977 = vpack.c.b16 %v6929, %v6928
        %v6978 = vpack.c.b16 %v6931, %v6930
        %v6979 = vpack.c.b16 %v6933, %v6932
        %v6980 = vpack.c.b16 %v6935, %v6934
        %v6981 = vpack.c.b16 %v6937, %v6936
        %v6982 = vpack.c.b16 %v6939, %v6938
        %v6983 = vpack.c.b16 %v6941, %v6940
        %v6984 = vpack.c.b16 %v6943, %v6942
        %v6985 = vpack.c.b16 %v6945, %v6944
        %v6986 = vpack.c.b16 %v6947, %v6946
        %v6987 = vpack.c.b16 %v6949, %v6948
        %v6988 = vpack.c.b16 %v6951, %v6950
        %v6989 = vpack.c.b16 %v6953, %v6952
        %v6990 = vpack.c.b16 %v6955, %v6954
        %v6991 = vpack.c.b16 %v6957, %v6956
        %v6992 = vpack.c.b16 %v6959, %v6958
        %v6993 = vpack.c.b16 %v6961, %v6960
        %7026 = vst [vmem:[%s271] sm:$0xff] %v6962
        %7027 = vst [vmem:[%s271 + $0x8] sm:$0xff] %v6963
        %7028 = vst [vmem:[%s271 + $0x10] sm:$0xff] %v6964
        %7029 = vst [vmem:[%s271 + $0x18] sm:$0xff] %v6965
        %7030 = vst [vmem:[%s271 + $0x20] sm:$0xff] %v6966
        %7031 = vst [vmem:[%s271 + $0x28] sm:$0xff] %v6967
        %7032 = vst [vmem:[%s271 + $0x30] sm:$0xff] %v6968
        %7033 = vst [vmem:[%s271 + $0x38] sm:$0xff] %v6969
        %7034 = vst [vmem:[%s271 + $0x40] sm:$0xff] %v6970
        %7035 = vst [vmem:[%s271 + $0x48] sm:$0xff] %v6971
        %7036 = vst [vmem:[%s271 + $0x50] sm:$0xff] %v6972
        %7037 = vst [vmem:[%s271 + $0x58] sm:$0xff] %v6973
        %7038 = vst [vmem:[%s271 + $0x60] sm:$0xff] %v6974
        %7039 = vst [vmem:[%s271 + $0x68] sm:$0xff] %v6975
        %7040 = vst [vmem:[%s271 + $0x70] sm:$0xff] %v6976
        %7041 = vst [vmem:[%s271 + $0x78] sm:$0xff] %v6977
        %7042 = vst [vmem:[%s271 + $0x80] sm:$0xff] %v6978
        %7043 = vst [vmem:[%s271 + $0x88] sm:$0xff] %v6979
        %7044 = vst [vmem:[%s271 + $0x90] sm:$0xff] %v6980
        %7045 = vst [vmem:[%s271 + $0x98] sm:$0xff] %v6981
        %7046 = vst [vmem:[%s271 + $0xa0] sm:$0xff] %v6982
        %7047 = vst [vmem:[%s271 + $0xa8] sm:$0xff] %v6983
        %7048 = vst [vmem:[%s271 + $0xb0] sm:$0xff] %v6984
        %7049 = vst [vmem:[%s271 + $0xb8] sm:$0xff] %v6985
        %7050 = vst [vmem:[%s271 + $0xc0] sm:$0xff] %v6986
        %7051 = vst [vmem:[%s271 + $0xc8] sm:$0xff] %v6987
        %7052 = vst [vmem:[%s271 + $0xd0] sm:$0xff] %v6988
        %7053 = vst [vmem:[%s271 + $0xd8] sm:$0xff] %v6989
        %7054 = vst [vmem:[%s271 + $0xe0] sm:$0xff] %v6990
        %7055 = vst [vmem:[%s271 + $0xe8] sm:$0xff] %v6991
        %7056 = vst [vmem:[%s271 + $0xf0] sm:$0xff] %v6992
        %7057 = vst [vmem:[%s271 + $0xf8] sm:$0xff] %v6993
        %s7058 = sand.u32 %s181, 1
        %s7059 = scalar_lea.sflag [#allocation4], %s7058
        %s7060 = sand.u32 %s181, 1
        %s7061 = smul.addr %s7060, 256
        %s7062 = scalar_lea.vmem [#allocation3], %s7061
        // Predicated region
        $region49: #{bottleneck_forward.1} parent=47 // pred_check
          %p7063 = pneg %p191
        $region50: #{bottleneck_forward.1} parent=47 // pred_check_branch
          %7065 = sbr.rel (%p7063) target = $region52
        $region51: #{bottleneck_forward.1} parent=47 // pred_region
          %s7067 = ssub.s32 4096, 4096
          %7068 = vsyncadd %s7059, %s7067
          %s7069 = smul.addr %s21, 64
          %s7070 = smul.addr %s7069, 64
          %s7071 = scalar_lea.hbm %s7, %s7070
          %s7072 = sshll.u32 %s7062, 4
          %s7073 = int_to_ptr.vmem [resolvable:$true] %s7072
          %7078 = dma.vmem_to_hbm [thread:$0]  %s7073, 4096, %s7071, %s7059, 128, 128, 8
        $region52: #{bottleneck_forward.1} parent=47 // pred_fallthru
          _
      $region48: #{bottleneck_forward.1} parent=5 // pred_fallthru
        _
      %p7079 = scmp.le.s32.totalorder 2, %s16
      // Predicated region
      $region53: #{bottleneck_forward.1} parent=5 // pred_check
        %p7080 = pneg %p7079
      $region54: #{bottleneck_forward.1} parent=5 // pred_check_branch
        %7082 = sbr.rel (%p7080) target = $region56
      $region55: #{bottleneck_forward.1} parent=5 // pred_region
        %s7083 = ssub.s32 %s16, 2
        // Predicated region
        $region57: #{bottleneck_forward.1} parent=55 // pred_check
          %p7084 = pneg %p197
        $region58: #{bottleneck_forward.1} parent=55 // pred_check_branch
          %7086 = sbr.rel (%p7084) target = $region60
        $region59: #{bottleneck_forward.1} parent=55 // pred_region
          %s7087 = sand.u32 %s182, 1
          %s7088 = scalar_lea.sflag [#allocation4], %s7087
          %s7089 = sand.u32 %s182, 1
          %s7090 = smul.addr %s7089, 256
          %s7091 = scalar_lea.vmem [#allocation3], %s7090
          %7092 = dma.done %s7088, 4096
        $region60: #{bottleneck_forward.1} parent=55 // pred_fallthru
          _
      $region56: #{bottleneck_forward.1} parent=5 // pred_fallthru
        _
    $region6: #{bottleneck_forward.1} parent=1 // loop_footer
      %s20 = sadd.s32 1, %s16
    $region7: #{bottleneck_forward.1} parent=1 // loop_footer_branch
      %15 = sbr.rel target = $region3
    $region8: #{bottleneck_forward.1} parent=1 // loop_exit
      _
    %7093 = vsyncpa [#allocation4], 1
    %s7094 = scalar_lea.sflag [#allocation4], 1
    %7095 = vsyncpa %s7094, 1

</llo_original>
